<compile_context>
chip_gen: v5e
topology: v5e:2x2
jax: 0.10.0
libtpu: 0.0.40
codegen_flags: <defaults>
</compile_context>

<pallas_src>
import numpy as np
import jax
import jax.numpy as jnp
from jax.experimental import pallas as pl
from jax.experimental.pallas import tpu as pltpu


def _round_up(x, m):
    return (x + m - 1) // m * m


# ---------------------------------------------------------------------------
# One-time parameter re-layout (do at load time, NOT inside the forward path).
# ---------------------------------------------------------------------------
def prepare_aux_head_params(params, C, H, W, num_classes):
    OH = (H - 5) // 2 + 1
    OW = (W - 5) // 2 + 1
    assert OH == 2 and OW == 2, (
        "AuxiliaryHeadImageNet forward only type-checks when AvgPool output is 2x2 "
        "(i.e. a 7x7 or 8x8 input feature map)")

    eps = 1e-5
    scale = params["bn_gamma"] / jnp.sqrt(params["bn_var"] + eps)          # (128,)
    bias = params["bn_beta"] - params["bn_mean"] * scale                   # (128,)

    # Conv1 1x1 with the BN scale folded into its columns: (C, 128).
    w1 = jnp.transpose(params["conv1_w"][:, :, 0, 0], (1, 0)) * scale[None, :]

    # Conv2 2x2 over a 2x2 map == flatten + matmul; rows ordered (kh, kw, cin).
    w2 = jnp.transpose(params["conv2_w"], (2, 3, 1, 0)).reshape(OH * OW * 128, 768)

    # Classifier, zero-padded to a multiple of 128 output lanes (lane-dense store).
    ncp = _round_up(num_classes, 128)
    fc_w = jnp.zeros((768, ncp), jnp.float32).at[:, :num_classes].set(
        jnp.transpose(params["fc_w"], (1, 0)))
    fc_b = jnp.zeros((1, ncp), jnp.float32).at[:, :num_classes].set(
        params["fc_b"].reshape(1, num_classes))

    return {
        "w1": w1.astype(jnp.bfloat16),                 # (C, 128)
        "bn_b": bias.reshape(1, 128).astype(jnp.float32),
        "w2": w2.astype(jnp.bfloat16),                 # (512, 768)
        "fc_w": fc_w.astype(jnp.bfloat16),             # (768, ncp)
        "fc_b": fc_b.astype(jnp.float32),              # (1, ncp)
        "num_classes": num_classes,
        "C": C, "H": H, "W": W,
    }


# ---------------------------------------------------------------------------
# Forward wrapper: layout glue + one pallas_call.
# ---------------------------------------------------------------------------
def auxiliary_head_imagenet(x_nchw, prepped, *, block_n=256):
    # block_n: batch tile.  256 feeds the 256-wide MXU on v6e/v7x; use 128 on v5e.
    num_classes = prepped["num_classes"]
    C, H, W = prepped["C"], prepped["H"], prepped["W"]
    N = x_nchw.shape[0]
    assert x_nchw.shape == (N, C, H, W), "params were prepared for a different shape"
    OH = (H - 5) // 2 + 1
    OW = (W - 5) // 2 + 1
    ncp = prepped["fc_w"].shape[1]

    # Single relayout pass: NCHW -> (N, H*W, C) with the bf16 cast fused into it.
    # TODO(synk): if the upstream network is already NHWC, skip this transpose entirely
    #             and pass the flat (N, H*W, C) slab straight in.
    x = jnp.transpose(x_nchw, (0, 2, 3, 1)).reshape(N, H * W, C).astype(jnp.bfloat16)

    # Batch tiling: bf16-sublane-friendly tile (multiple of 16), batch padded to tile.
    # (On v7x megacore, pick block_n so the grid has >= 2 steps for small batches.)
    tb = min(_round_up(block_n, 16), _round_up(N, 16))
    n_pad = _round_up(N, tb)
    if n_pad != N:
        x = jnp.pad(x, ((0, n_pad - N), (0, 0), (0, 0)))
    grid = (n_pad // tb,)

    def kernel(x_ref, w1_ref, bnb_ref, w2_ref, fcw_ref, fcb_ref, out_ref):
        # x_ref: (tb, H*W, C) bf16.  Weights bf16, biases f32, output f32.
        xb = jnp.maximum(x_ref[...], 0)                                # ReLU (step 1)

        # AvgPool2d(5, s=2, count_include_pad=False): 25 row-adds per output position
        # (VPU work, hidden under the MXU), then Conv1x1 (+BN scale folded) per position.
        hs = []
        for oh in range(OH):
            for ow in range(OW):
                acc = None
                for dh in range(5):
                    for dw in range(5):
                        hw = (oh * 2 + dh) * W + (ow * 2 + dw)
                        v = xb[:, hw, :].astype(jnp.float32)           # (tb, C)
                        acc = v if acc is None else acc + v
                pooled = (acc * (1.0 / 25.0)).astype(jnp.bfloat16)     # (tb, C)
                h = jnp.dot(pooled, w1_ref[...],
                            preferred_element_type=jnp.float32)        # (tb, 128)
                hs.append(jnp.maximum(h + bnb_ref[...], 0.0)
                          .astype(jnp.bfloat16))                       # BN bias + ReLU
        h1 = jnp.concatenate(hs, axis=-1)                              # (tb, 512) bf16

        # Conv2d(128, 768, k=2) over the 2x2 map == flatten + matmul.
        h2 = jnp.dot(h1, w2_ref[...], preferred_element_type=jnp.float32)
        h2 = jnp.maximum(h2, 0.0).astype(jnp.bfloat16)                 # ReLU

        # Classifier: Linear(768, num_classes), padded to lane-dense width.
        logits = jnp.dot(h2, fcw_ref[...], preferred_element_type=jnp.float32)
        out_ref[...] = logits + fcb_ref[...]

    weights = (prepped["w1"], prepped["bn_b"], prepped["w2"],
               prepped["fc_w"], prepped["fc_b"])

    resident = lambda i: (0, 0)       # same block every grid step -> stays in VMEM
    rmode = pl.Buffered(1) if hasattr(pl, "Buffered") else None
    w_specs = [pl.BlockSpec(w.shape, resident, pipeline_mode=rmode) for w in weights]

    in_specs = [pl.BlockSpec((tb, H * W, C), lambda i: (i, 0, 0))] + w_specs
    out_spec = pl.BlockSpec((tb, ncp), lambda i: (i, 0))

    # VMEM budget: resident weights x1 (single-buffered) + 2x x tile + 2x out tile.
    wbytes = sum(int(np.prod(w.shape)) * w.dtype.itemsize for w in weights)
    xbytes = tb * H * W * C * 2
    obytes = tb * ncp * 4
    vmem_limit = int(min(max(2 * (wbytes + 2 * xbytes + 2 * obytes), 16 << 20),
                         40 << 20))

    flops = 2 * n_pad * (OH * OW * (C * 128 + 128 * 768) + 768 * ncp) \
        + n_pad * H * W * C * 2
    bytes_accessed = n_pad * H * W * C * 2 + wbytes + n_pad * ncp * 4
    cost = pl.CostEstimate(flops=int(flops), transcendentals=0,
                           bytes_accessed=int(bytes_accessed))

    out = pl.pallas_call(
        kernel,
        out_shape=jax.ShapeDtypeStruct((n_pad, ncp), jnp.float32),
        grid_spec=pltpu.PrefetchScalarGridSpec(
            num_scalar_prefetch=0,
            grid=grid,
            in_specs=in_specs,
            out_specs=out_spec,
        ),
        compiler_params=pltpu.CompilerParams(
            dimension_semantics=("parallel",),
            vmem_limit_bytes=vmem_limit),
        cost_estimate=cost,
    )(x, *weights)

    return out[:N, :num_classes]


# ---------------------------------------------------------------------------
# Pure-JAX f32 reference of the same forward (eval-mode BN).
# ---------------------------------------------------------------------------
def _reference(x_nchw, params, num_classes):
    x = jnp.transpose(x_nchw, (0, 2, 3, 1)).astype(jnp.float32)
    x = jnp.maximum(x, 0.0)
    N, H, W, C = x.shape
    OH, OW = (H - 5) // 2 + 1, (W - 5) // 2 + 1
    pooled = jnp.stack(
        [jnp.mean(x[:, oh * 2:oh * 2 + 5, ow * 2:ow * 2 + 5, :], axis=(1, 2))
         for oh in range(OH) for ow in range(OW)], axis=1)             # (N, OH*OW, C)
    w1 = jnp.transpose(params["conv1_w"][:, :, 0, 0], (1, 0))
    eps = 1e-5
    sc = params["bn_gamma"] / jnp.sqrt(params["bn_var"] + eps)
    bi = params["bn_beta"] - params["bn_mean"] * sc
    h = jnp.maximum(pooled @ w1 * sc + bi, 0.0)                        # (N, OH*OW, 128)
    w2 = jnp.transpose(params["conv2_w"], (2, 3, 1, 0)).reshape(OH * OW * 128, 768)
    h2 = jnp.maximum(h.reshape(N, -1) @ w2, 0.0)
    return h2 @ params["fc_w"].T + params["fc_b"]


if __name__ == "__main__":
    N, C, H, W = 2, 8, 7, 7          # 7x7 is what the forward pass actually requires
    num_classes = 10

    keys = jax.random.split(jax.random.PRNGKey(0), 9)
    params = {
        "conv1_w": jax.random.normal(keys[0], (128, C, 1, 1), jnp.float32) / jnp.sqrt(C),
        "bn_gamma": 1.0 + 0.1 * jax.random.normal(keys[1], (128,), jnp.float32),
        "bn_beta": 0.1 * jax.random.normal(keys[2], (128,), jnp.float32),
        "bn_mean": 0.1 * jax.random.normal(keys[3], (128,), jnp.float32),
        "bn_var": 1.0 + 0.1 * jnp.abs(jax.random.normal(keys[4], (128,), jnp.float32)),
        "conv2_w": jax.random.normal(keys[5], (768, 128, 2, 2), jnp.float32) / jnp.sqrt(128 * 4),
        "fc_w": jax.random.normal(keys[6], (num_classes, 768), jnp.float32) / jnp.sqrt(768),
        "fc_b": 0.1 * jax.random.normal(keys[7], (num_classes,), jnp.float32),
    }
    x = jax.random.normal(keys[8], (N, C, H, W), jnp.float32)          # PyTorch NCHW input

    # One-time parameter re-layout (load time), then the fast forward.
    prepped = prepare_aux_head_params(params, C, H, W, num_classes)

    out = auxiliary_head_imagenet(x, prepped)
    out = jax.block_until_ready(out)

    ref = _reference(x, params, num_classes)
    assert out.shape == (N, num_classes)
    # bf16 activations + bf16 MXU operands => looser tolerance vs the f32 reference.
    assert jnp.allclose(out, ref, atol=3e-2, rtol=3e-2), "mismatch vs reference"

    print("KERNEL_OK")
</pallas_src>

<mosaic_0001>
module attributes {stable_mosaic.version = 11 : i64} {
  func.func @kernel(%arg0: i32, %arg1: memref<16x49x8xbf16, #tpu.memory_space<vmem>>, %arg2: memref<8x128xbf16, #tpu.memory_space<vmem>>, %arg3: memref<1x128xf32, #tpu.memory_space<vmem>>, %arg4: memref<512x768xbf16, #tpu.memory_space<vmem>>, %arg5: memref<768x128xbf16, #tpu.memory_space<vmem>>, %arg6: memref<1x128xf32, #tpu.memory_space<vmem>>, %arg7: memref<16x128xf32, #tpu.memory_space<vmem>>) attributes {dimension_semantics = [#tpu.dimension_semantics<parallel>], iteration_bounds = array<i64: 1>, scalar_prefetch = 0 : i64, scratch_operands = 0 : i64, tpu.core_type = #tpu.core_type<tc>, window_params = [{transform_indices = @transform_0, window_bounds = array<i64: 16, 49, 8>}, {pipeline_mode = #tpu.pipeline_mode<synchronous>, transform_indices = @transform_1, window_bounds = array<i64: 8, 128>}, {pipeline_mode = #tpu.pipeline_mode<synchronous>, transform_indices = @transform_2, window_bounds = array<i64: 1, 128>}, {pipeline_mode = #tpu.pipeline_mode<synchronous>, transform_indices = @transform_3, window_bounds = array<i64: 512, 768>}, {pipeline_mode = #tpu.pipeline_mode<synchronous>, transform_indices = @transform_4, window_bounds = array<i64: 768, 128>}, {pipeline_mode = #tpu.pipeline_mode<synchronous>, transform_indices = @transform_5, window_bounds = array<i64: 1, 128>}, {transform_indices = @transform_6, window_bounds = array<i64: 16, 128>}]} {
    %c0 = arith.constant 0 : index
    %c0_0 = arith.constant 0 : index
    %c0_1 = arith.constant 0 : index
    %0 = vector.load %arg1[%c0, %c0_0, %c0_1] : memref<16x49x8xbf16, #tpu.memory_space<vmem>>, vector<16x49x8xbf16>
    %cst = arith.constant 0.000000e+00 : bf16
    %1 = vector.broadcast %cst : bf16 to vector<16x49x8xbf16>
    %2 = arith.maximumf %0, %1 : vector<16x49x8xbf16>
    %3 = vector.extract_strided_slice %2 {offsets = [0, 0, 0], sizes = [16, 1, 8], strides = [1, 1, 1]} : vector<16x49x8xbf16> to vector<16x1x8xbf16>
    %4 = vector.shape_cast %3 : vector<16x1x8xbf16> to vector<16x8xbf16>
    %5 = arith.extf %4 : vector<16x8xbf16> to vector<16x8xf32>
    %6 = vector.extract_strided_slice %2 {offsets = [0, 1, 0], sizes = [16, 1, 8], strides = [1, 1, 1]} : vector<16x49x8xbf16> to vector<16x1x8xbf16>
    %7 = vector.shape_cast %6 : vector<16x1x8xbf16> to vector<16x8xbf16>
    %8 = arith.extf %7 : vector<16x8xbf16> to vector<16x8xf32>
    %9 = arith.addf %5, %8 : vector<16x8xf32>
    %10 = vector.extract_strided_slice %2 {offsets = [0, 2, 0], sizes = [16, 1, 8], strides = [1, 1, 1]} : vector<16x49x8xbf16> to vector<16x1x8xbf16>
    %11 = vector.shape_cast %10 : vector<16x1x8xbf16> to vector<16x8xbf16>
    %12 = arith.extf %11 : vector<16x8xbf16> to vector<16x8xf32>
    %13 = arith.addf %9, %12 : vector<16x8xf32>
    %14 = vector.extract_strided_slice %2 {offsets = [0, 3, 0], sizes = [16, 1, 8], strides = [1, 1, 1]} : vector<16x49x8xbf16> to vector<16x1x8xbf16>
    %15 = vector.shape_cast %14 : vector<16x1x8xbf16> to vector<16x8xbf16>
    %16 = arith.extf %15 : vector<16x8xbf16> to vector<16x8xf32>
    %17 = arith.addf %13, %16 : vector<16x8xf32>
    %18 = vector.extract_strided_slice %2 {offsets = [0, 4, 0], sizes = [16, 1, 8], strides = [1, 1, 1]} : vector<16x49x8xbf16> to vector<16x1x8xbf16>
    %19 = vector.shape_cast %18 : vector<16x1x8xbf16> to vector<16x8xbf16>
    %20 = arith.extf %19 : vector<16x8xbf16> to vector<16x8xf32>
    %21 = arith.addf %17, %20 : vector<16x8xf32>
    %22 = vector.extract_strided_slice %2 {offsets = [0, 7, 0], sizes = [16, 1, 8], strides = [1, 1, 1]} : vector<16x49x8xbf16> to vector<16x1x8xbf16>
    %23 = vector.shape_cast %22 : vector<16x1x8xbf16> to vector<16x8xbf16>
    %24 = arith.extf %23 : vector<16x8xbf16> to vector<16x8xf32>
    %25 = arith.addf %21, %24 : vector<16x8xf32>
    %26 = vector.extract_strided_slice %2 {offsets = [0, 8, 0], sizes = [16, 1, 8], strides = [1, 1, 1]} : vector<16x49x8xbf16> to vector<16x1x8xbf16>
    %27 = vector.shape_cast %26 : vector<16x1x8xbf16> to vector<16x8xbf16>
    %28 = arith.extf %27 : vector<16x8xbf16> to vector<16x8xf32>
    %29 = arith.addf %25, %28 : vector<16x8xf32>
    %30 = vector.extract_strided_slice %2 {offsets = [0, 9, 0], sizes = [16, 1, 8], strides = [1, 1, 1]} : vector<16x49x8xbf16> to vector<16x1x8xbf16>
    %31 = vector.shape_cast %30 : vector<16x1x8xbf16> to vector<16x8xbf16>
    %32 = arith.extf %31 : vector<16x8xbf16> to vector<16x8xf32>
    %33 = arith.addf %29, %32 : vector<16x8xf32>
    %34 = vector.extract_strided_slice %2 {offsets = [0, 10, 0], sizes = [16, 1, 8], strides = [1, 1, 1]} : vector<16x49x8xbf16> to vector<16x1x8xbf16>
    %35 = vector.shape_cast %34 : vector<16x1x8xbf16> to vector<16x8xbf16>
    %36 = arith.extf %35 : vector<16x8xbf16> to vector<16x8xf32>
    %37 = arith.addf %33, %36 : vector<16x8xf32>
    %38 = vector.extract_strided_slice %2 {offsets = [0, 11, 0], sizes = [16, 1, 8], strides = [1, 1, 1]} : vector<16x49x8xbf16> to vector<16x1x8xbf16>
    %39 = vector.shape_cast %38 : vector<16x1x8xbf16> to vector<16x8xbf16>
    %40 = arith.extf %39 : vector<16x8xbf16> to vector<16x8xf32>
    %41 = arith.addf %37, %40 : vector<16x8xf32>
    %42 = vector.extract_strided_slice %2 {offsets = [0, 14, 0], sizes = [16, 1, 8], strides = [1, 1, 1]} : vector<16x49x8xbf16> to vector<16x1x8xbf16>
    %43 = vector.shape_cast %42 : vector<16x1x8xbf16> to vector<16x8xbf16>
    %44 = arith.extf %43 : vector<16x8xbf16> to vector<16x8xf32>
    %45 = arith.addf %41, %44 : vector<16x8xf32>
    %46 = vector.extract_strided_slice %2 {offsets = [0, 15, 0], sizes = [16, 1, 8], strides = [1, 1, 1]} : vector<16x49x8xbf16> to vector<16x1x8xbf16>
    %47 = vector.shape_cast %46 : vector<16x1x8xbf16> to vector<16x8xbf16>
    %48 = arith.extf %47 : vector<16x8xbf16> to vector<16x8xf32>
    %49 = arith.addf %45, %48 : vector<16x8xf32>
    %50 = vector.extract_strided_slice %2 {offsets = [0, 16, 0], sizes = [16, 1, 8], strides = [1, 1, 1]} : vector<16x49x8xbf16> to vector<16x1x8xbf16>
    %51 = vector.shape_cast %50 : vector<16x1x8xbf16> to vector<16x8xbf16>
    %52 = arith.extf %51 : vector<16x8xbf16> to vector<16x8xf32>
    %53 = arith.addf %49, %52 : vector<16x8xf32>
    %54 = vector.extract_strided_slice %2 {offsets = [0, 17, 0], sizes = [16, 1, 8], strides = [1, 1, 1]} : vector<16x49x8xbf16> to vector<16x1x8xbf16>
    %55 = vector.shape_cast %54 : vector<16x1x8xbf16> to vector<16x8xbf16>
    %56 = arith.extf %55 : vector<16x8xbf16> to vector<16x8xf32>
    %57 = arith.addf %53, %56 : vector<16x8xf32>
    %58 = vector.extract_strided_slice %2 {offsets = [0, 18, 0], sizes = [16, 1, 8], strides = [1, 1, 1]} : vector<16x49x8xbf16> to vector<16x1x8xbf16>
    %59 = vector.shape_cast %58 : vector<16x1x8xbf16> to vector<16x8xbf16>
    %60 = arith.extf %59 : vector<16x8xbf16> to vector<16x8xf32>
    %61 = arith.addf %57, %60 : vector<16x8xf32>
    %62 = vector.extract_strided_slice %2 {offsets = [0, 21, 0], sizes = [16, 1, 8], strides = [1, 1, 1]} : vector<16x49x8xbf16> to vector<16x1x8xbf16>
    %63 = vector.shape_cast %62 : vector<16x1x8xbf16> to vector<16x8xbf16>
    %64 = arith.extf %63 : vector<16x8xbf16> to vector<16x8xf32>
    %65 = arith.addf %61, %64 : vector<16x8xf32>
    %66 = vector.extract_strided_slice %2 {offsets = [0, 22, 0], sizes = [16, 1, 8], strides = [1, 1, 1]} : vector<16x49x8xbf16> to vector<16x1x8xbf16>
    %67 = vector.shape_cast %66 : vector<16x1x8xbf16> to vector<16x8xbf16>
    %68 = arith.extf %67 : vector<16x8xbf16> to vector<16x8xf32>
    %69 = arith.addf %65, %68 : vector<16x8xf32>
    %70 = vector.extract_strided_slice %2 {offsets = [0, 23, 0], sizes = [16, 1, 8], strides = [1, 1, 1]} : vector<16x49x8xbf16> to vector<16x1x8xbf16>
    %71 = vector.shape_cast %70 : vector<16x1x8xbf16> to vector<16x8xbf16>
    %72 = arith.extf %71 : vector<16x8xbf16> to vector<16x8xf32>
    %73 = arith.addf %69, %72 : vector<16x8xf32>
    %74 = vector.extract_strided_slice %2 {offsets = [0, 24, 0], sizes = [16, 1, 8], strides = [1, 1, 1]} : vector<16x49x8xbf16> to vector<16x1x8xbf16>
    %75 = vector.shape_cast %74 : vector<16x1x8xbf16> to vector<16x8xbf16>
    %76 = arith.extf %75 : vector<16x8xbf16> to vector<16x8xf32>
    %77 = arith.addf %73, %76 : vector<16x8xf32>
    %78 = vector.extract_strided_slice %2 {offsets = [0, 25, 0], sizes = [16, 1, 8], strides = [1, 1, 1]} : vector<16x49x8xbf16> to vector<16x1x8xbf16>
    %79 = vector.shape_cast %78 : vector<16x1x8xbf16> to vector<16x8xbf16>
    %80 = arith.extf %79 : vector<16x8xbf16> to vector<16x8xf32>
    %81 = arith.addf %77, %80 : vector<16x8xf32>
    %82 = vector.extract_strided_slice %2 {offsets = [0, 28, 0], sizes = [16, 1, 8], strides = [1, 1, 1]} : vector<16x49x8xbf16> to vector<16x1x8xbf16>
    %83 = vector.shape_cast %82 : vector<16x1x8xbf16> to vector<16x8xbf16>
    %84 = arith.extf %83 : vector<16x8xbf16> to vector<16x8xf32>
    %85 = arith.addf %81, %84 : vector<16x8xf32>
    %86 = vector.extract_strided_slice %2 {offsets = [0, 29, 0], sizes = [16, 1, 8], strides = [1, 1, 1]} : vector<16x49x8xbf16> to vector<16x1x8xbf16>
    %87 = vector.shape_cast %86 : vector<16x1x8xbf16> to vector<16x8xbf16>
    %88 = arith.extf %87 : vector<16x8xbf16> to vector<16x8xf32>
    %89 = arith.addf %85, %88 : vector<16x8xf32>
    %90 = vector.extract_strided_slice %2 {offsets = [0, 30, 0], sizes = [16, 1, 8], strides = [1, 1, 1]} : vector<16x49x8xbf16> to vector<16x1x8xbf16>
    %91 = vector.shape_cast %90 : vector<16x1x8xbf16> to vector<16x8xbf16>
    %92 = arith.extf %91 : vector<16x8xbf16> to vector<16x8xf32>
    %93 = arith.addf %89, %92 : vector<16x8xf32>
    %94 = vector.extract_strided_slice %2 {offsets = [0, 31, 0], sizes = [16, 1, 8], strides = [1, 1, 1]} : vector<16x49x8xbf16> to vector<16x1x8xbf16>
    %95 = vector.shape_cast %94 : vector<16x1x8xbf16> to vector<16x8xbf16>
    %96 = arith.extf %95 : vector<16x8xbf16> to vector<16x8xf32>
    %97 = arith.addf %93, %96 : vector<16x8xf32>
    %98 = vector.extract_strided_slice %2 {offsets = [0, 32, 0], sizes = [16, 1, 8], strides = [1, 1, 1]} : vector<16x49x8xbf16> to vector<16x1x8xbf16>
    %99 = vector.shape_cast %98 : vector<16x1x8xbf16> to vector<16x8xbf16>
    %100 = arith.extf %99 : vector<16x8xbf16> to vector<16x8xf32>
    %101 = arith.addf %97, %100 : vector<16x8xf32>
    %cst_2 = arith.constant 4.000000e-02 : f32
    %102 = vector.broadcast %cst_2 : f32 to vector<16x8xf32>
    %103 = arith.mulf %101, %102 : vector<16x8xf32>
    %104 = arith.truncf %103 : vector<16x8xf32> to vector<16x8xbf16>
    %c0_3 = arith.constant 0 : index
    %c0_4 = arith.constant 0 : index
    %105 = vector.load %arg2[%c0_3, %c0_4] : memref<8x128xbf16, #tpu.memory_space<vmem>>, vector<8x128xbf16>
    %cst_5 = arith.constant dense<0.000000e+00> : vector<16x128xf32>
    %106 = tpu.matmul %104, %105, %cst_5 {dimension_numbers = #tpu.dot_dimension_numbers<[1], [0], [0], [1], [0, 0, 1, 1], [], []>} : vector<16x8xbf16>, vector<8x128xbf16>, vector<16x128xf32> -> vector<16x128xf32>
    %c0_6 = arith.constant 0 : index
    %c0_7 = arith.constant 0 : index
    %107 = vector.load %arg3[%c0_6, %c0_7] : memref<1x128xf32, #tpu.memory_space<vmem>>, vector<1x128xf32>
    %108 = vector.broadcast %107 : vector<1x128xf32> to vector<16x128xf32>
    %109 = arith.addf %106, %108 : vector<16x128xf32>
    %cst_8 = arith.constant 0.000000e+00 : f32
    %110 = vector.broadcast %cst_8 : f32 to vector<16x128xf32>
    %111 = arith.maximumf %109, %110 : vector<16x128xf32>
    %112 = arith.truncf %111 : vector<16x128xf32> to vector<16x128xbf16>
    %113 = vector.extract_strided_slice %2 {offsets = [0, 2, 0], sizes = [16, 1, 8], strides = [1, 1, 1]} : vector<16x49x8xbf16> to vector<16x1x8xbf16>
    %114 = vector.shape_cast %113 : vector<16x1x8xbf16> to vector<16x8xbf16>
    %115 = arith.extf %114 : vector<16x8xbf16> to vector<16x8xf32>
    %116 = vector.extract_strided_slice %2 {offsets = [0, 3, 0], sizes = [16, 1, 8], strides = [1, 1, 1]} : vector<16x49x8xbf16> to vector<16x1x8xbf16>
    %117 = vector.shape_cast %116 : vector<16x1x8xbf16> to vector<16x8xbf16>
    %118 = arith.extf %117 : vector<16x8xbf16> to vector<16x8xf32>
    %119 = arith.addf %115, %118 : vector<16x8xf32>
    %120 = vector.extract_strided_slice %2 {offsets = [0, 4, 0], sizes = [16, 1, 8], strides = [1, 1, 1]} : vector<16x49x8xbf16> to vector<16x1x8xbf16>
    %121 = vector.shape_cast %120 : vector<16x1x8xbf16> to vector<16x8xbf16>
    %122 = arith.extf %121 : vector<16x8xbf16> to vector<16x8xf32>
    %123 = arith.addf %119, %122 : vector<16x8xf32>
    %124 = vector.extract_strided_slice %2 {offsets = [0, 5, 0], sizes = [16, 1, 8], strides = [1, 1, 1]} : vector<16x49x8xbf16> to vector<16x1x8xbf16>
    %125 = vector.shape_cast %124 : vector<16x1x8xbf16> to vector<16x8xbf16>
    %126 = arith.extf %125 : vector<16x8xbf16> to vector<16x8xf32>
    %127 = arith.addf %123, %126 : vector<16x8xf32>
    %128 = vector.extract_strided_slice %2 {offsets = [0, 6, 0], sizes = [16, 1, 8], strides = [1, 1, 1]} : vector<16x49x8xbf16> to vector<16x1x8xbf16>
    %129 = vector.shape_cast %128 : vector<16x1x8xbf16> to vector<16x8xbf16>
    %130 = arith.extf %129 : vector<16x8xbf16> to vector<16x8xf32>
    %131 = arith.addf %127, %130 : vector<16x8xf32>
    %132 = vector.extract_strided_slice %2 {offsets = [0, 9, 0], sizes = [16, 1, 8], strides = [1, 1, 1]} : vector<16x49x8xbf16> to vector<16x1x8xbf16>
    %133 = vector.shape_cast %132 : vector<16x1x8xbf16> to vector<16x8xbf16>
    %134 = arith.extf %133 : vector<16x8xbf16> to vector<16x8xf32>
    %135 = arith.addf %131, %134 : vector<16x8xf32>
    %136 = vector.extract_strided_slice %2 {offsets = [0, 10, 0], sizes = [16, 1, 8], strides = [1, 1, 1]} : vector<16x49x8xbf16> to vector<16x1x8xbf16>
    %137 = vector.shape_cast %136 : vector<16x1x8xbf16> to vector<16x8xbf16>
    %138 = arith.extf %137 : vector<16x8xbf16> to vector<16x8xf32>
    %139 = arith.addf %135, %138 : vector<16x8xf32>
    %140 = vector.extract_strided_slice %2 {offsets = [0, 11, 0], sizes = [16, 1, 8], strides = [1, 1, 1]} : vector<16x49x8xbf16> to vector<16x1x8xbf16>
    %141 = vector.shape_cast %140 : vector<16x1x8xbf16> to vector<16x8xbf16>
    %142 = arith.extf %141 : vector<16x8xbf16> to vector<16x8xf32>
    %143 = arith.addf %139, %142 : vector<16x8xf32>
    %144 = vector.extract_strided_slice %2 {offsets = [0, 12, 0], sizes = [16, 1, 8], strides = [1, 1, 1]} : vector<16x49x8xbf16> to vector<16x1x8xbf16>
    %145 = vector.shape_cast %144 : vector<16x1x8xbf16> to vector<16x8xbf16>
    %146 = arith.extf %145 : vector<16x8xbf16> to vector<16x8xf32>
    %147 = arith.addf %143, %146 : vector<16x8xf32>
    %148 = vector.extract_strided_slice %2 {offsets = [0, 13, 0], sizes = [16, 1, 8], strides = [1, 1, 1]} : vector<16x49x8xbf16> to vector<16x1x8xbf16>
    %149 = vector.shape_cast %148 : vector<16x1x8xbf16> to vector<16x8xbf16>
    %150 = arith.extf %149 : vector<16x8xbf16> to vector<16x8xf32>
    %151 = arith.addf %147, %150 : vector<16x8xf32>
    %152 = vector.extract_strided_slice %2 {offsets = [0, 16, 0], sizes = [16, 1, 8], strides = [1, 1, 1]} : vector<16x49x8xbf16> to vector<16x1x8xbf16>
    %153 = vector.shape_cast %152 : vector<16x1x8xbf16> to vector<16x8xbf16>
    %154 = arith.extf %153 : vector<16x8xbf16> to vector<16x8xf32>
    %155 = arith.addf %151, %154 : vector<16x8xf32>
    %156 = vector.extract_strided_slice %2 {offsets = [0, 17, 0], sizes = [16, 1, 8], strides = [1, 1, 1]} : vector<16x49x8xbf16> to vector<16x1x8xbf16>
    %157 = vector.shape_cast %156 : vector<16x1x8xbf16> to vector<16x8xbf16>
    %158 = arith.extf %157 : vector<16x8xbf16> to vector<16x8xf32>
    %159 = arith.addf %155, %158 : vector<16x8xf32>
    %160 = vector.extract_strided_slice %2 {offsets = [0, 18, 0], sizes = [16, 1, 8], strides = [1, 1, 1]} : vector<16x49x8xbf16> to vector<16x1x8xbf16>
    %161 = vector.shape_cast %160 : vector<16x1x8xbf16> to vector<16x8xbf16>
    %162 = arith.extf %161 : vector<16x8xbf16> to vector<16x8xf32>
    %163 = arith.addf %159, %162 : vector<16x8xf32>
    %164 = vector.extract_strided_slice %2 {offsets = [0, 19, 0], sizes = [16, 1, 8], strides = [1, 1, 1]} : vector<16x49x8xbf16> to vector<16x1x8xbf16>
    %165 = vector.shape_cast %164 : vector<16x1x8xbf16> to vector<16x8xbf16>
    %166 = arith.extf %165 : vector<16x8xbf16> to vector<16x8xf32>
    %167 = arith.addf %163, %166 : vector<16x8xf32>
    %168 = vector.extract_strided_slice %2 {offsets = [0, 20, 0], sizes = [16, 1, 8], strides = [1, 1, 1]} : vector<16x49x8xbf16> to vector<16x1x8xbf16>
    %169 = vector.shape_cast %168 : vector<16x1x8xbf16> to vector<16x8xbf16>
    %170 = arith.extf %169 : vector<16x8xbf16> to vector<16x8xf32>
    %171 = arith.addf %167, %170 : vector<16x8xf32>
    %172 = vector.extract_strided_slice %2 {offsets = [0, 23, 0], sizes = [16, 1, 8], strides = [1, 1, 1]} : vector<16x49x8xbf16> to vector<16x1x8xbf16>
    %173 = vector.shape_cast %172 : vector<16x1x8xbf16> to vector<16x8xbf16>
    %174 = arith.extf %173 : vector<16x8xbf16> to vector<16x8xf32>
    %175 = arith.addf %171, %174 : vector<16x8xf32>
    %176 = vector.extract_strided_slice %2 {offsets = [0, 24, 0], sizes = [16, 1, 8], strides = [1, 1, 1]} : vector<16x49x8xbf16> to vector<16x1x8xbf16>
    %177 = vector.shape_cast %176 : vector<16x1x8xbf16> to vector<16x8xbf16>
    %178 = arith.extf %177 : vector<16x8xbf16> to vector<16x8xf32>
    %179 = arith.addf %175, %178 : vector<16x8xf32>
    %180 = vector.extract_strided_slice %2 {offsets = [0, 25, 0], sizes = [16, 1, 8], strides = [1, 1, 1]} : vector<16x49x8xbf16> to vector<16x1x8xbf16>
    %181 = vector.shape_cast %180 : vector<16x1x8xbf16> to vector<16x8xbf16>
    %182 = arith.extf %181 : vector<16x8xbf16> to vector<16x8xf32>
    %183 = arith.addf %179, %182 : vector<16x8xf32>
    %184 = vector.extract_strided_slice %2 {offsets = [0, 26, 0], sizes = [16, 1, 8], strides = [1, 1, 1]} : vector<16x49x8xbf16> to vector<16x1x8xbf16>
    %185 = vector.shape_cast %184 : vector<16x1x8xbf16> to vector<16x8xbf16>
    %186 = arith.extf %185 : vector<16x8xbf16> to vector<16x8xf32>
    %187 = arith.addf %183, %186 : vector<16x8xf32>
    %188 = vector.extract_strided_slice %2 {offsets = [0, 27, 0], sizes = [16, 1, 8], strides = [1, 1, 1]} : vector<16x49x8xbf16> to vector<16x1x8xbf16>
    %189 = vector.shape_cast %188 : vector<16x1x8xbf16> to vector<16x8xbf16>
    %190 = arith.extf %189 : vector<16x8xbf16> to vector<16x8xf32>
    %191 = arith.addf %187, %190 : vector<16x8xf32>
    %192 = vector.extract_strided_slice %2 {offsets = [0, 30, 0], sizes = [16, 1, 8], strides = [1, 1, 1]} : vector<16x49x8xbf16> to vector<16x1x8xbf16>
    %193 = vector.shape_cast %192 : vector<16x1x8xbf16> to vector<16x8xbf16>
    %194 = arith.extf %193 : vector<16x8xbf16> to vector<16x8xf32>
    %195 = arith.addf %191, %194 : vector<16x8xf32>
    %196 = vector.extract_strided_slice %2 {offsets = [0, 31, 0], sizes = [16, 1, 8], strides = [1, 1, 1]} : vector<16x49x8xbf16> to vector<16x1x8xbf16>
    %197 = vector.shape_cast %196 : vector<16x1x8xbf16> to vector<16x8xbf16>
    %198 = arith.extf %197 : vector<16x8xbf16> to vector<16x8xf32>
    %199 = arith.addf %195, %198 : vector<16x8xf32>
    %200 = vector.extract_strided_slice %2 {offsets = [0, 32, 0], sizes = [16, 1, 8], strides = [1, 1, 1]} : vector<16x49x8xbf16> to vector<16x1x8xbf16>
    %201 = vector.shape_cast %200 : vector<16x1x8xbf16> to vector<16x8xbf16>
    %202 = arith.extf %201 : vector<16x8xbf16> to vector<16x8xf32>
    %203 = arith.addf %199, %202 : vector<16x8xf32>
    %204 = vector.extract_strided_slice %2 {offsets = [0, 33, 0], sizes = [16, 1, 8], strides = [1, 1, 1]} : vector<16x49x8xbf16> to vector<16x1x8xbf16>
    %205 = vector.shape_cast %204 : vector<16x1x8xbf16> to vector<16x8xbf16>
    %206 = arith.extf %205 : vector<16x8xbf16> to vector<16x8xf32>
    %207 = arith.addf %203, %206 : vector<16x8xf32>
    %208 = vector.extract_strided_slice %2 {offsets = [0, 34, 0], sizes = [16, 1, 8], strides = [1, 1, 1]} : vector<16x49x8xbf16> to vector<16x1x8xbf16>
    %209 = vector.shape_cast %208 : vector<16x1x8xbf16> to vector<16x8xbf16>
    %210 = arith.extf %209 : vector<16x8xbf16> to vector<16x8xf32>
    %211 = arith.addf %207, %210 : vector<16x8xf32>
    %cst_9 = arith.constant 4.000000e-02 : f32
    %212 = vector.broadcast %cst_9 : f32 to vector<16x8xf32>
    %213 = arith.mulf %211, %212 : vector<16x8xf32>
    %214 = arith.truncf %213 : vector<16x8xf32> to vector<16x8xbf16>
    %c0_10 = arith.constant 0 : index
    %c0_11 = arith.constant 0 : index
    %215 = vector.load %arg2[%c0_10, %c0_11] : memref<8x128xbf16, #tpu.memory_space<vmem>>, vector<8x128xbf16>
    %cst_12 = arith.constant dense<0.000000e+00> : vector<16x128xf32>
    %216 = tpu.matmul %214, %215, %cst_12 {dimension_numbers = #tpu.dot_dimension_numbers<[1], [0], [0], [1], [0, 0, 1, 1], [], []>} : vector<16x8xbf16>, vector<8x128xbf16>, vector<16x128xf32> -> vector<16x128xf32>
    %c0_13 = arith.constant 0 : index
    %c0_14 = arith.constant 0 : index
    %217 = vector.load %arg3[%c0_13, %c0_14] : memref<1x128xf32, #tpu.memory_space<vmem>>, vector<1x128xf32>
    %218 = vector.broadcast %217 : vector<1x128xf32> to vector<16x128xf32>
    %219 = arith.addf %216, %218 : vector<16x128xf32>
    %cst_15 = arith.constant 0.000000e+00 : f32
    %220 = vector.broadcast %cst_15 : f32 to vector<16x128xf32>
    %221 = arith.maximumf %219, %220 : vector<16x128xf32>
    %222 = arith.truncf %221 : vector<16x128xf32> to vector<16x128xbf16>
    %223 = vector.extract_strided_slice %2 {offsets = [0, 14, 0], sizes = [16, 1, 8], strides = [1, 1, 1]} : vector<16x49x8xbf16> to vector<16x1x8xbf16>
    %224 = vector.shape_cast %223 : vector<16x1x8xbf16> to vector<16x8xbf16>
    %225 = arith.extf %224 : vector<16x8xbf16> to vector<16x8xf32>
    %226 = vector.extract_strided_slice %2 {offsets = [0, 15, 0], sizes = [16, 1, 8], strides = [1, 1, 1]} : vector<16x49x8xbf16> to vector<16x1x8xbf16>
    %227 = vector.shape_cast %226 : vector<16x1x8xbf16> to vector<16x8xbf16>
    %228 = arith.extf %227 : vector<16x8xbf16> to vector<16x8xf32>
    %229 = arith.addf %225, %228 : vector<16x8xf32>
    %230 = vector.extract_strided_slice %2 {offsets = [0, 16, 0], sizes = [16, 1, 8], strides = [1, 1, 1]} : vector<16x49x8xbf16> to vector<16x1x8xbf16>
    %231 = vector.shape_cast %230 : vector<16x1x8xbf16> to vector<16x8xbf16>
    %232 = arith.extf %231 : vector<16x8xbf16> to vector<16x8xf32>
    %233 = arith.addf %229, %232 : vector<16x8xf32>
    %234 = vector.extract_strided_slice %2 {offsets = [0, 17, 0], sizes = [16, 1, 8], strides = [1, 1, 1]} : vector<16x49x8xbf16> to vector<16x1x8xbf16>
    %235 = vector.shape_cast %234 : vector<16x1x8xbf16> to vector<16x8xbf16>
    %236 = arith.extf %235 : vector<16x8xbf16> to vector<16x8xf32>
    %237 = arith.addf %233, %236 : vector<16x8xf32>
    %238 = vector.extract_strided_slice %2 {offsets = [0, 18, 0], sizes = [16, 1, 8], strides = [1, 1, 1]} : vector<16x49x8xbf16> to vector<16x1x8xbf16>
    %239 = vector.shape_cast %238 : vector<16x1x8xbf16> to vector<16x8xbf16>
    %240 = arith.extf %239 : vector<16x8xbf16> to vector<16x8xf32>
    %241 = arith.addf %237, %240 : vector<16x8xf32>
    %242 = vector.extract_strided_slice %2 {offsets = [0, 21, 0], sizes = [16, 1, 8], strides = [1, 1, 1]} : vector<16x49x8xbf16> to vector<16x1x8xbf16>
    %243 = vector.shape_cast %242 : vector<16x1x8xbf16> to vector<16x8xbf16>
    %244 = arith.extf %243 : vector<16x8xbf16> to vector<16x8xf32>
    %245 = arith.addf %241, %244 : vector<16x8xf32>
    %246 = vector.extract_strided_slice %2 {offsets = [0, 22, 0], sizes = [16, 1, 8], strides = [1, 1, 1]} : vector<16x49x8xbf16> to vector<16x1x8xbf16>
    %247 = vector.shape_cast %246 : vector<16x1x8xbf16> to vector<16x8xbf16>
    %248 = arith.extf %247 : vector<16x8xbf16> to vector<16x8xf32>
    %249 = arith.addf %245, %248 : vector<16x8xf32>
    %250 = vector.extract_strided_slice %2 {offsets = [0, 23, 0], sizes = [16, 1, 8], strides = [1, 1, 1]} : vector<16x49x8xbf16> to vector<16x1x8xbf16>
    %251 = vector.shape_cast %250 : vector<16x1x8xbf16> to vector<16x8xbf16>
    %252 = arith.extf %251 : vector<16x8xbf16> to vector<16x8xf32>
    %253 = arith.addf %249, %252 : vector<16x8xf32>
    %254 = vector.extract_strided_slice %2 {offsets = [0, 24, 0], sizes = [16, 1, 8], strides = [1, 1, 1]} : vector<16x49x8xbf16> to vector<16x1x8xbf16>
    %255 = vector.shape_cast %254 : vector<16x1x8xbf16> to vector<16x8xbf16>
    %256 = arith.extf %255 : vector<16x8xbf16> to vector<16x8xf32>
    %257 = arith.addf %253, %256 : vector<16x8xf32>
    %258 = vector.extract_strided_slice %2 {offsets = [0, 25, 0], sizes = [16, 1, 8], strides = [1, 1, 1]} : vector<16x49x8xbf16> to vector<16x1x8xbf16>
    %259 = vector.shape_cast %258 : vector<16x1x8xbf16> to vector<16x8xbf16>
    %260 = arith.extf %259 : vector<16x8xbf16> to vector<16x8xf32>
    %261 = arith.addf %257, %260 : vector<16x8xf32>
    %262 = vector.extract_strided_slice %2 {offsets = [0, 28, 0], sizes = [16, 1, 8], strides = [1, 1, 1]} : vector<16x49x8xbf16> to vector<16x1x8xbf16>
    %263 = vector.shape_cast %262 : vector<16x1x8xbf16> to vector<16x8xbf16>
    %264 = arith.extf %263 : vector<16x8xbf16> to vector<16x8xf32>
    %265 = arith.addf %261, %264 : vector<16x8xf32>
    %266 = vector.extract_strided_slice %2 {offsets = [0, 29, 0], sizes = [16, 1, 8], strides = [1, 1, 1]} : vector<16x49x8xbf16> to vector<16x1x8xbf16>
    %267 = vector.shape_cast %266 : vector<16x1x8xbf16> to vector<16x8xbf16>
    %268 = arith.extf %267 : vector<16x8xbf16> to vector<16x8xf32>
    %269 = arith.addf %265, %268 : vector<16x8xf32>
    %270 = vector.extract_strided_slice %2 {offsets = [0, 30, 0], sizes = [16, 1, 8], strides = [1, 1, 1]} : vector<16x49x8xbf16> to vector<16x1x8xbf16>
    %271 = vector.shape_cast %270 : vector<16x1x8xbf16> to vector<16x8xbf16>
    %272 = arith.extf %271 : vector<16x8xbf16> to vector<16x8xf32>
    %273 = arith.addf %269, %272 : vector<16x8xf32>
    %274 = vector.extract_strided_slice %2 {offsets = [0, 31, 0], sizes = [16, 1, 8], strides = [1, 1, 1]} : vector<16x49x8xbf16> to vector<16x1x8xbf16>
    %275 = vector.shape_cast %274 : vector<16x1x8xbf16> to vector<16x8xbf16>
    %276 = arith.extf %275 : vector<16x8xbf16> to vector<16x8xf32>
    %277 = arith.addf %273, %276 : vector<16x8xf32>
    %278 = vector.extract_strided_slice %2 {offsets = [0, 32, 0], sizes = [16, 1, 8], strides = [1, 1, 1]} : vector<16x49x8xbf16> to vector<16x1x8xbf16>
    %279 = vector.shape_cast %278 : vector<16x1x8xbf16> to vector<16x8xbf16>
    %280 = arith.extf %279 : vector<16x8xbf16> to vector<16x8xf32>
    %281 = arith.addf %277, %280 : vector<16x8xf32>
    %282 = vector.extract_strided_slice %2 {offsets = [0, 35, 0], sizes = [16, 1, 8], strides = [1, 1, 1]} : vector<16x49x8xbf16> to vector<16x1x8xbf16>
    %283 = vector.shape_cast %282 : vector<16x1x8xbf16> to vector<16x8xbf16>
    %284 = arith.extf %283 : vector<16x8xbf16> to vector<16x8xf32>
    %285 = arith.addf %281, %284 : vector<16x8xf32>
    %286 = vector.extract_strided_slice %2 {offsets = [0, 36, 0], sizes = [16, 1, 8], strides = [1, 1, 1]} : vector<16x49x8xbf16> to vector<16x1x8xbf16>
    %287 = vector.shape_cast %286 : vector<16x1x8xbf16> to vector<16x8xbf16>
    %288 = arith.extf %287 : vector<16x8xbf16> to vector<16x8xf32>
    %289 = arith.addf %285, %288 : vector<16x8xf32>
    %290 = vector.extract_strided_slice %2 {offsets = [0, 37, 0], sizes = [16, 1, 8], strides = [1, 1, 1]} : vector<16x49x8xbf16> to vector<16x1x8xbf16>
    %291 = vector.shape_cast %290 : vector<16x1x8xbf16> to vector<16x8xbf16>
    %292 = arith.extf %291 : vector<16x8xbf16> to vector<16x8xf32>
    %293 = arith.addf %289, %292 : vector<16x8xf32>
    %294 = vector.extract_strided_slice %2 {offsets = [0, 38, 0], sizes = [16, 1, 8], strides = [1, 1, 1]} : vector<16x49x8xbf16> to vector<16x1x8xbf16>
    %295 = vector.shape_cast %294 : vector<16x1x8xbf16> to vector<16x8xbf16>
    %296 = arith.extf %295 : vector<16x8xbf16> to vector<16x8xf32>
    %297 = arith.addf %293, %296 : vector<16x8xf32>
    %298 = vector.extract_strided_slice %2 {offsets = [0, 39, 0], sizes = [16, 1, 8], strides = [1, 1, 1]} : vector<16x49x8xbf16> to vector<16x1x8xbf16>
    %299 = vector.shape_cast %298 : vector<16x1x8xbf16> to vector<16x8xbf16>
    %300 = arith.extf %299 : vector<16x8xbf16> to vector<16x8xf32>
    %301 = arith.addf %297, %300 : vector<16x8xf32>
    %302 = vector.extract_strided_slice %2 {offsets = [0, 42, 0], sizes = [16, 1, 8], strides = [1, 1, 1]} : vector<16x49x8xbf16> to vector<16x1x8xbf16>
    %303 = vector.shape_cast %302 : vector<16x1x8xbf16> to vector<16x8xbf16>
    %304 = arith.extf %303 : vector<16x8xbf16> to vector<16x8xf32>
    %305 = arith.addf %301, %304 : vector<16x8xf32>
    %306 = vector.extract_strided_slice %2 {offsets = [0, 43, 0], sizes = [16, 1, 8], strides = [1, 1, 1]} : vector<16x49x8xbf16> to vector<16x1x8xbf16>
    %307 = vector.shape_cast %306 : vector<16x1x8xbf16> to vector<16x8xbf16>
    %308 = arith.extf %307 : vector<16x8xbf16> to vector<16x8xf32>
    %309 = arith.addf %305, %308 : vector<16x8xf32>
    %310 = vector.extract_strided_slice %2 {offsets = [0, 44, 0], sizes = [16, 1, 8], strides = [1, 1, 1]} : vector<16x49x8xbf16> to vector<16x1x8xbf16>
    %311 = vector.shape_cast %310 : vector<16x1x8xbf16> to vector<16x8xbf16>
    %312 = arith.extf %311 : vector<16x8xbf16> to vector<16x8xf32>
    %313 = arith.addf %309, %312 : vector<16x8xf32>
    %314 = vector.extract_strided_slice %2 {offsets = [0, 45, 0], sizes = [16, 1, 8], strides = [1, 1, 1]} : vector<16x49x8xbf16> to vector<16x1x8xbf16>
    %315 = vector.shape_cast %314 : vector<16x1x8xbf16> to vector<16x8xbf16>
    %316 = arith.extf %315 : vector<16x8xbf16> to vector<16x8xf32>
    %317 = arith.addf %313, %316 : vector<16x8xf32>
    %318 = vector.extract_strided_slice %2 {offsets = [0, 46, 0], sizes = [16, 1, 8], strides = [1, 1, 1]} : vector<16x49x8xbf16> to vector<16x1x8xbf16>
    %319 = vector.shape_cast %318 : vector<16x1x8xbf16> to vector<16x8xbf16>
    %320 = arith.extf %319 : vector<16x8xbf16> to vector<16x8xf32>
    %321 = arith.addf %317, %320 : vector<16x8xf32>
    %cst_16 = arith.constant 4.000000e-02 : f32
    %322 = vector.broadcast %cst_16 : f32 to vector<16x8xf32>
    %323 = arith.mulf %321, %322 : vector<16x8xf32>
    %324 = arith.truncf %323 : vector<16x8xf32> to vector<16x8xbf16>
    %c0_17 = arith.constant 0 : index
    %c0_18 = arith.constant 0 : index
    %325 = vector.load %arg2[%c0_17, %c0_18] : memref<8x128xbf16, #tpu.memory_space<vmem>>, vector<8x128xbf16>
    %cst_19 = arith.constant dense<0.000000e+00> : vector<16x128xf32>
    %326 = tpu.matmul %324, %325, %cst_19 {dimension_numbers = #tpu.dot_dimension_numbers<[1], [0], [0], [1], [0, 0, 1, 1], [], []>} : vector<16x8xbf16>, vector<8x128xbf16>, vector<16x128xf32> -> vector<16x128xf32>
    %c0_20 = arith.constant 0 : index
    %c0_21 = arith.constant 0 : index
    %327 = vector.load %arg3[%c0_20, %c0_21] : memref<1x128xf32, #tpu.memory_space<vmem>>, vector<1x128xf32>
    %328 = vector.broadcast %327 : vector<1x128xf32> to vector<16x128xf32>
    %329 = arith.addf %326, %328 : vector<16x128xf32>
    %cst_22 = arith.constant 0.000000e+00 : f32
    %330 = vector.broadcast %cst_22 : f32 to vector<16x128xf32>
    %331 = arith.maximumf %329, %330 : vector<16x128xf32>
    %332 = arith.truncf %331 : vector<16x128xf32> to vector<16x128xbf16>
    %333 = vector.extract_strided_slice %2 {offsets = [0, 16, 0], sizes = [16, 1, 8], strides = [1, 1, 1]} : vector<16x49x8xbf16> to vector<16x1x8xbf16>
    %334 = vector.shape_cast %333 : vector<16x1x8xbf16> to vector<16x8xbf16>
    %335 = arith.extf %334 : vector<16x8xbf16> to vector<16x8xf32>
    %336 = vector.extract_strided_slice %2 {offsets = [0, 17, 0], sizes = [16, 1, 8], strides = [1, 1, 1]} : vector<16x49x8xbf16> to vector<16x1x8xbf16>
    %337 = vector.shape_cast %336 : vector<16x1x8xbf16> to vector<16x8xbf16>
    %338 = arith.extf %337 : vector<16x8xbf16> to vector<16x8xf32>
    %339 = arith.addf %335, %338 : vector<16x8xf32>
    %340 = vector.extract_strided_slice %2 {offsets = [0, 18, 0], sizes = [16, 1, 8], strides = [1, 1, 1]} : vector<16x49x8xbf16> to vector<16x1x8xbf16>
    %341 = vector.shape_cast %340 : vector<16x1x8xbf16> to vector<16x8xbf16>
    %342 = arith.extf %341 : vector<16x8xbf16> to vector<16x8xf32>
    %343 = arith.addf %339, %342 : vector<16x8xf32>
    %344 = vector.extract_strided_slice %2 {offsets = [0, 19, 0], sizes = [16, 1, 8], strides = [1, 1, 1]} : vector<16x49x8xbf16> to vector<16x1x8xbf16>
    %345 = vector.shape_cast %344 : vector<16x1x8xbf16> to vector<16x8xbf16>
    %346 = arith.extf %345 : vector<16x8xbf16> to vector<16x8xf32>
    %347 = arith.addf %343, %346 : vector<16x8xf32>
    %348 = vector.extract_strided_slice %2 {offsets = [0, 20, 0], sizes = [16, 1, 8], strides = [1, 1, 1]} : vector<16x49x8xbf16> to vector<16x1x8xbf16>
    %349 = vector.shape_cast %348 : vector<16x1x8xbf16> to vector<16x8xbf16>
    %350 = arith.extf %349 : vector<16x8xbf16> to vector<16x8xf32>
    %351 = arith.addf %347, %350 : vector<16x8xf32>
    %352 = vector.extract_strided_slice %2 {offsets = [0, 23, 0], sizes = [16, 1, 8], strides = [1, 1, 1]} : vector<16x49x8xbf16> to vector<16x1x8xbf16>
    %353 = vector.shape_cast %352 : vector<16x1x8xbf16> to vector<16x8xbf16>
    %354 = arith.extf %353 : vector<16x8xbf16> to vector<16x8xf32>
    %355 = arith.addf %351, %354 : vector<16x8xf32>
    %356 = vector.extract_strided_slice %2 {offsets = [0, 24, 0], sizes = [16, 1, 8], strides = [1, 1, 1]} : vector<16x49x8xbf16> to vector<16x1x8xbf16>
    %357 = vector.shape_cast %356 : vector<16x1x8xbf16> to vector<16x8xbf16>
    %358 = arith.extf %357 : vector<16x8xbf16> to vector<16x8xf32>
    %359 = arith.addf %355, %358 : vector<16x8xf32>
    %360 = vector.extract_strided_slice %2 {offsets = [0, 25, 0], sizes = [16, 1, 8], strides = [1, 1, 1]} : vector<16x49x8xbf16> to vector<16x1x8xbf16>
    %361 = vector.shape_cast %360 : vector<16x1x8xbf16> to vector<16x8xbf16>
    %362 = arith.extf %361 : vector<16x8xbf16> to vector<16x8xf32>
    %363 = arith.addf %359, %362 : vector<16x8xf32>
    %364 = vector.extract_strided_slice %2 {offsets = [0, 26, 0], sizes = [16, 1, 8], strides = [1, 1, 1]} : vector<16x49x8xbf16> to vector<16x1x8xbf16>
    %365 = vector.shape_cast %364 : vector<16x1x8xbf16> to vector<16x8xbf16>
    %366 = arith.extf %365 : vector<16x8xbf16> to vector<16x8xf32>
    %367 = arith.addf %363, %366 : vector<16x8xf32>
    %368 = vector.extract_strided_slice %2 {offsets = [0, 27, 0], sizes = [16, 1, 8], strides = [1, 1, 1]} : vector<16x49x8xbf16> to vector<16x1x8xbf16>
    %369 = vector.shape_cast %368 : vector<16x1x8xbf16> to vector<16x8xbf16>
    %370 = arith.extf %369 : vector<16x8xbf16> to vector<16x8xf32>
    %371 = arith.addf %367, %370 : vector<16x8xf32>
    %372 = vector.extract_strided_slice %2 {offsets = [0, 30, 0], sizes = [16, 1, 8], strides = [1, 1, 1]} : vector<16x49x8xbf16> to vector<16x1x8xbf16>
    %373 = vector.shape_cast %372 : vector<16x1x8xbf16> to vector<16x8xbf16>
    %374 = arith.extf %373 : vector<16x8xbf16> to vector<16x8xf32>
    %375 = arith.addf %371, %374 : vector<16x8xf32>
    %376 = vector.extract_strided_slice %2 {offsets = [0, 31, 0], sizes = [16, 1, 8], strides = [1, 1, 1]} : vector<16x49x8xbf16> to vector<16x1x8xbf16>
    %377 = vector.shape_cast %376 : vector<16x1x8xbf16> to vector<16x8xbf16>
    %378 = arith.extf %377 : vector<16x8xbf16> to vector<16x8xf32>
    %379 = arith.addf %375, %378 : vector<16x8xf32>
    %380 = vector.extract_strided_slice %2 {offsets = [0, 32, 0], sizes = [16, 1, 8], strides = [1, 1, 1]} : vector<16x49x8xbf16> to vector<16x1x8xbf16>
    %381 = vector.shape_cast %380 : vector<16x1x8xbf16> to vector<16x8xbf16>
    %382 = arith.extf %381 : vector<16x8xbf16> to vector<16x8xf32>
    %383 = arith.addf %379, %382 : vector<16x8xf32>
    %384 = vector.extract_strided_slice %2 {offsets = [0, 33, 0], sizes = [16, 1, 8], strides = [1, 1, 1]} : vector<16x49x8xbf16> to vector<16x1x8xbf16>
    %385 = vector.shape_cast %384 : vector<16x1x8xbf16> to vector<16x8xbf16>
    %386 = arith.extf %385 : vector<16x8xbf16> to vector<16x8xf32>
    %387 = arith.addf %383, %386 : vector<16x8xf32>
    %388 = vector.extract_strided_slice %2 {offsets = [0, 34, 0], sizes = [16, 1, 8], strides = [1, 1, 1]} : vector<16x49x8xbf16> to vector<16x1x8xbf16>
    %389 = vector.shape_cast %388 : vector<16x1x8xbf16> to vector<16x8xbf16>
    %390 = arith.extf %389 : vector<16x8xbf16> to vector<16x8xf32>
    %391 = arith.addf %387, %390 : vector<16x8xf32>
    %392 = vector.extract_strided_slice %2 {offsets = [0, 37, 0], sizes = [16, 1, 8], strides = [1, 1, 1]} : vector<16x49x8xbf16> to vector<16x1x8xbf16>
    %393 = vector.shape_cast %392 : vector<16x1x8xbf16> to vector<16x8xbf16>
    %394 = arith.extf %393 : vector<16x8xbf16> to vector<16x8xf32>
    %395 = arith.addf %391, %394 : vector<16x8xf32>
    %396 = vector.extract_strided_slice %2 {offsets = [0, 38, 0], sizes = [16, 1, 8], strides = [1, 1, 1]} : vector<16x49x8xbf16> to vector<16x1x8xbf16>
    %397 = vector.shape_cast %396 : vector<16x1x8xbf16> to vector<16x8xbf16>
    %398 = arith.extf %397 : vector<16x8xbf16> to vector<16x8xf32>
    %399 = arith.addf %395, %398 : vector<16x8xf32>
    %400 = vector.extract_strided_slice %2 {offsets = [0, 39, 0], sizes = [16, 1, 8], strides = [1, 1, 1]} : vector<16x49x8xbf16> to vector<16x1x8xbf16>
    %401 = vector.shape_cast %400 : vector<16x1x8xbf16> to vector<16x8xbf16>
    %402 = arith.extf %401 : vector<16x8xbf16> to vector<16x8xf32>
    %403 = arith.addf %399, %402 : vector<16x8xf32>
    %404 = vector.extract_strided_slice %2 {offsets = [0, 40, 0], sizes = [16, 1, 8], strides = [1, 1, 1]} : vector<16x49x8xbf16> to vector<16x1x8xbf16>
    %405 = vector.shape_cast %404 : vector<16x1x8xbf16> to vector<16x8xbf16>
    %406 = arith.extf %405 : vector<16x8xbf16> to vector<16x8xf32>
    %407 = arith.addf %403, %406 : vector<16x8xf32>
    %408 = vector.extract_strided_slice %2 {offsets = [0, 41, 0], sizes = [16, 1, 8], strides = [1, 1, 1]} : vector<16x49x8xbf16> to vector<16x1x8xbf16>
    %409 = vector.shape_cast %408 : vector<16x1x8xbf16> to vector<16x8xbf16>
    %410 = arith.extf %409 : vector<16x8xbf16> to vector<16x8xf32>
    %411 = arith.addf %407, %410 : vector<16x8xf32>
    %412 = vector.extract_strided_slice %2 {offsets = [0, 44, 0], sizes = [16, 1, 8], strides = [1, 1, 1]} : vector<16x49x8xbf16> to vector<16x1x8xbf16>
    %413 = vector.shape_cast %412 : vector<16x1x8xbf16> to vector<16x8xbf16>
    %414 = arith.extf %413 : vector<16x8xbf16> to vector<16x8xf32>
    %415 = arith.addf %411, %414 : vector<16x8xf32>
    %416 = vector.extract_strided_slice %2 {offsets = [0, 45, 0], sizes = [16, 1, 8], strides = [1, 1, 1]} : vector<16x49x8xbf16> to vector<16x1x8xbf16>
    %417 = vector.shape_cast %416 : vector<16x1x8xbf16> to vector<16x8xbf16>
    %418 = arith.extf %417 : vector<16x8xbf16> to vector<16x8xf32>
    %419 = arith.addf %415, %418 : vector<16x8xf32>
    %420 = vector.extract_strided_slice %2 {offsets = [0, 46, 0], sizes = [16, 1, 8], strides = [1, 1, 1]} : vector<16x49x8xbf16> to vector<16x1x8xbf16>
    %421 = vector.shape_cast %420 : vector<16x1x8xbf16> to vector<16x8xbf16>
    %422 = arith.extf %421 : vector<16x8xbf16> to vector<16x8xf32>
    %423 = arith.addf %419, %422 : vector<16x8xf32>
    %424 = vector.extract_strided_slice %2 {offsets = [0, 47, 0], sizes = [16, 1, 8], strides = [1, 1, 1]} : vector<16x49x8xbf16> to vector<16x1x8xbf16>
    %425 = vector.shape_cast %424 : vector<16x1x8xbf16> to vector<16x8xbf16>
    %426 = arith.extf %425 : vector<16x8xbf16> to vector<16x8xf32>
    %427 = arith.addf %423, %426 : vector<16x8xf32>
    %428 = vector.extract_strided_slice %2 {offsets = [0, 48, 0], sizes = [16, 1, 8], strides = [1, 1, 1]} : vector<16x49x8xbf16> to vector<16x1x8xbf16>
    %429 = vector.shape_cast %428 : vector<16x1x8xbf16> to vector<16x8xbf16>
    %430 = arith.extf %429 : vector<16x8xbf16> to vector<16x8xf32>
    %431 = arith.addf %427, %430 : vector<16x8xf32>
    %cst_23 = arith.constant 4.000000e-02 : f32
    %432 = vector.broadcast %cst_23 : f32 to vector<16x8xf32>
    %433 = arith.mulf %431, %432 : vector<16x8xf32>
    %434 = arith.truncf %433 : vector<16x8xf32> to vector<16x8xbf16>
    %c0_24 = arith.constant 0 : index
    %c0_25 = arith.constant 0 : index
    %435 = vector.load %arg2[%c0_24, %c0_25] : memref<8x128xbf16, #tpu.memory_space<vmem>>, vector<8x128xbf16>
    %cst_26 = arith.constant dense<0.000000e+00> : vector<16x128xf32>
    %436 = tpu.matmul %434, %435, %cst_26 {dimension_numbers = #tpu.dot_dimension_numbers<[1], [0], [0], [1], [0, 0, 1, 1], [], []>} : vector<16x8xbf16>, vector<8x128xbf16>, vector<16x128xf32> -> vector<16x128xf32>
    %c0_27 = arith.constant 0 : index
    %c0_28 = arith.constant 0 : index
    %437 = vector.load %arg3[%c0_27, %c0_28] : memref<1x128xf32, #tpu.memory_space<vmem>>, vector<1x128xf32>
    %438 = vector.broadcast %437 : vector<1x128xf32> to vector<16x128xf32>
    %439 = arith.addf %436, %438 : vector<16x128xf32>
    %cst_29 = arith.constant 0.000000e+00 : f32
    %440 = vector.broadcast %cst_29 : f32 to vector<16x128xf32>
    %441 = arith.maximumf %439, %440 : vector<16x128xf32>
    %442 = arith.truncf %441 : vector<16x128xf32> to vector<16x128xbf16>
    %443 = tpu.concatenate %112, %222, %332, %442 in 1 : vector<16x128xbf16>, vector<16x128xbf16>, vector<16x128xbf16>, vector<16x128xbf16> -> vector<16x512xbf16>
    %c0_30 = arith.constant 0 : index
    %c0_31 = arith.constant 0 : index
    %444 = vector.load %arg4[%c0_30, %c0_31] : memref<512x768xbf16, #tpu.memory_space<vmem>>, vector<512x768xbf16>
    %cst_32 = arith.constant dense<0.000000e+00> : vector<16x768xf32>
    %445 = tpu.matmul %443, %444, %cst_32 {dimension_numbers = #tpu.dot_dimension_numbers<[1], [0], [0], [1], [0, 0, 1, 1], [], []>} : vector<16x512xbf16>, vector<512x768xbf16>, vector<16x768xf32> -> vector<16x768xf32>
    %cst_33 = arith.constant 0.000000e+00 : f32
    %446 = vector.broadcast %cst_33 : f32 to vector<16x768xf32>
    %447 = arith.maximumf %445, %446 : vector<16x768xf32>
    %448 = arith.truncf %447 : vector<16x768xf32> to vector<16x768xbf16>
    %c0_34 = arith.constant 0 : index
    %c0_35 = arith.constant 0 : index
    %449 = vector.load %arg5[%c0_34, %c0_35] : memref<768x128xbf16, #tpu.memory_space<vmem>>, vector<768x128xbf16>
    %cst_36 = arith.constant dense<0.000000e+00> : vector<16x128xf32>
    %450 = tpu.matmul %448, %449, %cst_36 {dimension_numbers = #tpu.dot_dimension_numbers<[1], [0], [0], [1], [0, 0, 1, 1], [], []>} : vector<16x768xbf16>, vector<768x128xbf16>, vector<16x128xf32> -> vector<16x128xf32>
    %c0_37 = arith.constant 0 : index
    %c0_38 = arith.constant 0 : index
    %451 = vector.load %arg6[%c0_37, %c0_38] : memref<1x128xf32, #tpu.memory_space<vmem>>, vector<1x128xf32>
    %452 = vector.broadcast %451 : vector<1x128xf32> to vector<16x128xf32>
    %453 = arith.addf %450, %452 : vector<16x128xf32>
    %c0_39 = arith.constant 0 : index
    %c0_40 = arith.constant 0 : index
    %454 = vector.load %arg7[%c0_39, %c0_40] : memref<16x128xf32, #tpu.memory_space<vmem>>, vector<16x128xf32>
    tpu.vector_store %arg7[%c0_39, %c0_40], %453 {strides = array<i32>} : memref<16x128xf32, #tpu.memory_space<vmem>>, vector<16x128xf32>,
    return
  }
  func.func @transform_0(%arg0: i32) -> (i32, i32, i32) {
    %c0_i32 = arith.constant 0 : i32
    %c0_i32_0 = arith.constant 0 : i32
    %c0_i32_1 = arith.constant 0 : i32
    return %arg0, %c0_i32, %c0_i32_0 : i32, i32, i32
  }
  func.func @transform_1(%arg0: i32) -> (i32, i32) {
    %c0_i32 = arith.constant 0 : i32
    %c0_i32_0 = arith.constant 0 : i32
    %c0_i32_1 = arith.constant 0 : i32
    return %c0_i32, %c0_i32_0 : i32, i32
  }
  func.func @transform_2(%arg0: i32) -> (i32, i32) {
    %c0_i32 = arith.constant 0 : i32
    %c0_i32_0 = arith.constant 0 : i32
    %c0_i32_1 = arith.constant 0 : i32
    return %c0_i32, %c0_i32_0 : i32, i32
  }
  func.func @transform_3(%arg0: i32) -> (i32, i32) {
    %c0_i32 = arith.constant 0 : i32
    %c0_i32_0 = arith.constant 0 : i32
    %c0_i32_1 = arith.constant 0 : i32
    return %c0_i32, %c0_i32_0 : i32, i32
  }
  func.func @transform_4(%arg0: i32) -> (i32, i32) {
    %c0_i32 = arith.constant 0 : i32
    %c0_i32_0 = arith.constant 0 : i32
    %c0_i32_1 = arith.constant 0 : i32
    return %c0_i32, %c0_i32_0 : i32, i32
  }
  func.func @transform_5(%arg0: i32) -> (i32, i32) {
    %c0_i32 = arith.constant 0 : i32
    %c0_i32_0 = arith.constant 0 : i32
    %c0_i32_1 = arith.constant 0 : i32
    return %c0_i32, %c0_i32_0 : i32, i32
  }
  func.func @transform_6(%arg0: i32) -> (i32, i32) {
    %c0_i32 = arith.constant 0 : i32
    %c0_i32_0 = arith.constant 0 : i32
    return %arg0, %c0_i32 : i32, i32
  }
}

</mosaic_0001>

<llo_original>
// kernel: tpu_custom_call.1
$region0: #{tpu_custom_call.1}
  #allocation0 [shape = 'u32[]', space=smem, size = 0x4, offset = 0x4, fixed_abs, tag = 'smem constant byte address 0x4 - core index']
  #allocation1 [shape = 'u32[72,128]{1,0:T(1,128)}', space=vmem, size = 0x9000, scoped, tag = 'internal scratch']
  %s0 = inlined_call_operand.vmem [shape: bf16[16,49,8], index: 0, kind: input, shape index: {}]
  %s1 = inlined_call_operand.vmem [shape: bf16[8,128], index: 1, kind: input, shape index: {}]
  %s2 = inlined_call_operand.vmem [shape: f32[1,128], index: 2, kind: input, shape index: {}]
  %s3 = inlined_call_operand.hbm [shape: bf16[512,768], index: 3, kind: input, shape index: {}]
  %s4 = inlined_call_operand.vmem [shape: bf16[768,128], index: 4, kind: input, shape index: {}]
  %s5 = inlined_call_operand.vmem [shape: f32[1,128], index: 5, kind: input, shape index: {}]
  %s6 = inlined_call_operand.hbm [shape: f32[16,128], index: 6, kind: output, shape index: {}]
  %s7 = sld [smem:[#allocation0]]
  $region38: #{tpu_custom_call.1} parent=0
    _
  %s9 = ssub.s32 1, %s7
  %s10 = scalar_select 0, %s9, %s7
  $region1: #{tpu_custom_call.1} parent=0
    #allocation2 [shape = 'u8[786432]{0}', space=vmem, size = 0xc0000, scoped, tag = 'input window, operand 3, single buffered']
    #allocation3 [shape = 's32[1]{0}', space=sflag, size = 0x4, scoped, tag = 'scoped memory for tpu_custom_call.1']
    #allocation4 [shape = 's32[1]{0}', space=sflag, size = 0x4, scoped, tag = 'scoped memory for tpu_custom_call.1']
    #allocation5 [shape = 'u8[8192]{0}', space=vmem, size = 0x2000, scoped, tag = 'output window, operand 0, single buffered']
    %11 = vsyncpa [#allocation3], 0
    %12 = vsyncpa [#allocation4], 0
    // Predicated region
    $region2: #{tpu_custom_call.1} parent=1 // pred_check
      _
    $region3: #{tpu_custom_call.1} parent=1 // pred_check_branch
      %14 = sbr.rel (0) target = $region5
    $region4: #{tpu_custom_call.1} parent=1 // pred_region
      _
    $region5: #{tpu_custom_call.1} parent=1 // pred_fallthru
      _
    // Predicated region
    $region6: #{tpu_custom_call.1} parent=1 // pred_check
      _
    $region7: #{tpu_custom_call.1} parent=1 // pred_check_branch
      %16 = sbr.rel (0) target = $region9
    $region8: #{tpu_custom_call.1} parent=1 // pred_region
      _
    $region9: #{tpu_custom_call.1} parent=1 // pred_fallthru
      _
    // Predicated region
    $region10: #{tpu_custom_call.1} parent=1 // pred_check
      _
    $region11: #{tpu_custom_call.1} parent=1 // pred_check_branch
      %18 = sbr.rel (0) target = $region13
    $region12: #{tpu_custom_call.1} parent=1 // pred_region
      _
    $region13: #{tpu_custom_call.1} parent=1 // pred_fallthru
      _
    // Predicated region
    $region14: #{tpu_custom_call.1} parent=1 // pred_check
      _
    $region15: #{tpu_custom_call.1} parent=1 // pred_check_branch
      %20 = sbr.rel (0) target = $region17
    $region16: #{tpu_custom_call.1} parent=1 // pred_region
      %22 = vsyncadd [#allocation3], 0
      %s23 = sshll.u32 %s3, 4
      %s24 = int_to_ptr.hbm [resolvable:$true] %s23
      %s25 = sshll.u32 [#allocation2], 4
      %s26 = int_to_ptr.vmem [resolvable:$true] %s25
      %31 = dma.hbm_to_vmem [thread:$0]  %s24, 24576, %s26, [#allocation3], 384, 384, 24
    $region17: #{tpu_custom_call.1} parent=1 // pred_fallthru
      _
    // Predicated region
    $region18: #{tpu_custom_call.1} parent=1 // pred_check
      _
    $region19: #{tpu_custom_call.1} parent=1 // pred_check_branch
      %33 = sbr.rel (0) target = $region21
    $region20: #{tpu_custom_call.1} parent=1 // pred_region
      _
    $region21: #{tpu_custom_call.1} parent=1 // pred_fallthru
      _
    // Predicated region
    $region22: #{tpu_custom_call.1} parent=1 // pred_check
      _
    $region23: #{tpu_custom_call.1} parent=1 // pred_check_branch
      %35 = sbr.rel (0) target = $region25
    $region24: #{tpu_custom_call.1} parent=1 // pred_region
      _
    $region25: #{tpu_custom_call.1} parent=1 // pred_fallthru
      _
    // Predicated region
    $region26: #{tpu_custom_call.1} parent=1 // pred_check
      _
    $region27: #{tpu_custom_call.1} parent=1 // pred_check_branch
      %37 = sbr.rel (0) target = $region29
    $region28: #{tpu_custom_call.1} parent=1 // pred_region
      %39 = dma.done [#allocation3], 24576
    $region29: #{tpu_custom_call.1} parent=1 // pred_fallthru
      _
    %v41 = vld [vmem:[%s0] sm:$0xf]
    %v42 = vld [vmem:[%s0 + $0x4] sm:$0xf]
    %v43 = vld [vmem:[%s0 + $0x8] sm:$0xf]
    %v44 = vld [vmem:[%s0 + $0xc] sm:$0xf]
    %v45 = vld [vmem:[%s0 + $0x10] sm:$0xf]
    %v46 = vld [vmem:[%s0 + $0x14] sm:$0xf]
    %v47 = vld [vmem:[%s0 + $0x18] sm:$0x1]
    %v48 = vld [vmem:[%s0 + $0x1c] sm:$0xf]
    %v49 = vld [vmem:[%s0 + $0x20] sm:$0xf]
    %v50 = vld [vmem:[%s0 + $0x24] sm:$0xf]
    %v51 = vld [vmem:[%s0 + $0x28] sm:$0xf]
    %v52 = vld [vmem:[%s0 + $0x2c] sm:$0xf]
    %v53 = vld [vmem:[%s0 + $0x30] sm:$0xf]
    %v54 = vld [vmem:[%s0 + $0x34] sm:$0x1]
    %v55 = vld [vmem:[%s0 + $0x38] sm:$0xf]
    %v56 = vld [vmem:[%s0 + $0x3c] sm:$0xf]
    %v57 = vld [vmem:[%s0 + $0x40] sm:$0xf]
    %v58 = vld [vmem:[%s0 + $0x44] sm:$0xf]
    %v59 = vld [vmem:[%s0 + $0x48] sm:$0xf]
    %v60 = vld [vmem:[%s0 + $0x4c] sm:$0xf]
    %v61 = vld [vmem:[%s0 + $0x50] sm:$0x1]
    %v62 = vld [vmem:[%s0 + $0x54] sm:$0xf]
    %v63 = vld [vmem:[%s0 + $0x58] sm:$0xf]
    %v64 = vld [vmem:[%s0 + $0x5c] sm:$0xf]
    %v65 = vld [vmem:[%s0 + $0x60] sm:$0xf]
    %v66 = vld [vmem:[%s0 + $0x64] sm:$0xf]
    %v67 = vld [vmem:[%s0 + $0x68] sm:$0xf]
    %v68 = vld [vmem:[%s0 + $0x6c] sm:$0x1]
    %v69 = vld [vmem:[%s0 + $0x70] sm:$0xf]
    %v70 = vld [vmem:[%s0 + $0x74] sm:$0xf]
    %v71 = vld [vmem:[%s0 + $0x78] sm:$0xf]
    %v72 = vld [vmem:[%s0 + $0x7c] sm:$0xf]
    %v73 = vld [vmem:[%s0 + $0x80] sm:$0xf]
    %v74 = vld [vmem:[%s0 + $0x84] sm:$0xf]
    %v75 = vld [vmem:[%s0 + $0x88] sm:$0x1]
    %v76 = vld [vmem:[%s0 + $0x8c] sm:$0xf]
    %v77 = vld [vmem:[%s0 + $0x90] sm:$0xf]
    %v78 = vld [vmem:[%s0 + $0x94] sm:$0xf]
    %v79 = vld [vmem:[%s0 + $0x98] sm:$0xf]
    %v80 = vld [vmem:[%s0 + $0x9c] sm:$0xf]
    %v81 = vld [vmem:[%s0 + $0xa0] sm:$0xf]
    %v82 = vld [vmem:[%s0 + $0xa4] sm:$0x1]
    %v83 = vld [vmem:[%s0 + $0xa8] sm:$0xf]
    %v84 = vld [vmem:[%s0 + $0xac] sm:$0xf]
    %v85 = vld [vmem:[%s0 + $0xb0] sm:$0xf]
    %v86 = vld [vmem:[%s0 + $0xb4] sm:$0xf]
    %v87 = vld [vmem:[%s0 + $0xb8] sm:$0xf]
    %v88 = vld [vmem:[%s0 + $0xbc] sm:$0xf]
    %v89 = vld [vmem:[%s0 + $0xc0] sm:$0x1]
    %v90 = vld [vmem:[%s0 + $0xc4] sm:$0xf]
    %v91 = vld [vmem:[%s0 + $0xc8] sm:$0xf]
    %v92 = vld [vmem:[%s0 + $0xcc] sm:$0xf]
    %v93 = vld [vmem:[%s0 + $0xd0] sm:$0xf]
    %v94 = vld [vmem:[%s0 + $0xd4] sm:$0xf]
    %v95 = vld [vmem:[%s0 + $0xd8] sm:$0xf]
    %v96 = vld [vmem:[%s0 + $0xdc] sm:$0x1]
    %v97 = vld [vmem:[%s0 + $0xe0] sm:$0xf]
    %v98 = vld [vmem:[%s0 + $0xe4] sm:$0xf]
    %v99 = vld [vmem:[%s0 + $0xe8] sm:$0xf]
    %v100 = vld [vmem:[%s0 + $0xec] sm:$0xf]
    %v101 = vld [vmem:[%s0 + $0xf0] sm:$0xf]
    %v102 = vld [vmem:[%s0 + $0xf4] sm:$0xf]
    %v103 = vld [vmem:[%s0 + $0xf8] sm:$0x1]
    %v104 = vld [vmem:[%s0 + $0xfc] sm:$0xf]
    %v105 = vld [vmem:[%s0 + $0x100] sm:$0xf]
    %v106 = vld [vmem:[%s0 + $0x104] sm:$0xf]
    %v107 = vld [vmem:[%s0 + $0x108] sm:$0xf]
    %v108 = vld [vmem:[%s0 + $0x10c] sm:$0xf]
    %v109 = vld [vmem:[%s0 + $0x110] sm:$0xf]
    %v110 = vld [vmem:[%s0 + $0x114] sm:$0x1]
    %v111 = vld [vmem:[%s0 + $0x118] sm:$0xf]
    %v112 = vld [vmem:[%s0 + $0x11c] sm:$0xf]
    %v113 = vld [vmem:[%s0 + $0x120] sm:$0xf]
    %v114 = vld [vmem:[%s0 + $0x124] sm:$0xf]
    %v115 = vld [vmem:[%s0 + $0x128] sm:$0xf]
    %v116 = vld [vmem:[%s0 + $0x12c] sm:$0xf]
    %v117 = vld [vmem:[%s0 + $0x130] sm:$0x1]
    %v118 = vld [vmem:[%s0 + $0x134] sm:$0xf]
    %v119 = vld [vmem:[%s0 + $0x138] sm:$0xf]
    %v120 = vld [vmem:[%s0 + $0x13c] sm:$0xf]
    %v121 = vld [vmem:[%s0 + $0x140] sm:$0xf]
    %v122 = vld [vmem:[%s0 + $0x144] sm:$0xf]
    %v123 = vld [vmem:[%s0 + $0x148] sm:$0xf]
    %v124 = vld [vmem:[%s0 + $0x14c] sm:$0x1]
    %v125 = vld [vmem:[%s0 + $0x150] sm:$0xf]
    %v126 = vld [vmem:[%s0 + $0x154] sm:$0xf]
    %v127 = vld [vmem:[%s0 + $0x158] sm:$0xf]
    %v128 = vld [vmem:[%s0 + $0x15c] sm:$0xf]
    %v129 = vld [vmem:[%s0 + $0x160] sm:$0xf]
    %v130 = vld [vmem:[%s0 + $0x164] sm:$0xf]
    %v131 = vld [vmem:[%s0 + $0x168] sm:$0x1]
    %v132 = vld [vmem:[%s0 + $0x16c] sm:$0xf]
    %v133 = vld [vmem:[%s0 + $0x170] sm:$0xf]
    %v134 = vld [vmem:[%s0 + $0x174] sm:$0xf]
    %v135 = vld [vmem:[%s0 + $0x178] sm:$0xf]
    %v136 = vld [vmem:[%s0 + $0x17c] sm:$0xf]
    %v137 = vld [vmem:[%s0 + $0x180] sm:$0xf]
    %v138 = vld [vmem:[%s0 + $0x184] sm:$0x1]
    %v139 = vld [vmem:[%s0 + $0x188] sm:$0xf]
    %v140 = vld [vmem:[%s0 + $0x18c] sm:$0xf]
    %v141 = vld [vmem:[%s0 + $0x190] sm:$0xf]
    %v142 = vld [vmem:[%s0 + $0x194] sm:$0xf]
    %v143 = vld [vmem:[%s0 + $0x198] sm:$0xf]
    %v144 = vld [vmem:[%s0 + $0x19c] sm:$0xf]
    %v145 = vld [vmem:[%s0 + $0x1a0] sm:$0x1]
    %v146 = vld [vmem:[%s0 + $0x1a4] sm:$0xf]
    %v147 = vld [vmem:[%s0 + $0x1a8] sm:$0xf]
    %v148 = vld [vmem:[%s0 + $0x1ac] sm:$0xf]
    %v149 = vld [vmem:[%s0 + $0x1b0] sm:$0xf]
    %v150 = vld [vmem:[%s0 + $0x1b4] sm:$0xf]
    %v151 = vld [vmem:[%s0 + $0x1b8] sm:$0xf]
    %v152 = vld [vmem:[%s0 + $0x1bc] sm:$0x1]
    %v153 = vunpack.c.l.bf16 %v41
    %v154 = vunpack.c.l.bf16 %v42
    %v155 = vunpack.c.l.bf16 %v43
    %v156 = vunpack.c.l.bf16 %v44
    %v157 = vunpack.c.l.bf16 %v45
    %v158 = vunpack.c.l.bf16 %v46
    %v159 = vunpack.c.l.bf16 %v47
    %v160 = vunpack.c.l.bf16 %v48
    %v161 = vunpack.c.l.bf16 %v49
    %v162 = vunpack.c.l.bf16 %v50
    %v163 = vunpack.c.l.bf16 %v51
    %v164 = vunpack.c.l.bf16 %v52
    %v165 = vunpack.c.l.bf16 %v53
    %v166 = vunpack.c.l.bf16 %v54
    %v167 = vunpack.c.l.bf16 %v55
    %v168 = vunpack.c.l.bf16 %v56
    %v169 = vunpack.c.l.bf16 %v57
    %v170 = vunpack.c.l.bf16 %v58
    %v171 = vunpack.c.l.bf16 %v59
    %v172 = vunpack.c.l.bf16 %v60
    %v173 = vunpack.c.l.bf16 %v61
    %v174 = vunpack.c.l.bf16 %v62
    %v175 = vunpack.c.l.bf16 %v63
    %v176 = vunpack.c.l.bf16 %v64
    %v177 = vunpack.c.l.bf16 %v65
    %v178 = vunpack.c.l.bf16 %v66
    %v179 = vunpack.c.l.bf16 %v67
    %v180 = vunpack.c.l.bf16 %v68
    %v181 = vunpack.c.l.bf16 %v69
    %v182 = vunpack.c.l.bf16 %v70
    %v183 = vunpack.c.l.bf16 %v71
    %v184 = vunpack.c.l.bf16 %v72
    %v185 = vunpack.c.l.bf16 %v73
    %v186 = vunpack.c.l.bf16 %v74
    %v187 = vunpack.c.l.bf16 %v75
    %v188 = vunpack.c.l.bf16 %v76
    %v189 = vunpack.c.l.bf16 %v77
    %v190 = vunpack.c.l.bf16 %v78
    %v191 = vunpack.c.l.bf16 %v79
    %v192 = vunpack.c.l.bf16 %v80
    %v193 = vunpack.c.l.bf16 %v81
    %v194 = vunpack.c.l.bf16 %v82
    %v195 = vunpack.c.l.bf16 %v83
    %v196 = vunpack.c.l.bf16 %v84
    %v197 = vunpack.c.l.bf16 %v85
    %v198 = vunpack.c.l.bf16 %v86
    %v199 = vunpack.c.l.bf16 %v87
    %v200 = vunpack.c.l.bf16 %v88
    %v201 = vunpack.c.l.bf16 %v89
    %v202 = vunpack.c.l.bf16 %v90
    %v203 = vunpack.c.l.bf16 %v91
    %v204 = vunpack.c.l.bf16 %v92
    %v205 = vunpack.c.l.bf16 %v93
    %v206 = vunpack.c.l.bf16 %v94
    %v207 = vunpack.c.l.bf16 %v95
    %v208 = vunpack.c.l.bf16 %v96
    %v209 = vunpack.c.l.bf16 %v97
    %v210 = vunpack.c.l.bf16 %v98
    %v211 = vunpack.c.l.bf16 %v99
    %v212 = vunpack.c.l.bf16 %v100
    %v213 = vunpack.c.l.bf16 %v101
    %v214 = vunpack.c.l.bf16 %v102
    %v215 = vunpack.c.l.bf16 %v103
    %v216 = vunpack.c.l.bf16 %v104
    %v217 = vunpack.c.l.bf16 %v105
    %v218 = vunpack.c.l.bf16 %v106
    %v219 = vunpack.c.l.bf16 %v107
    %v220 = vunpack.c.l.bf16 %v108
    %v221 = vunpack.c.l.bf16 %v109
    %v222 = vunpack.c.l.bf16 %v110
    %v223 = vunpack.c.l.bf16 %v111
    %v224 = vunpack.c.l.bf16 %v112
    %v225 = vunpack.c.l.bf16 %v113
    %v226 = vunpack.c.l.bf16 %v114
    %v227 = vunpack.c.l.bf16 %v115
    %v228 = vunpack.c.l.bf16 %v116
    %v229 = vunpack.c.l.bf16 %v117
    %v230 = vunpack.c.l.bf16 %v118
    %v231 = vunpack.c.l.bf16 %v119
    %v232 = vunpack.c.l.bf16 %v120
    %v233 = vunpack.c.l.bf16 %v121
    %v234 = vunpack.c.l.bf16 %v122
    %v235 = vunpack.c.l.bf16 %v123
    %v236 = vunpack.c.l.bf16 %v124
    %v237 = vunpack.c.l.bf16 %v125
    %v238 = vunpack.c.l.bf16 %v126
    %v239 = vunpack.c.l.bf16 %v127
    %v240 = vunpack.c.l.bf16 %v128
    %v241 = vunpack.c.l.bf16 %v129
    %v242 = vunpack.c.l.bf16 %v130
    %v243 = vunpack.c.l.bf16 %v131
    %v244 = vunpack.c.l.bf16 %v132
    %v245 = vunpack.c.l.bf16 %v133
    %v246 = vunpack.c.l.bf16 %v134
    %v247 = vunpack.c.l.bf16 %v135
    %v248 = vunpack.c.l.bf16 %v136
    %v249 = vunpack.c.l.bf16 %v137
    %v250 = vunpack.c.l.bf16 %v138
    %v251 = vunpack.c.l.bf16 %v139
    %v252 = vunpack.c.l.bf16 %v140
    %v253 = vunpack.c.l.bf16 %v141
    %v254 = vunpack.c.l.bf16 %v142
    %v255 = vunpack.c.l.bf16 %v143
    %v256 = vunpack.c.l.bf16 %v144
    %v257 = vunpack.c.l.bf16 %v145
    %v258 = vunpack.c.l.bf16 %v146
    %v259 = vunpack.c.l.bf16 %v147
    %v260 = vunpack.c.l.bf16 %v148
    %v261 = vunpack.c.l.bf16 %v149
    %v262 = vunpack.c.l.bf16 %v150
    %v263 = vunpack.c.l.bf16 %v151
    %v264 = vunpack.c.l.bf16 %v152
    %v265 = vmax.f32 %v153, 0.0
    %v266 = vmax.f32 %v154, 0.0
    %v267 = vmax.f32 %v155, 0.0
    %v268 = vmax.f32 %v156, 0.0
    %v269 = vmax.f32 %v157, 0.0
    %v270 = vmax.f32 %v158, 0.0
    %v271 = vmax.f32 %v159, 0.0
    %v272 = vmax.f32 %v160, 0.0
    %v273 = vmax.f32 %v161, 0.0
    %v274 = vmax.f32 %v162, 0.0
    %v275 = vmax.f32 %v163, 0.0
    %v276 = vmax.f32 %v164, 0.0
    %v277 = vmax.f32 %v165, 0.0
    %v278 = vmax.f32 %v166, 0.0
    %v279 = vmax.f32 %v167, 0.0
    %v280 = vmax.f32 %v168, 0.0
    %v281 = vmax.f32 %v169, 0.0
    %v282 = vmax.f32 %v170, 0.0
    %v283 = vmax.f32 %v171, 0.0
    %v284 = vmax.f32 %v172, 0.0
    %v285 = vmax.f32 %v173, 0.0
    %v286 = vmax.f32 %v174, 0.0
    %v287 = vmax.f32 %v175, 0.0
    %v288 = vmax.f32 %v176, 0.0
    %v289 = vmax.f32 %v177, 0.0
    %v290 = vmax.f32 %v178, 0.0
    %v291 = vmax.f32 %v179, 0.0
    %v292 = vmax.f32 %v180, 0.0
    %v293 = vmax.f32 %v181, 0.0
    %v294 = vmax.f32 %v182, 0.0
    %v295 = vmax.f32 %v183, 0.0
    %v296 = vmax.f32 %v184, 0.0
    %v297 = vmax.f32 %v185, 0.0
    %v298 = vmax.f32 %v186, 0.0
    %v299 = vmax.f32 %v187, 0.0
    %v300 = vmax.f32 %v188, 0.0
    %v301 = vmax.f32 %v189, 0.0
    %v302 = vmax.f32 %v190, 0.0
    %v303 = vmax.f32 %v191, 0.0
    %v304 = vmax.f32 %v192, 0.0
    %v305 = vmax.f32 %v193, 0.0
    %v306 = vmax.f32 %v194, 0.0
    %v307 = vmax.f32 %v195, 0.0
    %v308 = vmax.f32 %v196, 0.0
    %v309 = vmax.f32 %v197, 0.0
    %v310 = vmax.f32 %v198, 0.0
    %v311 = vmax.f32 %v199, 0.0
    %v312 = vmax.f32 %v200, 0.0
    %v313 = vmax.f32 %v201, 0.0
    %v314 = vmax.f32 %v202, 0.0
    %v315 = vmax.f32 %v203, 0.0
    %v316 = vmax.f32 %v204, 0.0
    %v317 = vmax.f32 %v205, 0.0
    %v318 = vmax.f32 %v206, 0.0
    %v319 = vmax.f32 %v207, 0.0
    %v320 = vmax.f32 %v208, 0.0
    %v321 = vmax.f32 %v209, 0.0
    %v322 = vmax.f32 %v210, 0.0
    %v323 = vmax.f32 %v211, 0.0
    %v324 = vmax.f32 %v212, 0.0
    %v325 = vmax.f32 %v213, 0.0
    %v326 = vmax.f32 %v214, 0.0
    %v327 = vmax.f32 %v215, 0.0
    %v328 = vmax.f32 %v216, 0.0
    %v329 = vmax.f32 %v217, 0.0
    %v330 = vmax.f32 %v218, 0.0
    %v331 = vmax.f32 %v219, 0.0
    %v332 = vmax.f32 %v220, 0.0
    %v333 = vmax.f32 %v221, 0.0
    %v334 = vmax.f32 %v222, 0.0
    %v335 = vmax.f32 %v223, 0.0
    %v336 = vmax.f32 %v224, 0.0
    %v337 = vmax.f32 %v225, 0.0
    %v338 = vmax.f32 %v226, 0.0
    %v339 = vmax.f32 %v227, 0.0
    %v340 = vmax.f32 %v228, 0.0
    %v341 = vmax.f32 %v229, 0.0
    %v342 = vmax.f32 %v230, 0.0
    %v343 = vmax.f32 %v231, 0.0
    %v344 = vmax.f32 %v232, 0.0
    %v345 = vmax.f32 %v233, 0.0
    %v346 = vmax.f32 %v234, 0.0
    %v347 = vmax.f32 %v235, 0.0
    %v348 = vmax.f32 %v236, 0.0
    %v349 = vmax.f32 %v237, 0.0
    %v350 = vmax.f32 %v238, 0.0
    %v351 = vmax.f32 %v239, 0.0
    %v352 = vmax.f32 %v240, 0.0
    %v353 = vmax.f32 %v241, 0.0
    %v354 = vmax.f32 %v242, 0.0
    %v355 = vmax.f32 %v243, 0.0
    %v356 = vmax.f32 %v244, 0.0
    %v357 = vmax.f32 %v245, 0.0
    %v358 = vmax.f32 %v246, 0.0
    %v359 = vmax.f32 %v247, 0.0
    %v360 = vmax.f32 %v248, 0.0
    %v361 = vmax.f32 %v249, 0.0
    %v362 = vmax.f32 %v250, 0.0
    %v363 = vmax.f32 %v251, 0.0
    %v364 = vmax.f32 %v252, 0.0
    %v365 = vmax.f32 %v253, 0.0
    %v366 = vmax.f32 %v254, 0.0
    %v367 = vmax.f32 %v255, 0.0
    %v368 = vmax.f32 %v256, 0.0
    %v369 = vmax.f32 %v257, 0.0
    %v370 = vmax.f32 %v258, 0.0
    %v371 = vmax.f32 %v259, 0.0
    %v372 = vmax.f32 %v260, 0.0
    %v373 = vmax.f32 %v261, 0.0
    %v374 = vmax.f32 %v262, 0.0
    %v375 = vmax.f32 %v263, 0.0
    %v376 = vmax.f32 %v264, 0.0
    %v377 = vpack.c.bf16 %v265, %v265
    %v378 = vpack.c.bf16 %v266, %v266
    %v379 = vpack.c.bf16 %v267, %v267
    %v380 = vpack.c.bf16 %v268, %v268
    %v381 = vpack.c.bf16 %v269, %v269
    %v382 = vpack.c.bf16 %v270, %v270
    %v383 = vpack.c.bf16 %v271, %v271
    %v384 = vpack.c.bf16 %v272, %v272
    %v385 = vpack.c.bf16 %v273, %v273
    %v386 = vpack.c.bf16 %v274, %v274
    %v387 = vpack.c.bf16 %v275, %v275
    %v388 = vpack.c.bf16 %v276, %v276
    %v389 = vpack.c.bf16 %v277, %v277
    %v390 = vpack.c.bf16 %v278, %v278
    %v391 = vpack.c.bf16 %v279, %v279
    %v392 = vpack.c.bf16 %v280, %v280
    %v393 = vpack.c.bf16 %v281, %v281
    %v394 = vpack.c.bf16 %v282, %v282
    %v395 = vpack.c.bf16 %v283, %v283
    %v396 = vpack.c.bf16 %v284, %v284
    %v397 = vpack.c.bf16 %v285, %v285
    %v398 = vpack.c.bf16 %v286, %v286
    %v399 = vpack.c.bf16 %v287, %v287
    %v400 = vpack.c.bf16 %v288, %v288
    %v401 = vpack.c.bf16 %v289, %v289
    %v402 = vpack.c.bf16 %v290, %v290
    %v403 = vpack.c.bf16 %v291, %v291
    %v404 = vpack.c.bf16 %v292, %v292
    %v405 = vpack.c.bf16 %v293, %v293
    %v406 = vpack.c.bf16 %v294, %v294
    %v407 = vpack.c.bf16 %v295, %v295
    %v408 = vpack.c.bf16 %v296, %v296
    %v409 = vpack.c.bf16 %v297, %v297
    %v410 = vpack.c.bf16 %v298, %v298
    %v411 = vpack.c.bf16 %v299, %v299
    %v412 = vpack.c.bf16 %v300, %v300
    %v413 = vpack.c.bf16 %v301, %v301
    %v414 = vpack.c.bf16 %v302, %v302
    %v415 = vpack.c.bf16 %v303, %v303
    %v416 = vpack.c.bf16 %v304, %v304
    %v417 = vpack.c.bf16 %v305, %v305
    %v418 = vpack.c.bf16 %v306, %v306
    %v419 = vpack.c.bf16 %v307, %v307
    %v420 = vpack.c.bf16 %v308, %v308
    %v421 = vpack.c.bf16 %v309, %v309
    %v422 = vpack.c.bf16 %v310, %v310
    %v423 = vpack.c.bf16 %v311, %v311
    %v424 = vpack.c.bf16 %v312, %v312
    %v425 = vpack.c.bf16 %v313, %v313
    %v426 = vpack.c.bf16 %v314, %v314
    %v427 = vpack.c.bf16 %v315, %v315
    %v428 = vpack.c.bf16 %v316, %v316
    %v429 = vpack.c.bf16 %v317, %v317
    %v430 = vpack.c.bf16 %v318, %v318
    %v431 = vpack.c.bf16 %v319, %v319
    %v432 = vpack.c.bf16 %v320, %v320
    %v433 = vpack.c.bf16 %v321, %v321
    %v434 = vpack.c.bf16 %v322, %v322
    %v435 = vpack.c.bf16 %v323, %v323
    %v436 = vpack.c.bf16 %v324, %v324
    %v437 = vpack.c.bf16 %v325, %v325
    %v438 = vpack.c.bf16 %v326, %v326
    %v439 = vpack.c.bf16 %v327, %v327
    %v440 = vpack.c.bf16 %v328, %v328
    %v441 = vpack.c.bf16 %v329, %v329
    %v442 = vpack.c.bf16 %v330, %v330
    %v443 = vpack.c.bf16 %v331, %v331
    %v444 = vpack.c.bf16 %v332, %v332
    %v445 = vpack.c.bf16 %v333, %v333
    %v446 = vpack.c.bf16 %v334, %v334
    %v447 = vpack.c.bf16 %v335, %v335
    %v448 = vpack.c.bf16 %v336, %v336
    %v449 = vpack.c.bf16 %v337, %v337
    %v450 = vpack.c.bf16 %v338, %v338
    %v451 = vpack.c.bf16 %v339, %v339
    %v452 = vpack.c.bf16 %v340, %v340
    %v453 = vpack.c.bf16 %v341, %v341
    %v454 = vpack.c.bf16 %v342, %v342
    %v455 = vpack.c.bf16 %v343, %v343
    %v456 = vpack.c.bf16 %v344, %v344
    %v457 = vpack.c.bf16 %v345, %v345
    %v458 = vpack.c.bf16 %v346, %v346
    %v459 = vpack.c.bf16 %v347, %v347
    %v460 = vpack.c.bf16 %v348, %v348
    %v461 = vpack.c.bf16 %v349, %v349
    %v462 = vpack.c.bf16 %v350, %v350
    %v463 = vpack.c.bf16 %v351, %v351
    %v464 = vpack.c.bf16 %v352, %v352
    %v465 = vpack.c.bf16 %v353, %v353
    %v466 = vpack.c.bf16 %v354, %v354
    %v467 = vpack.c.bf16 %v355, %v355
    %v468 = vpack.c.bf16 %v356, %v356
    %v469 = vpack.c.bf16 %v357, %v357
    %v470 = vpack.c.bf16 %v358, %v358
    %v471 = vpack.c.bf16 %v359, %v359
    %v472 = vpack.c.bf16 %v360, %v360
    %v473 = vpack.c.bf16 %v361, %v361
    %v474 = vpack.c.bf16 %v362, %v362
    %v475 = vpack.c.bf16 %v363, %v363
    %v476 = vpack.c.bf16 %v364, %v364
    %v477 = vpack.c.bf16 %v365, %v365
    %v478 = vpack.c.bf16 %v366, %v366
    %v479 = vpack.c.bf16 %v367, %v367
    %v480 = vpack.c.bf16 %v368, %v368
    %v481 = vpack.c.bf16 %v369, %v369
    %v482 = vpack.c.bf16 %v370, %v370
    %v483 = vpack.c.bf16 %v371, %v371
    %v484 = vpack.c.bf16 %v372, %v372
    %v485 = vpack.c.bf16 %v373, %v373
    %v486 = vpack.c.bf16 %v374, %v374
    %v487 = vpack.c.bf16 %v375, %v375
    %v488 = vpack.c.bf16 %v376, %v376
    %v489 = vunpack.c.l.bf16 %v377
    %v490 = vunpack.c.l.bf16 %v384
    %v491 = vunpack.c.l.bf16 %v391
    %v492 = vunpack.c.l.bf16 %v398
    %v493 = vunpack.c.l.bf16 %v405
    %v494 = vunpack.c.l.bf16 %v412
    %v495 = vunpack.c.l.bf16 %v419
    %v496 = vunpack.c.l.bf16 %v426
    %v497 = vunpack.c.l.bf16 %v433
    %v498 = vunpack.c.l.bf16 %v440
    %v499 = vunpack.c.l.bf16 %v447
    %v500 = vunpack.c.l.bf16 %v454
    %v501 = vunpack.c.l.bf16 %v461
    %v502 = vunpack.c.l.bf16 %v468
    %v503 = vunpack.c.l.bf16 %v475
    %v504 = vunpack.c.l.bf16 %v482
    %v521 = vrot.slane %v489, 1
    %v522 = vrot.slane %v490, 1
    %v523 = vrot.slane %v491, 1
    %v524 = vrot.slane %v492, 1
    %v525 = vrot.slane %v493, 1
    %v526 = vrot.slane %v494, 1
    %v527 = vrot.slane %v495, 1
    %v528 = vrot.slane %v496, 1
    %v529 = vrot.slane %v497, 1
    %v530 = vrot.slane %v498, 1
    %v531 = vrot.slane %v499, 1
    %v532 = vrot.slane %v500, 1
    %v533 = vrot.slane %v501, 1
    %v534 = vrot.slane %v502, 1
    %v535 = vrot.slane %v503, 1
    %v536 = vrot.slane %v504, 1
    %v553 = vadd.f32 %v489, %v521
    %v554 = vadd.f32 %v490, %v522
    %v555 = vadd.f32 %v491, %v523
    %v556 = vadd.f32 %v492, %v524
    %v557 = vadd.f32 %v493, %v525
    %v558 = vadd.f32 %v494, %v526
    %v559 = vadd.f32 %v495, %v527
    %v560 = vadd.f32 %v496, %v528
    %v561 = vadd.f32 %v497, %v529
    %v562 = vadd.f32 %v498, %v530
    %v563 = vadd.f32 %v499, %v531
    %v564 = vadd.f32 %v500, %v532
    %v565 = vadd.f32 %v501, %v533
    %v566 = vadd.f32 %v502, %v534
    %v567 = vadd.f32 %v503, %v535
    %v568 = vadd.f32 %v504, %v536
    %v569 = vrot.slane %v489, 2
    %v570 = vrot.slane %v490, 2
    %v571 = vrot.slane %v491, 2
    %v572 = vrot.slane %v492, 2
    %v573 = vrot.slane %v493, 2
    %v574 = vrot.slane %v494, 2
    %v575 = vrot.slane %v495, 2
    %v576 = vrot.slane %v496, 2
    %v577 = vrot.slane %v497, 2
    %v578 = vrot.slane %v498, 2
    %v579 = vrot.slane %v499, 2
    %v580 = vrot.slane %v500, 2
    %v581 = vrot.slane %v501, 2
    %v582 = vrot.slane %v502, 2
    %v583 = vrot.slane %v503, 2
    %v584 = vrot.slane %v504, 2
    %v601 = vadd.f32 %v553, %v569
    %v602 = vadd.f32 %v554, %v570
    %v603 = vadd.f32 %v555, %v571
    %v604 = vadd.f32 %v556, %v572
    %v605 = vadd.f32 %v557, %v573
    %v606 = vadd.f32 %v558, %v574
    %v607 = vadd.f32 %v559, %v575
    %v608 = vadd.f32 %v560, %v576
    %v609 = vadd.f32 %v561, %v577
    %v610 = vadd.f32 %v562, %v578
    %v611 = vadd.f32 %v563, %v579
    %v612 = vadd.f32 %v564, %v580
    %v613 = vadd.f32 %v565, %v581
    %v614 = vadd.f32 %v566, %v582
    %v615 = vadd.f32 %v567, %v583
    %v616 = vadd.f32 %v568, %v584
    %v617 = vrot.slane %v489, 3
    %v618 = vrot.slane %v490, 3
    %v619 = vrot.slane %v491, 3
    %v620 = vrot.slane %v492, 3
    %v621 = vrot.slane %v493, 3
    %v622 = vrot.slane %v494, 3
    %v623 = vrot.slane %v495, 3
    %v624 = vrot.slane %v496, 3
    %v625 = vrot.slane %v497, 3
    %v626 = vrot.slane %v498, 3
    %v627 = vrot.slane %v499, 3
    %v628 = vrot.slane %v500, 3
    %v629 = vrot.slane %v501, 3
    %v630 = vrot.slane %v502, 3
    %v631 = vrot.slane %v503, 3
    %v632 = vrot.slane %v504, 3
    %v649 = vadd.f32 %v601, %v617
    %v650 = vadd.f32 %v602, %v618
    %v651 = vadd.f32 %v603, %v619
    %v652 = vadd.f32 %v604, %v620
    %v653 = vadd.f32 %v605, %v621
    %v654 = vadd.f32 %v606, %v622
    %v655 = vadd.f32 %v607, %v623
    %v656 = vadd.f32 %v608, %v624
    %v657 = vadd.f32 %v609, %v625
    %v658 = vadd.f32 %v610, %v626
    %v659 = vadd.f32 %v611, %v627
    %v660 = vadd.f32 %v612, %v628
    %v661 = vadd.f32 %v613, %v629
    %v662 = vadd.f32 %v614, %v630
    %v663 = vadd.f32 %v615, %v631
    %v664 = vadd.f32 %v616, %v632
    %v665 = vrot.slane %v489, 4
    %v666 = vrot.slane %v490, 4
    %v667 = vrot.slane %v491, 4
    %v668 = vrot.slane %v492, 4
    %v669 = vrot.slane %v493, 4
    %v670 = vrot.slane %v494, 4
    %v671 = vrot.slane %v495, 4
    %v672 = vrot.slane %v496, 4
    %v673 = vrot.slane %v497, 4
    %v674 = vrot.slane %v498, 4
    %v675 = vrot.slane %v499, 4
    %v676 = vrot.slane %v500, 4
    %v677 = vrot.slane %v501, 4
    %v678 = vrot.slane %v502, 4
    %v679 = vrot.slane %v503, 4
    %v680 = vrot.slane %v504, 4
    %v697 = vadd.f32 %v649, %v665
    %v698 = vadd.f32 %v650, %v666
    %v699 = vadd.f32 %v651, %v667
    %v700 = vadd.f32 %v652, %v668
    %v701 = vadd.f32 %v653, %v669
    %v702 = vadd.f32 %v654, %v670
    %v703 = vadd.f32 %v655, %v671
    %v704 = vadd.f32 %v656, %v672
    %v705 = vadd.f32 %v657, %v673
    %v706 = vadd.f32 %v658, %v674
    %v707 = vadd.f32 %v659, %v675
    %v708 = vadd.f32 %v660, %v676
    %v709 = vadd.f32 %v661, %v677
    %v710 = vadd.f32 %v662, %v678
    %v711 = vadd.f32 %v663, %v679
    %v712 = vadd.f32 %v664, %v680
    %v713 = vrot.slane %v489, 7
    %v714 = vrot.slane %v490, 7
    %v715 = vrot.slane %v491, 7
    %v716 = vrot.slane %v492, 7
    %v717 = vrot.slane %v493, 7
    %v718 = vrot.slane %v494, 7
    %v719 = vrot.slane %v495, 7
    %v720 = vrot.slane %v496, 7
    %v721 = vrot.slane %v497, 7
    %v722 = vrot.slane %v498, 7
    %v723 = vrot.slane %v499, 7
    %v724 = vrot.slane %v500, 7
    %v725 = vrot.slane %v501, 7
    %v726 = vrot.slane %v502, 7
    %v727 = vrot.slane %v503, 7
    %v728 = vrot.slane %v504, 7
    %v745 = vadd.f32 %v697, %v713
    %v746 = vadd.f32 %v698, %v714
    %v747 = vadd.f32 %v699, %v715
    %v748 = vadd.f32 %v700, %v716
    %v749 = vadd.f32 %v701, %v717
    %v750 = vadd.f32 %v702, %v718
    %v751 = vadd.f32 %v703, %v719
    %v752 = vadd.f32 %v704, %v720
    %v753 = vadd.f32 %v705, %v721
    %v754 = vadd.f32 %v706, %v722
    %v755 = vadd.f32 %v707, %v723
    %v756 = vadd.f32 %v708, %v724
    %v757 = vadd.f32 %v709, %v725
    %v758 = vadd.f32 %v710, %v726
    %v759 = vadd.f32 %v711, %v727
    %v760 = vadd.f32 %v712, %v728
    %v761 = vunpack.c.l.bf16 %v378
    %v762 = vunpack.c.l.bf16 %v385
    %v763 = vunpack.c.l.bf16 %v392
    %v764 = vunpack.c.l.bf16 %v399
    %v765 = vunpack.c.l.bf16 %v406
    %v766 = vunpack.c.l.bf16 %v413
    %v767 = vunpack.c.l.bf16 %v420
    %v768 = vunpack.c.l.bf16 %v427
    %v769 = vunpack.c.l.bf16 %v434
    %v770 = vunpack.c.l.bf16 %v441
    %v771 = vunpack.c.l.bf16 %v448
    %v772 = vunpack.c.l.bf16 %v455
    %v773 = vunpack.c.l.bf16 %v462
    %v774 = vunpack.c.l.bf16 %v469
    %v775 = vunpack.c.l.bf16 %v476
    %v776 = vunpack.c.l.bf16 %v483
    %v777 = vadd.f32 %v745, %v761
    %v778 = vadd.f32 %v746, %v762
    %v779 = vadd.f32 %v747, %v763
    %v780 = vadd.f32 %v748, %v764
    %v781 = vadd.f32 %v749, %v765
    %v782 = vadd.f32 %v750, %v766
    %v783 = vadd.f32 %v751, %v767
    %v784 = vadd.f32 %v752, %v768
    %v785 = vadd.f32 %v753, %v769
    %v786 = vadd.f32 %v754, %v770
    %v787 = vadd.f32 %v755, %v771
    %v788 = vadd.f32 %v756, %v772
    %v789 = vadd.f32 %v757, %v773
    %v790 = vadd.f32 %v758, %v774
    %v791 = vadd.f32 %v759, %v775
    %v792 = vadd.f32 %v760, %v776
    %v809 = vrot.slane %v761, 1
    %v810 = vrot.slane %v762, 1
    %v811 = vrot.slane %v763, 1
    %v812 = vrot.slane %v764, 1
    %v813 = vrot.slane %v765, 1
    %v814 = vrot.slane %v766, 1
    %v815 = vrot.slane %v767, 1
    %v816 = vrot.slane %v768, 1
    %v817 = vrot.slane %v769, 1
    %v818 = vrot.slane %v770, 1
    %v819 = vrot.slane %v771, 1
    %v820 = vrot.slane %v772, 1
    %v821 = vrot.slane %v773, 1
    %v822 = vrot.slane %v774, 1
    %v823 = vrot.slane %v775, 1
    %v824 = vrot.slane %v776, 1
    %v841 = vadd.f32 %v777, %v809
    %v842 = vadd.f32 %v778, %v810
    %v843 = vadd.f32 %v779, %v811
    %v844 = vadd.f32 %v780, %v812
    %v845 = vadd.f32 %v781, %v813
    %v846 = vadd.f32 %v782, %v814
    %v847 = vadd.f32 %v783, %v815
    %v848 = vadd.f32 %v784, %v816
    %v849 = vadd.f32 %v785, %v817
    %v850 = vadd.f32 %v786, %v818
    %v851 = vadd.f32 %v787, %v819
    %v852 = vadd.f32 %v788, %v820
    %v853 = vadd.f32 %v789, %v821
    %v854 = vadd.f32 %v790, %v822
    %v855 = vadd.f32 %v791, %v823
    %v856 = vadd.f32 %v792, %v824
    %v857 = vrot.slane %v761, 2
    %v858 = vrot.slane %v762, 2
    %v859 = vrot.slane %v763, 2
    %v860 = vrot.slane %v764, 2
    %v861 = vrot.slane %v765, 2
    %v862 = vrot.slane %v766, 2
    %v863 = vrot.slane %v767, 2
    %v864 = vrot.slane %v768, 2
    %v865 = vrot.slane %v769, 2
    %v866 = vrot.slane %v770, 2
    %v867 = vrot.slane %v771, 2
    %v868 = vrot.slane %v772, 2
    %v869 = vrot.slane %v773, 2
    %v870 = vrot.slane %v774, 2
    %v871 = vrot.slane %v775, 2
    %v872 = vrot.slane %v776, 2
    %v889 = vadd.f32 %v841, %v857
    %v890 = vadd.f32 %v842, %v858
    %v891 = vadd.f32 %v843, %v859
    %v892 = vadd.f32 %v844, %v860
    %v893 = vadd.f32 %v845, %v861
    %v894 = vadd.f32 %v846, %v862
    %v895 = vadd.f32 %v847, %v863
    %v896 = vadd.f32 %v848, %v864
    %v897 = vadd.f32 %v849, %v865
    %v898 = vadd.f32 %v850, %v866
    %v899 = vadd.f32 %v851, %v867
    %v900 = vadd.f32 %v852, %v868
    %v901 = vadd.f32 %v853, %v869
    %v902 = vadd.f32 %v854, %v870
    %v903 = vadd.f32 %v855, %v871
    %v904 = vadd.f32 %v856, %v872
    %v905 = vrot.slane %v761, 3
    %v906 = vrot.slane %v762, 3
    %v907 = vrot.slane %v763, 3
    %v908 = vrot.slane %v764, 3
    %v909 = vrot.slane %v765, 3
    %v910 = vrot.slane %v766, 3
    %v911 = vrot.slane %v767, 3
    %v912 = vrot.slane %v768, 3
    %v913 = vrot.slane %v769, 3
    %v914 = vrot.slane %v770, 3
    %v915 = vrot.slane %v771, 3
    %v916 = vrot.slane %v772, 3
    %v917 = vrot.slane %v773, 3
    %v918 = vrot.slane %v774, 3
    %v919 = vrot.slane %v775, 3
    %v920 = vrot.slane %v776, 3
    %v937 = vadd.f32 %v889, %v905
    %v938 = vadd.f32 %v890, %v906
    %v939 = vadd.f32 %v891, %v907
    %v940 = vadd.f32 %v892, %v908
    %v941 = vadd.f32 %v893, %v909
    %v942 = vadd.f32 %v894, %v910
    %v943 = vadd.f32 %v895, %v911
    %v944 = vadd.f32 %v896, %v912
    %v945 = vadd.f32 %v897, %v913
    %v946 = vadd.f32 %v898, %v914
    %v947 = vadd.f32 %v899, %v915
    %v948 = vadd.f32 %v900, %v916
    %v949 = vadd.f32 %v901, %v917
    %v950 = vadd.f32 %v902, %v918
    %v951 = vadd.f32 %v903, %v919
    %v952 = vadd.f32 %v904, %v920
    %v953 = vrot.slane %v761, 6
    %v954 = vrot.slane %v762, 6
    %v955 = vrot.slane %v763, 6
    %v956 = vrot.slane %v764, 6
    %v957 = vrot.slane %v765, 6
    %v958 = vrot.slane %v766, 6
    %v959 = vrot.slane %v767, 6
    %v960 = vrot.slane %v768, 6
    %v961 = vrot.slane %v769, 6
    %v962 = vrot.slane %v770, 6
    %v963 = vrot.slane %v771, 6
    %v964 = vrot.slane %v772, 6
    %v965 = vrot.slane %v773, 6
    %v966 = vrot.slane %v774, 6
    %v967 = vrot.slane %v775, 6
    %v968 = vrot.slane %v776, 6
    %v985 = vadd.f32 %v937, %v953
    %v986 = vadd.f32 %v938, %v954
    %v987 = vadd.f32 %v939, %v955
    %v988 = vadd.f32 %v940, %v956
    %v989 = vadd.f32 %v941, %v957
    %v990 = vadd.f32 %v942, %v958
    %v991 = vadd.f32 %v943, %v959
    %v992 = vadd.f32 %v944, %v960
    %v993 = vadd.f32 %v945, %v961
    %v994 = vadd.f32 %v946, %v962
    %v995 = vadd.f32 %v947, %v963
    %v996 = vadd.f32 %v948, %v964
    %v997 = vadd.f32 %v949, %v965
    %v998 = vadd.f32 %v950, %v966
    %v999 = vadd.f32 %v951, %v967
    %v1000 = vadd.f32 %v952, %v968
    %v1001 = vrot.slane %v761, 7
    %v1002 = vrot.slane %v762, 7
    %v1003 = vrot.slane %v763, 7
    %v1004 = vrot.slane %v764, 7
    %v1005 = vrot.slane %v765, 7
    %v1006 = vrot.slane %v766, 7
    %v1007 = vrot.slane %v767, 7
    %v1008 = vrot.slane %v768, 7
    %v1009 = vrot.slane %v769, 7
    %v1010 = vrot.slane %v770, 7
    %v1011 = vrot.slane %v771, 7
    %v1012 = vrot.slane %v772, 7
    %v1013 = vrot.slane %v773, 7
    %v1014 = vrot.slane %v774, 7
    %v1015 = vrot.slane %v775, 7
    %v1016 = vrot.slane %v776, 7
    %v1033 = vadd.f32 %v985, %v1001
    %v1034 = vadd.f32 %v986, %v1002
    %v1035 = vadd.f32 %v987, %v1003
    %v1036 = vadd.f32 %v988, %v1004
    %v1037 = vadd.f32 %v989, %v1005
    %v1038 = vadd.f32 %v990, %v1006
    %v1039 = vadd.f32 %v991, %v1007
    %v1040 = vadd.f32 %v992, %v1008
    %v1041 = vadd.f32 %v993, %v1009
    %v1042 = vadd.f32 %v994, %v1010
    %v1043 = vadd.f32 %v995, %v1011
    %v1044 = vadd.f32 %v996, %v1012
    %v1045 = vadd.f32 %v997, %v1013
    %v1046 = vadd.f32 %v998, %v1014
    %v1047 = vadd.f32 %v999, %v1015
    %v1048 = vadd.f32 %v1000, %v1016
    %v1049 = vunpack.c.l.bf16 %v379
    %v1050 = vunpack.c.l.bf16 %v386
    %v1051 = vunpack.c.l.bf16 %v393
    %v1052 = vunpack.c.l.bf16 %v400
    %v1053 = vunpack.c.l.bf16 %v407
    %v1054 = vunpack.c.l.bf16 %v414
    %v1055 = vunpack.c.l.bf16 %v421
    %v1056 = vunpack.c.l.bf16 %v428
    %v1057 = vunpack.c.l.bf16 %v435
    %v1058 = vunpack.c.l.bf16 %v442
    %v1059 = vunpack.c.l.bf16 %v449
    %v1060 = vunpack.c.l.bf16 %v456
    %v1061 = vunpack.c.l.bf16 %v463
    %v1062 = vunpack.c.l.bf16 %v470
    %v1063 = vunpack.c.l.bf16 %v477
    %v1064 = vunpack.c.l.bf16 %v484
    %v1065 = vadd.f32 %v1033, %v1049
    %v1066 = vadd.f32 %v1034, %v1050
    %v1067 = vadd.f32 %v1035, %v1051
    %v1068 = vadd.f32 %v1036, %v1052
    %v1069 = vadd.f32 %v1037, %v1053
    %v1070 = vadd.f32 %v1038, %v1054
    %v1071 = vadd.f32 %v1039, %v1055
    %v1072 = vadd.f32 %v1040, %v1056
    %v1073 = vadd.f32 %v1041, %v1057
    %v1074 = vadd.f32 %v1042, %v1058
    %v1075 = vadd.f32 %v1043, %v1059
    %v1076 = vadd.f32 %v1044, %v1060
    %v1077 = vadd.f32 %v1045, %v1061
    %v1078 = vadd.f32 %v1046, %v1062
    %v1079 = vadd.f32 %v1047, %v1063
    %v1080 = vadd.f32 %v1048, %v1064
    %v1097 = vrot.slane %v1049, 1
    %v1098 = vrot.slane %v1050, 1
    %v1099 = vrot.slane %v1051, 1
    %v1100 = vrot.slane %v1052, 1
    %v1101 = vrot.slane %v1053, 1
    %v1102 = vrot.slane %v1054, 1
    %v1103 = vrot.slane %v1055, 1
    %v1104 = vrot.slane %v1056, 1
    %v1105 = vrot.slane %v1057, 1
    %v1106 = vrot.slane %v1058, 1
    %v1107 = vrot.slane %v1059, 1
    %v1108 = vrot.slane %v1060, 1
    %v1109 = vrot.slane %v1061, 1
    %v1110 = vrot.slane %v1062, 1
    %v1111 = vrot.slane %v1063, 1
    %v1112 = vrot.slane %v1064, 1
    %v1129 = vadd.f32 %v1065, %v1097
    %v1130 = vadd.f32 %v1066, %v1098
    %v1131 = vadd.f32 %v1067, %v1099
    %v1132 = vadd.f32 %v1068, %v1100
    %v1133 = vadd.f32 %v1069, %v1101
    %v1134 = vadd.f32 %v1070, %v1102
    %v1135 = vadd.f32 %v1071, %v1103
    %v1136 = vadd.f32 %v1072, %v1104
    %v1137 = vadd.f32 %v1073, %v1105
    %v1138 = vadd.f32 %v1074, %v1106
    %v1139 = vadd.f32 %v1075, %v1107
    %v1140 = vadd.f32 %v1076, %v1108
    %v1141 = vadd.f32 %v1077, %v1109
    %v1142 = vadd.f32 %v1078, %v1110
    %v1143 = vadd.f32 %v1079, %v1111
    %v1144 = vadd.f32 %v1080, %v1112
    %v1145 = vrot.slane %v1049, 2
    %v1146 = vrot.slane %v1050, 2
    %v1147 = vrot.slane %v1051, 2
    %v1148 = vrot.slane %v1052, 2
    %v1149 = vrot.slane %v1053, 2
    %v1150 = vrot.slane %v1054, 2
    %v1151 = vrot.slane %v1055, 2
    %v1152 = vrot.slane %v1056, 2
    %v1153 = vrot.slane %v1057, 2
    %v1154 = vrot.slane %v1058, 2
    %v1155 = vrot.slane %v1059, 2
    %v1156 = vrot.slane %v1060, 2
    %v1157 = vrot.slane %v1061, 2
    %v1158 = vrot.slane %v1062, 2
    %v1159 = vrot.slane %v1063, 2
    %v1160 = vrot.slane %v1064, 2
    %v1177 = vadd.f32 %v1129, %v1145
    %v1178 = vadd.f32 %v1130, %v1146
    %v1179 = vadd.f32 %v1131, %v1147
    %v1180 = vadd.f32 %v1132, %v1148
    %v1181 = vadd.f32 %v1133, %v1149
    %v1182 = vadd.f32 %v1134, %v1150
    %v1183 = vadd.f32 %v1135, %v1151
    %v1184 = vadd.f32 %v1136, %v1152
    %v1185 = vadd.f32 %v1137, %v1153
    %v1186 = vadd.f32 %v1138, %v1154
    %v1187 = vadd.f32 %v1139, %v1155
    %v1188 = vadd.f32 %v1140, %v1156
    %v1189 = vadd.f32 %v1141, %v1157
    %v1190 = vadd.f32 %v1142, %v1158
    %v1191 = vadd.f32 %v1143, %v1159
    %v1192 = vadd.f32 %v1144, %v1160
    %v1193 = vrot.slane %v1049, 5
    %v1194 = vrot.slane %v1050, 5
    %v1195 = vrot.slane %v1051, 5
    %v1196 = vrot.slane %v1052, 5
    %v1197 = vrot.slane %v1053, 5
    %v1198 = vrot.slane %v1054, 5
    %v1199 = vrot.slane %v1055, 5
    %v1200 = vrot.slane %v1056, 5
    %v1201 = vrot.slane %v1057, 5
    %v1202 = vrot.slane %v1058, 5
    %v1203 = vrot.slane %v1059, 5
    %v1204 = vrot.slane %v1060, 5
    %v1205 = vrot.slane %v1061, 5
    %v1206 = vrot.slane %v1062, 5
    %v1207 = vrot.slane %v1063, 5
    %v1208 = vrot.slane %v1064, 5
    %v1225 = vadd.f32 %v1177, %v1193
    %v1226 = vadd.f32 %v1178, %v1194
    %v1227 = vadd.f32 %v1179, %v1195
    %v1228 = vadd.f32 %v1180, %v1196
    %v1229 = vadd.f32 %v1181, %v1197
    %v1230 = vadd.f32 %v1182, %v1198
    %v1231 = vadd.f32 %v1183, %v1199
    %v1232 = vadd.f32 %v1184, %v1200
    %v1233 = vadd.f32 %v1185, %v1201
    %v1234 = vadd.f32 %v1186, %v1202
    %v1235 = vadd.f32 %v1187, %v1203
    %v1236 = vadd.f32 %v1188, %v1204
    %v1237 = vadd.f32 %v1189, %v1205
    %v1238 = vadd.f32 %v1190, %v1206
    %v1239 = vadd.f32 %v1191, %v1207
    %v1240 = vadd.f32 %v1192, %v1208
    %v1241 = vrot.slane %v1049, 6
    %v1242 = vrot.slane %v1050, 6
    %v1243 = vrot.slane %v1051, 6
    %v1244 = vrot.slane %v1052, 6
    %v1245 = vrot.slane %v1053, 6
    %v1246 = vrot.slane %v1054, 6
    %v1247 = vrot.slane %v1055, 6
    %v1248 = vrot.slane %v1056, 6
    %v1249 = vrot.slane %v1057, 6
    %v1250 = vrot.slane %v1058, 6
    %v1251 = vrot.slane %v1059, 6
    %v1252 = vrot.slane %v1060, 6
    %v1253 = vrot.slane %v1061, 6
    %v1254 = vrot.slane %v1062, 6
    %v1255 = vrot.slane %v1063, 6
    %v1256 = vrot.slane %v1064, 6
    %v1273 = vadd.f32 %v1225, %v1241
    %v1274 = vadd.f32 %v1226, %v1242
    %v1275 = vadd.f32 %v1227, %v1243
    %v1276 = vadd.f32 %v1228, %v1244
    %v1277 = vadd.f32 %v1229, %v1245
    %v1278 = vadd.f32 %v1230, %v1246
    %v1279 = vadd.f32 %v1231, %v1247
    %v1280 = vadd.f32 %v1232, %v1248
    %v1281 = vadd.f32 %v1233, %v1249
    %v1282 = vadd.f32 %v1234, %v1250
    %v1283 = vadd.f32 %v1235, %v1251
    %v1284 = vadd.f32 %v1236, %v1252
    %v1285 = vadd.f32 %v1237, %v1253
    %v1286 = vadd.f32 %v1238, %v1254
    %v1287 = vadd.f32 %v1239, %v1255
    %v1288 = vadd.f32 %v1240, %v1256
    %v1289 = vrot.slane %v1049, 7
    %v1290 = vrot.slane %v1050, 7
    %v1291 = vrot.slane %v1051, 7
    %v1292 = vrot.slane %v1052, 7
    %v1293 = vrot.slane %v1053, 7
    %v1294 = vrot.slane %v1054, 7
    %v1295 = vrot.slane %v1055, 7
    %v1296 = vrot.slane %v1056, 7
    %v1297 = vrot.slane %v1057, 7
    %v1298 = vrot.slane %v1058, 7
    %v1299 = vrot.slane %v1059, 7
    %v1300 = vrot.slane %v1060, 7
    %v1301 = vrot.slane %v1061, 7
    %v1302 = vrot.slane %v1062, 7
    %v1303 = vrot.slane %v1063, 7
    %v1304 = vrot.slane %v1064, 7
    %v1321 = vadd.f32 %v1273, %v1289
    %v1322 = vadd.f32 %v1274, %v1290
    %v1323 = vadd.f32 %v1275, %v1291
    %v1324 = vadd.f32 %v1276, %v1292
    %v1325 = vadd.f32 %v1277, %v1293
    %v1326 = vadd.f32 %v1278, %v1294
    %v1327 = vadd.f32 %v1279, %v1295
    %v1328 = vadd.f32 %v1280, %v1296
    %v1329 = vadd.f32 %v1281, %v1297
    %v1330 = vadd.f32 %v1282, %v1298
    %v1331 = vadd.f32 %v1283, %v1299
    %v1332 = vadd.f32 %v1284, %v1300
    %v1333 = vadd.f32 %v1285, %v1301
    %v1334 = vadd.f32 %v1286, %v1302
    %v1335 = vadd.f32 %v1287, %v1303
    %v1336 = vadd.f32 %v1288, %v1304
    %v1337 = vunpack.c.l.bf16 %v380
    %v1338 = vunpack.c.l.bf16 %v387
    %v1339 = vunpack.c.l.bf16 %v394
    %v1340 = vunpack.c.l.bf16 %v401
    %v1341 = vunpack.c.l.bf16 %v408
    %v1342 = vunpack.c.l.bf16 %v415
    %v1343 = vunpack.c.l.bf16 %v422
    %v1344 = vunpack.c.l.bf16 %v429
    %v1345 = vunpack.c.l.bf16 %v436
    %v1346 = vunpack.c.l.bf16 %v443
    %v1347 = vunpack.c.l.bf16 %v450
    %v1348 = vunpack.c.l.bf16 %v457
    %v1349 = vunpack.c.l.bf16 %v464
    %v1350 = vunpack.c.l.bf16 %v471
    %v1351 = vunpack.c.l.bf16 %v478
    %v1352 = vunpack.c.l.bf16 %v485
    %v1353 = vadd.f32 %v1321, %v1337
    %v1354 = vadd.f32 %v1322, %v1338
    %v1355 = vadd.f32 %v1323, %v1339
    %v1356 = vadd.f32 %v1324, %v1340
    %v1357 = vadd.f32 %v1325, %v1341
    %v1358 = vadd.f32 %v1326, %v1342
    %v1359 = vadd.f32 %v1327, %v1343
    %v1360 = vadd.f32 %v1328, %v1344
    %v1361 = vadd.f32 %v1329, %v1345
    %v1362 = vadd.f32 %v1330, %v1346
    %v1363 = vadd.f32 %v1331, %v1347
    %v1364 = vadd.f32 %v1332, %v1348
    %v1365 = vadd.f32 %v1333, %v1349
    %v1366 = vadd.f32 %v1334, %v1350
    %v1367 = vadd.f32 %v1335, %v1351
    %v1368 = vadd.f32 %v1336, %v1352
    %v1385 = vrot.slane %v1337, 1
    %v1386 = vrot.slane %v1338, 1
    %v1387 = vrot.slane %v1339, 1
    %v1388 = vrot.slane %v1340, 1
    %v1389 = vrot.slane %v1341, 1
    %v1390 = vrot.slane %v1342, 1
    %v1391 = vrot.slane %v1343, 1
    %v1392 = vrot.slane %v1344, 1
    %v1393 = vrot.slane %v1345, 1
    %v1394 = vrot.slane %v1346, 1
    %v1395 = vrot.slane %v1347, 1
    %v1396 = vrot.slane %v1348, 1
    %v1397 = vrot.slane %v1349, 1
    %v1398 = vrot.slane %v1350, 1
    %v1399 = vrot.slane %v1351, 1
    %v1400 = vrot.slane %v1352, 1
    %v1417 = vadd.f32 %v1353, %v1385
    %v1418 = vadd.f32 %v1354, %v1386
    %v1419 = vadd.f32 %v1355, %v1387
    %v1420 = vadd.f32 %v1356, %v1388
    %v1421 = vadd.f32 %v1357, %v1389
    %v1422 = vadd.f32 %v1358, %v1390
    %v1423 = vadd.f32 %v1359, %v1391
    %v1424 = vadd.f32 %v1360, %v1392
    %v1425 = vadd.f32 %v1361, %v1393
    %v1426 = vadd.f32 %v1362, %v1394
    %v1427 = vadd.f32 %v1363, %v1395
    %v1428 = vadd.f32 %v1364, %v1396
    %v1429 = vadd.f32 %v1365, %v1397
    %v1430 = vadd.f32 %v1366, %v1398
    %v1431 = vadd.f32 %v1367, %v1399
    %v1432 = vadd.f32 %v1368, %v1400
    %v1433 = vrot.slane %v1337, 4
    %v1434 = vrot.slane %v1338, 4
    %v1435 = vrot.slane %v1339, 4
    %v1436 = vrot.slane %v1340, 4
    %v1437 = vrot.slane %v1341, 4
    %v1438 = vrot.slane %v1342, 4
    %v1439 = vrot.slane %v1343, 4
    %v1440 = vrot.slane %v1344, 4
    %v1441 = vrot.slane %v1345, 4
    %v1442 = vrot.slane %v1346, 4
    %v1443 = vrot.slane %v1347, 4
    %v1444 = vrot.slane %v1348, 4
    %v1445 = vrot.slane %v1349, 4
    %v1446 = vrot.slane %v1350, 4
    %v1447 = vrot.slane %v1351, 4
    %v1448 = vrot.slane %v1352, 4
    %v1465 = vadd.f32 %v1417, %v1433
    %v1466 = vadd.f32 %v1418, %v1434
    %v1467 = vadd.f32 %v1419, %v1435
    %v1468 = vadd.f32 %v1420, %v1436
    %v1469 = vadd.f32 %v1421, %v1437
    %v1470 = vadd.f32 %v1422, %v1438
    %v1471 = vadd.f32 %v1423, %v1439
    %v1472 = vadd.f32 %v1424, %v1440
    %v1473 = vadd.f32 %v1425, %v1441
    %v1474 = vadd.f32 %v1426, %v1442
    %v1475 = vadd.f32 %v1427, %v1443
    %v1476 = vadd.f32 %v1428, %v1444
    %v1477 = vadd.f32 %v1429, %v1445
    %v1478 = vadd.f32 %v1430, %v1446
    %v1479 = vadd.f32 %v1431, %v1447
    %v1480 = vadd.f32 %v1432, %v1448
    %v1481 = vrot.slane %v1337, 5
    %v1482 = vrot.slane %v1338, 5
    %v1483 = vrot.slane %v1339, 5
    %v1484 = vrot.slane %v1340, 5
    %v1485 = vrot.slane %v1341, 5
    %v1486 = vrot.slane %v1342, 5
    %v1487 = vrot.slane %v1343, 5
    %v1488 = vrot.slane %v1344, 5
    %v1489 = vrot.slane %v1345, 5
    %v1490 = vrot.slane %v1346, 5
    %v1491 = vrot.slane %v1347, 5
    %v1492 = vrot.slane %v1348, 5
    %v1493 = vrot.slane %v1349, 5
    %v1494 = vrot.slane %v1350, 5
    %v1495 = vrot.slane %v1351, 5
    %v1496 = vrot.slane %v1352, 5
    %v1513 = vadd.f32 %v1465, %v1481
    %v1514 = vadd.f32 %v1466, %v1482
    %v1515 = vadd.f32 %v1467, %v1483
    %v1516 = vadd.f32 %v1468, %v1484
    %v1517 = vadd.f32 %v1469, %v1485
    %v1518 = vadd.f32 %v1470, %v1486
    %v1519 = vadd.f32 %v1471, %v1487
    %v1520 = vadd.f32 %v1472, %v1488
    %v1521 = vadd.f32 %v1473, %v1489
    %v1522 = vadd.f32 %v1474, %v1490
    %v1523 = vadd.f32 %v1475, %v1491
    %v1524 = vadd.f32 %v1476, %v1492
    %v1525 = vadd.f32 %v1477, %v1493
    %v1526 = vadd.f32 %v1478, %v1494
    %v1527 = vadd.f32 %v1479, %v1495
    %v1528 = vadd.f32 %v1480, %v1496
    %v1529 = vrot.slane %v1337, 6
    %v1530 = vrot.slane %v1338, 6
    %v1531 = vrot.slane %v1339, 6
    %v1532 = vrot.slane %v1340, 6
    %v1533 = vrot.slane %v1341, 6
    %v1534 = vrot.slane %v1342, 6
    %v1535 = vrot.slane %v1343, 6
    %v1536 = vrot.slane %v1344, 6
    %v1537 = vrot.slane %v1345, 6
    %v1538 = vrot.slane %v1346, 6
    %v1539 = vrot.slane %v1347, 6
    %v1540 = vrot.slane %v1348, 6
    %v1541 = vrot.slane %v1349, 6
    %v1542 = vrot.slane %v1350, 6
    %v1543 = vrot.slane %v1351, 6
    %v1544 = vrot.slane %v1352, 6
    %v1561 = vadd.f32 %v1513, %v1529
    %v1562 = vadd.f32 %v1514, %v1530
    %v1563 = vadd.f32 %v1515, %v1531
    %v1564 = vadd.f32 %v1516, %v1532
    %v1565 = vadd.f32 %v1517, %v1533
    %v1566 = vadd.f32 %v1518, %v1534
    %v1567 = vadd.f32 %v1519, %v1535
    %v1568 = vadd.f32 %v1520, %v1536
    %v1569 = vadd.f32 %v1521, %v1537
    %v1570 = vadd.f32 %v1522, %v1538
    %v1571 = vadd.f32 %v1523, %v1539
    %v1572 = vadd.f32 %v1524, %v1540
    %v1573 = vadd.f32 %v1525, %v1541
    %v1574 = vadd.f32 %v1526, %v1542
    %v1575 = vadd.f32 %v1527, %v1543
    %v1576 = vadd.f32 %v1528, %v1544
    %v1577 = vrot.slane %v1337, 7
    %v1578 = vrot.slane %v1338, 7
    %v1579 = vrot.slane %v1339, 7
    %v1580 = vrot.slane %v1340, 7
    %v1581 = vrot.slane %v1341, 7
    %v1582 = vrot.slane %v1342, 7
    %v1583 = vrot.slane %v1343, 7
    %v1584 = vrot.slane %v1344, 7
    %v1585 = vrot.slane %v1345, 7
    %v1586 = vrot.slane %v1346, 7
    %v1587 = vrot.slane %v1347, 7
    %v1588 = vrot.slane %v1348, 7
    %v1589 = vrot.slane %v1349, 7
    %v1590 = vrot.slane %v1350, 7
    %v1591 = vrot.slane %v1351, 7
    %v1592 = vrot.slane %v1352, 7
    %v1609 = vadd.f32 %v1561, %v1577
    %v1610 = vadd.f32 %v1562, %v1578
    %v1611 = vadd.f32 %v1563, %v1579
    %v1612 = vadd.f32 %v1564, %v1580
    %v1613 = vadd.f32 %v1565, %v1581
    %v1614 = vadd.f32 %v1566, %v1582
    %v1615 = vadd.f32 %v1567, %v1583
    %v1616 = vadd.f32 %v1568, %v1584
    %v1617 = vadd.f32 %v1569, %v1585
    %v1618 = vadd.f32 %v1570, %v1586
    %v1619 = vadd.f32 %v1571, %v1587
    %v1620 = vadd.f32 %v1572, %v1588
    %v1621 = vadd.f32 %v1573, %v1589
    %v1622 = vadd.f32 %v1574, %v1590
    %v1623 = vadd.f32 %v1575, %v1591
    %v1624 = vadd.f32 %v1576, %v1592
    %v1625 = vunpack.c.l.bf16 %v381
    %v1626 = vunpack.c.l.bf16 %v388
    %v1627 = vunpack.c.l.bf16 %v395
    %v1628 = vunpack.c.l.bf16 %v402
    %v1629 = vunpack.c.l.bf16 %v409
    %v1630 = vunpack.c.l.bf16 %v416
    %v1631 = vunpack.c.l.bf16 %v423
    %v1632 = vunpack.c.l.bf16 %v430
    %v1633 = vunpack.c.l.bf16 %v437
    %v1634 = vunpack.c.l.bf16 %v444
    %v1635 = vunpack.c.l.bf16 %v451
    %v1636 = vunpack.c.l.bf16 %v458
    %v1637 = vunpack.c.l.bf16 %v465
    %v1638 = vunpack.c.l.bf16 %v472
    %v1639 = vunpack.c.l.bf16 %v479
    %v1640 = vunpack.c.l.bf16 %v486
    %v1641 = vadd.f32 %v1609, %v1625
    %v1642 = vadd.f32 %v1610, %v1626
    %v1643 = vadd.f32 %v1611, %v1627
    %v1644 = vadd.f32 %v1612, %v1628
    %v1645 = vadd.f32 %v1613, %v1629
    %v1646 = vadd.f32 %v1614, %v1630
    %v1647 = vadd.f32 %v1615, %v1631
    %v1648 = vadd.f32 %v1616, %v1632
    %v1649 = vadd.f32 %v1617, %v1633
    %v1650 = vadd.f32 %v1618, %v1634
    %v1651 = vadd.f32 %v1619, %v1635
    %v1652 = vadd.f32 %v1620, %v1636
    %v1653 = vadd.f32 %v1621, %v1637
    %v1654 = vadd.f32 %v1622, %v1638
    %v1655 = vadd.f32 %v1623, %v1639
    %v1656 = vadd.f32 %v1624, %v1640
    %v1657 = vmul.f32 %v1641, 0.04
    %v1658 = vmul.f32 %v1642, 0.04
    %v1659 = vmul.f32 %v1643, 0.04
    %v1660 = vmul.f32 %v1644, 0.04
    %v1661 = vmul.f32 %v1645, 0.04
    %v1662 = vmul.f32 %v1646, 0.04
    %v1663 = vmul.f32 %v1647, 0.04
    %v1664 = vmul.f32 %v1648, 0.04
    %v1665 = vmul.f32 %v1649, 0.04
    %v1666 = vmul.f32 %v1650, 0.04
    %v1667 = vmul.f32 %v1651, 0.04
    %v1668 = vmul.f32 %v1652, 0.04
    %v1669 = vmul.f32 %v1653, 0.04
    %v1670 = vmul.f32 %v1654, 0.04
    %v1671 = vmul.f32 %v1655, 0.04
    %v1672 = vmul.f32 %v1656, 0.04
    %v1673 = vpack.c.bf16 %v1657, %v1657
    %v1674 = vpack.c.bf16 %v1658, %v1658
    %v1675 = vpack.c.bf16 %v1659, %v1659
    %v1676 = vpack.c.bf16 %v1660, %v1660
    %v1677 = vpack.c.bf16 %v1661, %v1661
    %v1678 = vpack.c.bf16 %v1662, %v1662
    %v1679 = vpack.c.bf16 %v1663, %v1663
    %v1680 = vpack.c.bf16 %v1664, %v1664
    %v1681 = vpack.c.bf16 %v1665, %v1665
    %v1682 = vpack.c.bf16 %v1666, %v1666
    %v1683 = vpack.c.bf16 %v1667, %v1667
    %v1684 = vpack.c.bf16 %v1668, %v1668
    %v1685 = vpack.c.bf16 %v1669, %v1669
    %v1686 = vpack.c.bf16 %v1670, %v1670
    %v1687 = vpack.c.bf16 %v1671, %v1671
    %v1688 = vpack.c.bf16 %v1672, %v1672
    %v1689 = vld [vmem:[%s1] sm:$0xf]
    %v1690 = vld [vmem:[%s2] sm:$0x1]
    %v1692 = vperm.slane %v1690, 0
    %v1710 = vunpack.c.l.b16 %v1673
    %v1711 = vunpack.c.l.b16 %v1674
    %v1712 = vunpack.c.l.b16 %v1675
    %v1713 = vunpack.c.l.b16 %v1676
    %v1714 = vunpack.c.l.b16 %v1677
    %v1715 = vunpack.c.l.b16 %v1678
    %v1716 = vunpack.c.l.b16 %v1679
    %v1717 = vunpack.c.l.b16 %v1680
    %v1718 = vunpack.c.l.b16 %v1681
    %v1719 = vunpack.c.l.b16 %v1682
    %v1720 = vunpack.c.l.b16 %v1683
    %v1721 = vunpack.c.l.b16 %v1684
    %v1722 = vunpack.c.l.b16 %v1685
    %v1723 = vunpack.c.l.b16 %v1686
    %v1724 = vunpack.c.l.b16 %v1687
    %v1725 = vunpack.c.l.b16 %v1688
    %v1726 = vrot.slane %v1711, 7
    %vm1727 = vcmask 1041409
    %v1728 = vsel %vm1727, %v1726, %v1710
    %v1729 = vrot.slane %v1712, 6
    %vm1730 = vcmask 1042434
    %v1731 = vsel %vm1730, %v1729, %v1728
    %v1732 = vrot.slane %v1713, 5
    %vm1733 = vcmask 1043459
    %v1734 = vsel %vm1733, %v1732, %v1731
    %v1735 = vrot.slane %v1714, 4
    %vm1736 = vcmask 1044484
    %v1737 = vsel %vm1736, %v1735, %v1734
    %v1738 = vrot.slane %v1715, 3
    %vm1739 = vcmask 1045509
    %v1740 = vsel %vm1739, %v1738, %v1737
    %v1741 = vrot.slane %v1716, 2
    %vm1742 = vcmask 1046534
    %v1743 = vsel %vm1742, %v1741, %v1740
    %v1744 = vrot.slane %v1717, 1
    %vm1745 = vcmask 1047559
    %v1746 = vsel %vm1745, %v1744, %v1743
    %v1747 = vrot.slane %v1719, 7
    %v1748 = vsel %vm1727, %v1747, %v1718
    %v1749 = vrot.slane %v1720, 6
    %v1750 = vsel %vm1730, %v1749, %v1748
    %v1751 = vrot.slane %v1721, 5
    %v1752 = vsel %vm1733, %v1751, %v1750
    %v1753 = vrot.slane %v1722, 4
    %v1754 = vsel %vm1736, %v1753, %v1752
    %v1755 = vrot.slane %v1723, 3
    %v1756 = vsel %vm1739, %v1755, %v1754
    %v1757 = vrot.slane %v1724, 2
    %v1758 = vsel %vm1742, %v1757, %v1756
    %v1759 = vrot.slane %v1725, 1
    %v1760 = vsel %vm1745, %v1759, %v1758
    %v1761 = vpack.c.b16 %v1760, %v1746
    %vm1762 = vcmask 64512
    %v1764 = vsel %vm1762, %v1761, 0
    %vm1766 = vcmask 1043456
    %v1768 = vsel %vm1766, %v1689, 0
    %1770 = vmatpush.bf16.msra.mxu0 0
    %1771 = vmatpush.bf16.msra.mxu0 0
    %1772 = vmatpush.bf16.msra.mxu0 0
    %1773 = vmatpush.bf16.msra.mxu0 0
    %1774 = vmatpush.bf16.msra.mxu0 0
    %1775 = vmatpush.bf16.msra.mxu0 0
    %1776 = vmatpush.bf16.msra.mxu0 0
    %1777 = vmatpush.bf16.msra.mxu0 %v1768
    %1778 = vmatmul.bf16.gmra.mxu0 %v1764
    %v1779 = vpop.f32.mrf.mxu0
    %v1780 = vadd.f32 %v1692, %v1779
    %v1781 = vpop.f32.mrf.mxu0
    %v1782 = vadd.f32 %v1692, %v1781
    %1783 = vdwg.mxu0
    %v1784 = vmax.f32 %v1780, 0.0
    %v1785 = vmax.f32 %v1782, 0.0
    %v1786 = vpack.c.bf16 %v1784, %v1784
    %v1787 = vpack.c.bf16 %v1785, %v1785
    %v1788 = vadd.f32 %v697, %v1001
    %v1789 = vadd.f32 %v698, %v1002
    %v1790 = vadd.f32 %v699, %v1003
    %v1791 = vadd.f32 %v700, %v1004
    %v1792 = vadd.f32 %v701, %v1005
    %v1793 = vadd.f32 %v702, %v1006
    %v1794 = vadd.f32 %v703, %v1007
    %v1795 = vadd.f32 %v704, %v1008
    %v1796 = vadd.f32 %v705, %v1009
    %v1797 = vadd.f32 %v706, %v1010
    %v1798 = vadd.f32 %v707, %v1011
    %v1799 = vadd.f32 %v708, %v1012
    %v1800 = vadd.f32 %v709, %v1013
    %v1801 = vadd.f32 %v710, %v1014
    %v1802 = vadd.f32 %v711, %v1015
    %v1803 = vadd.f32 %v712, %v1016
    %v1804 = vadd.f32 %v1788, %v761
    %v1805 = vadd.f32 %v1789, %v762
    %v1806 = vadd.f32 %v1790, %v763
    %v1807 = vadd.f32 %v1791, %v764
    %v1808 = vadd.f32 %v1792, %v765
    %v1809 = vadd.f32 %v1793, %v766
    %v1810 = vadd.f32 %v1794, %v767
    %v1811 = vadd.f32 %v1795, %v768
    %v1812 = vadd.f32 %v1796, %v769
    %v1813 = vadd.f32 %v1797, %v770
    %v1814 = vadd.f32 %v1798, %v771
    %v1815 = vadd.f32 %v1799, %v772
    %v1816 = vadd.f32 %v1800, %v773
    %v1817 = vadd.f32 %v1801, %v774
    %v1818 = vadd.f32 %v1802, %v775
    %v1819 = vadd.f32 %v1803, %v776
    %v1820 = vadd.f32 %v1804, %v809
    %v1821 = vadd.f32 %v1805, %v810
    %v1822 = vadd.f32 %v1806, %v811
    %v1823 = vadd.f32 %v1807, %v812
    %v1824 = vadd.f32 %v1808, %v813
    %v1825 = vadd.f32 %v1809, %v814
    %v1826 = vadd.f32 %v1810, %v815
    %v1827 = vadd.f32 %v1811, %v816
    %v1828 = vadd.f32 %v1812, %v817
    %v1829 = vadd.f32 %v1813, %v818
    %v1830 = vadd.f32 %v1814, %v819
    %v1831 = vadd.f32 %v1815, %v820
    %v1832 = vadd.f32 %v1816, %v821
    %v1833 = vadd.f32 %v1817, %v822
    %v1834 = vadd.f32 %v1818, %v823
    %v1835 = vadd.f32 %v1819, %v824
    %v1836 = vadd.f32 %v1820, %v857
    %v1837 = vadd.f32 %v1821, %v858
    %v1838 = vadd.f32 %v1822, %v859
    %v1839 = vadd.f32 %v1823, %v860
    %v1840 = vadd.f32 %v1824, %v861
    %v1841 = vadd.f32 %v1825, %v862
    %v1842 = vadd.f32 %v1826, %v863
    %v1843 = vadd.f32 %v1827, %v864
    %v1844 = vadd.f32 %v1828, %v865
    %v1845 = vadd.f32 %v1829, %v866
    %v1846 = vadd.f32 %v1830, %v867
    %v1847 = vadd.f32 %v1831, %v868
    %v1848 = vadd.f32 %v1832, %v869
    %v1849 = vadd.f32 %v1833, %v870
    %v1850 = vadd.f32 %v1834, %v871
    %v1851 = vadd.f32 %v1835, %v872
    %v1852 = vadd.f32 %v1836, %v905
    %v1853 = vadd.f32 %v1837, %v906
    %v1854 = vadd.f32 %v1838, %v907
    %v1855 = vadd.f32 %v1839, %v908
    %v1856 = vadd.f32 %v1840, %v909
    %v1857 = vadd.f32 %v1841, %v910
    %v1858 = vadd.f32 %v1842, %v911
    %v1859 = vadd.f32 %v1843, %v912
    %v1860 = vadd.f32 %v1844, %v913
    %v1861 = vadd.f32 %v1845, %v914
    %v1862 = vadd.f32 %v1846, %v915
    %v1863 = vadd.f32 %v1847, %v916
    %v1864 = vadd.f32 %v1848, %v917
    %v1865 = vadd.f32 %v1849, %v918
    %v1866 = vadd.f32 %v1850, %v919
    %v1867 = vadd.f32 %v1851, %v920
    %v1868 = vadd.f32 %v1852, %v1241
    %v1869 = vadd.f32 %v1853, %v1242
    %v1870 = vadd.f32 %v1854, %v1243
    %v1871 = vadd.f32 %v1855, %v1244
    %v1872 = vadd.f32 %v1856, %v1245
    %v1873 = vadd.f32 %v1857, %v1246
    %v1874 = vadd.f32 %v1858, %v1247
    %v1875 = vadd.f32 %v1859, %v1248
    %v1876 = vadd.f32 %v1860, %v1249
    %v1877 = vadd.f32 %v1861, %v1250
    %v1878 = vadd.f32 %v1862, %v1251
    %v1879 = vadd.f32 %v1863, %v1252
    %v1880 = vadd.f32 %v1864, %v1253
    %v1881 = vadd.f32 %v1865, %v1254
    %v1882 = vadd.f32 %v1866, %v1255
    %v1883 = vadd.f32 %v1867, %v1256
    %v1884 = vadd.f32 %v1868, %v1289
    %v1885 = vadd.f32 %v1869, %v1290
    %v1886 = vadd.f32 %v1870, %v1291
    %v1887 = vadd.f32 %v1871, %v1292
    %v1888 = vadd.f32 %v1872, %v1293
    %v1889 = vadd.f32 %v1873, %v1294
    %v1890 = vadd.f32 %v1874, %v1295
    %v1891 = vadd.f32 %v1875, %v1296
    %v1892 = vadd.f32 %v1876, %v1297
    %v1893 = vadd.f32 %v1877, %v1298
    %v1894 = vadd.f32 %v1878, %v1299
    %v1895 = vadd.f32 %v1879, %v1300
    %v1896 = vadd.f32 %v1880, %v1301
    %v1897 = vadd.f32 %v1881, %v1302
    %v1898 = vadd.f32 %v1882, %v1303
    %v1899 = vadd.f32 %v1883, %v1304
    %v1900 = vadd.f32 %v1884, %v1049
    %v1901 = vadd.f32 %v1885, %v1050
    %v1902 = vadd.f32 %v1886, %v1051
    %v1903 = vadd.f32 %v1887, %v1052
    %v1904 = vadd.f32 %v1888, %v1053
    %v1905 = vadd.f32 %v1889, %v1054
    %v1906 = vadd.f32 %v1890, %v1055
    %v1907 = vadd.f32 %v1891, %v1056
    %v1908 = vadd.f32 %v1892, %v1057
    %v1909 = vadd.f32 %v1893, %v1058
    %v1910 = vadd.f32 %v1894, %v1059
    %v1911 = vadd.f32 %v1895, %v1060
    %v1912 = vadd.f32 %v1896, %v1061
    %v1913 = vadd.f32 %v1897, %v1062
    %v1914 = vadd.f32 %v1898, %v1063
    %v1915 = vadd.f32 %v1899, %v1064
    %v1916 = vadd.f32 %v1900, %v1097
    %v1917 = vadd.f32 %v1901, %v1098
    %v1918 = vadd.f32 %v1902, %v1099
    %v1919 = vadd.f32 %v1903, %v1100
    %v1920 = vadd.f32 %v1904, %v1101
    %v1921 = vadd.f32 %v1905, %v1102
    %v1922 = vadd.f32 %v1906, %v1103
    %v1923 = vadd.f32 %v1907, %v1104
    %v1924 = vadd.f32 %v1908, %v1105
    %v1925 = vadd.f32 %v1909, %v1106
    %v1926 = vadd.f32 %v1910, %v1107
    %v1927 = vadd.f32 %v1911, %v1108
    %v1928 = vadd.f32 %v1912, %v1109
    %v1929 = vadd.f32 %v1913, %v1110
    %v1930 = vadd.f32 %v1914, %v1111
    %v1931 = vadd.f32 %v1915, %v1112
    %v1932 = vadd.f32 %v1916, %v1145
    %v1933 = vadd.f32 %v1917, %v1146
    %v1934 = vadd.f32 %v1918, %v1147
    %v1935 = vadd.f32 %v1919, %v1148
    %v1936 = vadd.f32 %v1920, %v1149
    %v1937 = vadd.f32 %v1921, %v1150
    %v1938 = vadd.f32 %v1922, %v1151
    %v1939 = vadd.f32 %v1923, %v1152
    %v1940 = vadd.f32 %v1924, %v1153
    %v1941 = vadd.f32 %v1925, %v1154
    %v1942 = vadd.f32 %v1926, %v1155
    %v1943 = vadd.f32 %v1927, %v1156
    %v1944 = vadd.f32 %v1928, %v1157
    %v1945 = vadd.f32 %v1929, %v1158
    %v1946 = vadd.f32 %v1930, %v1159
    %v1947 = vadd.f32 %v1931, %v1160
    %v1948 = vadd.f32 %v1932, %v1193
    %v1949 = vadd.f32 %v1933, %v1194
    %v1950 = vadd.f32 %v1934, %v1195
    %v1951 = vadd.f32 %v1935, %v1196
    %v1952 = vadd.f32 %v1936, %v1197
    %v1953 = vadd.f32 %v1937, %v1198
    %v1954 = vadd.f32 %v1938, %v1199
    %v1955 = vadd.f32 %v1939, %v1200
    %v1956 = vadd.f32 %v1940, %v1201
    %v1957 = vadd.f32 %v1941, %v1202
    %v1958 = vadd.f32 %v1942, %v1203
    %v1959 = vadd.f32 %v1943, %v1204
    %v1960 = vadd.f32 %v1944, %v1205
    %v1961 = vadd.f32 %v1945, %v1206
    %v1962 = vadd.f32 %v1946, %v1207
    %v1963 = vadd.f32 %v1947, %v1208
    %v1964 = vadd.f32 %v1948, %v1529
    %v1965 = vadd.f32 %v1949, %v1530
    %v1966 = vadd.f32 %v1950, %v1531
    %v1967 = vadd.f32 %v1951, %v1532
    %v1968 = vadd.f32 %v1952, %v1533
    %v1969 = vadd.f32 %v1953, %v1534
    %v1970 = vadd.f32 %v1954, %v1535
    %v1971 = vadd.f32 %v1955, %v1536
    %v1972 = vadd.f32 %v1956, %v1537
    %v1973 = vadd.f32 %v1957, %v1538
    %v1974 = vadd.f32 %v1958, %v1539
    %v1975 = vadd.f32 %v1959, %v1540
    %v1976 = vadd.f32 %v1960, %v1541
    %v1977 = vadd.f32 %v1961, %v1542
    %v1978 = vadd.f32 %v1962, %v1543
    %v1979 = vadd.f32 %v1963, %v1544
    %v1980 = vadd.f32 %v1964, %v1577
    %v1981 = vadd.f32 %v1965, %v1578
    %v1982 = vadd.f32 %v1966, %v1579
    %v1983 = vadd.f32 %v1967, %v1580
    %v1984 = vadd.f32 %v1968, %v1581
    %v1985 = vadd.f32 %v1969, %v1582
    %v1986 = vadd.f32 %v1970, %v1583
    %v1987 = vadd.f32 %v1971, %v1584
    %v1988 = vadd.f32 %v1972, %v1585
    %v1989 = vadd.f32 %v1973, %v1586
    %v1990 = vadd.f32 %v1974, %v1587
    %v1991 = vadd.f32 %v1975, %v1588
    %v1992 = vadd.f32 %v1976, %v1589
    %v1993 = vadd.f32 %v1977, %v1590
    %v1994 = vadd.f32 %v1978, %v1591
    %v1995 = vadd.f32 %v1979, %v1592
    %v1996 = vadd.f32 %v1980, %v1337
    %v1997 = vadd.f32 %v1981, %v1338
    %v1998 = vadd.f32 %v1982, %v1339
    %v1999 = vadd.f32 %v1983, %v1340
    %v2000 = vadd.f32 %v1984, %v1341
    %v2001 = vadd.f32 %v1985, %v1342
    %v2002 = vadd.f32 %v1986, %v1343
    %v2003 = vadd.f32 %v1987, %v1344
    %v2004 = vadd.f32 %v1988, %v1345
    %v2005 = vadd.f32 %v1989, %v1346
    %v2006 = vadd.f32 %v1990, %v1347
    %v2007 = vadd.f32 %v1991, %v1348
    %v2008 = vadd.f32 %v1992, %v1349
    %v2009 = vadd.f32 %v1993, %v1350
    %v2010 = vadd.f32 %v1994, %v1351
    %v2011 = vadd.f32 %v1995, %v1352
    %v2012 = vadd.f32 %v1996, %v1385
    %v2013 = vadd.f32 %v1997, %v1386
    %v2014 = vadd.f32 %v1998, %v1387
    %v2015 = vadd.f32 %v1999, %v1388
    %v2016 = vadd.f32 %v2000, %v1389
    %v2017 = vadd.f32 %v2001, %v1390
    %v2018 = vadd.f32 %v2002, %v1391
    %v2019 = vadd.f32 %v2003, %v1392
    %v2020 = vadd.f32 %v2004, %v1393
    %v2021 = vadd.f32 %v2005, %v1394
    %v2022 = vadd.f32 %v2006, %v1395
    %v2023 = vadd.f32 %v2007, %v1396
    %v2024 = vadd.f32 %v2008, %v1397
    %v2025 = vadd.f32 %v2009, %v1398
    %v2026 = vadd.f32 %v2010, %v1399
    %v2027 = vadd.f32 %v2011, %v1400
    %v2028 = vadd.f32 %v2012, %v1433
    %v2029 = vadd.f32 %v2013, %v1434
    %v2030 = vadd.f32 %v2014, %v1435
    %v2031 = vadd.f32 %v2015, %v1436
    %v2032 = vadd.f32 %v2016, %v1437
    %v2033 = vadd.f32 %v2017, %v1438
    %v2034 = vadd.f32 %v2018, %v1439
    %v2035 = vadd.f32 %v2019, %v1440
    %v2036 = vadd.f32 %v2020, %v1441
    %v2037 = vadd.f32 %v2021, %v1442
    %v2038 = vadd.f32 %v2022, %v1443
    %v2039 = vadd.f32 %v2023, %v1444
    %v2040 = vadd.f32 %v2024, %v1445
    %v2041 = vadd.f32 %v2025, %v1446
    %v2042 = vadd.f32 %v2026, %v1447
    %v2043 = vadd.f32 %v2027, %v1448
    %v2044 = vadd.f32 %v2028, %v1481
    %v2045 = vadd.f32 %v2029, %v1482
    %v2046 = vadd.f32 %v2030, %v1483
    %v2047 = vadd.f32 %v2031, %v1484
    %v2048 = vadd.f32 %v2032, %v1485
    %v2049 = vadd.f32 %v2033, %v1486
    %v2050 = vadd.f32 %v2034, %v1487
    %v2051 = vadd.f32 %v2035, %v1488
    %v2052 = vadd.f32 %v2036, %v1489
    %v2053 = vadd.f32 %v2037, %v1490
    %v2054 = vadd.f32 %v2038, %v1491
    %v2055 = vadd.f32 %v2039, %v1492
    %v2056 = vadd.f32 %v2040, %v1493
    %v2057 = vadd.f32 %v2041, %v1494
    %v2058 = vadd.f32 %v2042, %v1495
    %v2059 = vadd.f32 %v2043, %v1496
    %v2076 = vrot.slane %v1625, 6
    %v2077 = vrot.slane %v1626, 6
    %v2078 = vrot.slane %v1627, 6
    %v2079 = vrot.slane %v1628, 6
    %v2080 = vrot.slane %v1629, 6
    %v2081 = vrot.slane %v1630, 6
    %v2082 = vrot.slane %v1631, 6
    %v2083 = vrot.slane %v1632, 6
    %v2084 = vrot.slane %v1633, 6
    %v2085 = vrot.slane %v1634, 6
    %v2086 = vrot.slane %v1635, 6
    %v2087 = vrot.slane %v1636, 6
    %v2088 = vrot.slane %v1637, 6
    %v2089 = vrot.slane %v1638, 6
    %v2090 = vrot.slane %v1639, 6
    %v2091 = vrot.slane %v1640, 6
    %v2108 = vadd.f32 %v2044, %v2076
    %v2109 = vadd.f32 %v2045, %v2077
    %v2110 = vadd.f32 %v2046, %v2078
    %v2111 = vadd.f32 %v2047, %v2079
    %v2112 = vadd.f32 %v2048, %v2080
    %v2113 = vadd.f32 %v2049, %v2081
    %v2114 = vadd.f32 %v2050, %v2082
    %v2115 = vadd.f32 %v2051, %v2083
    %v2116 = vadd.f32 %v2052, %v2084
    %v2117 = vadd.f32 %v2053, %v2085
    %v2118 = vadd.f32 %v2054, %v2086
    %v2119 = vadd.f32 %v2055, %v2087
    %v2120 = vadd.f32 %v2056, %v2088
    %v2121 = vadd.f32 %v2057, %v2089
    %v2122 = vadd.f32 %v2058, %v2090
    %v2123 = vadd.f32 %v2059, %v2091
    %v2124 = vrot.slane %v1625, 7
    %v2125 = vrot.slane %v1626, 7
    %v2126 = vrot.slane %v1627, 7
    %v2127 = vrot.slane %v1628, 7
    %v2128 = vrot.slane %v1629, 7
    %v2129 = vrot.slane %v1630, 7
    %v2130 = vrot.slane %v1631, 7
    %v2131 = vrot.slane %v1632, 7
    %v2132 = vrot.slane %v1633, 7
    %v2133 = vrot.slane %v1634, 7
    %v2134 = vrot.slane %v1635, 7
    %v2135 = vrot.slane %v1636, 7
    %v2136 = vrot.slane %v1637, 7
    %v2137 = vrot.slane %v1638, 7
    %v2138 = vrot.slane %v1639, 7
    %v2139 = vrot.slane %v1640, 7
    %v2156 = vadd.f32 %v2108, %v2124
    %v2157 = vadd.f32 %v2109, %v2125
    %v2158 = vadd.f32 %v2110, %v2126
    %v2159 = vadd.f32 %v2111, %v2127
    %v2160 = vadd.f32 %v2112, %v2128
    %v2161 = vadd.f32 %v2113, %v2129
    %v2162 = vadd.f32 %v2114, %v2130
    %v2163 = vadd.f32 %v2115, %v2131
    %v2164 = vadd.f32 %v2116, %v2132
    %v2165 = vadd.f32 %v2117, %v2133
    %v2166 = vadd.f32 %v2118, %v2134
    %v2167 = vadd.f32 %v2119, %v2135
    %v2168 = vadd.f32 %v2120, %v2136
    %v2169 = vadd.f32 %v2121, %v2137
    %v2170 = vadd.f32 %v2122, %v2138
    %v2171 = vadd.f32 %v2123, %v2139
    %v2172 = vadd.f32 %v2156, %v1625
    %v2173 = vadd.f32 %v2157, %v1626
    %v2174 = vadd.f32 %v2158, %v1627
    %v2175 = vadd.f32 %v2159, %v1628
    %v2176 = vadd.f32 %v2160, %v1629
    %v2177 = vadd.f32 %v2161, %v1630
    %v2178 = vadd.f32 %v2162, %v1631
    %v2179 = vadd.f32 %v2163, %v1632
    %v2180 = vadd.f32 %v2164, %v1633
    %v2181 = vadd.f32 %v2165, %v1634
    %v2182 = vadd.f32 %v2166, %v1635
    %v2183 = vadd.f32 %v2167, %v1636
    %v2184 = vadd.f32 %v2168, %v1637
    %v2185 = vadd.f32 %v2169, %v1638
    %v2186 = vadd.f32 %v2170, %v1639
    %v2187 = vadd.f32 %v2171, %v1640
    %v2188 = vmul.f32 %v2172, 0.04
    %v2189 = vmul.f32 %v2173, 0.04
    %v2190 = vmul.f32 %v2174, 0.04
    %v2191 = vmul.f32 %v2175, 0.04
    %v2192 = vmul.f32 %v2176, 0.04
    %v2193 = vmul.f32 %v2177, 0.04
    %v2194 = vmul.f32 %v2178, 0.04
    %v2195 = vmul.f32 %v2179, 0.04
    %v2196 = vmul.f32 %v2180, 0.04
    %v2197 = vmul.f32 %v2181, 0.04
    %v2198 = vmul.f32 %v2182, 0.04
    %v2199 = vmul.f32 %v2183, 0.04
    %v2200 = vmul.f32 %v2184, 0.04
    %v2201 = vmul.f32 %v2185, 0.04
    %v2202 = vmul.f32 %v2186, 0.04
    %v2203 = vmul.f32 %v2187, 0.04
    %v2204 = vpack.c.bf16 %v2188, %v2188
    %v2205 = vpack.c.bf16 %v2189, %v2189
    %v2206 = vpack.c.bf16 %v2190, %v2190
    %v2207 = vpack.c.bf16 %v2191, %v2191
    %v2208 = vpack.c.bf16 %v2192, %v2192
    %v2209 = vpack.c.bf16 %v2193, %v2193
    %v2210 = vpack.c.bf16 %v2194, %v2194
    %v2211 = vpack.c.bf16 %v2195, %v2195
    %v2212 = vpack.c.bf16 %v2196, %v2196
    %v2213 = vpack.c.bf16 %v2197, %v2197
    %v2214 = vpack.c.bf16 %v2198, %v2198
    %v2215 = vpack.c.bf16 %v2199, %v2199
    %v2216 = vpack.c.bf16 %v2200, %v2200
    %v2217 = vpack.c.bf16 %v2201, %v2201
    %v2218 = vpack.c.bf16 %v2202, %v2202
    %v2219 = vpack.c.bf16 %v2203, %v2203
    %v2236 = vunpack.c.l.b16 %v2204
    %v2237 = vunpack.c.l.b16 %v2205
    %v2238 = vunpack.c.l.b16 %v2206
    %v2239 = vunpack.c.l.b16 %v2207
    %v2240 = vunpack.c.l.b16 %v2208
    %v2241 = vunpack.c.l.b16 %v2209
    %v2242 = vunpack.c.l.b16 %v2210
    %v2243 = vunpack.c.l.b16 %v2211
    %v2244 = vunpack.c.l.b16 %v2212
    %v2245 = vunpack.c.l.b16 %v2213
    %v2246 = vunpack.c.l.b16 %v2214
    %v2247 = vunpack.c.l.b16 %v2215
    %v2248 = vunpack.c.l.b16 %v2216
    %v2249 = vunpack.c.l.b16 %v2217
    %v2250 = vunpack.c.l.b16 %v2218
    %v2251 = vunpack.c.l.b16 %v2219
    %v2252 = vrot.slane %v2236, 2
    %v2253 = vrot.slane %v2237, 1
    %v2254 = vsel %vm1727, %v2253, %v2252
    %v2255 = vsel %vm1730, %v2238, %v2254
    %v2256 = vrot.slane %v2239, 7
    %v2257 = vsel %vm1733, %v2256, %v2255
    %v2258 = vrot.slane %v2240, 6
    %v2259 = vsel %vm1736, %v2258, %v2257
    %v2260 = vrot.slane %v2241, 5
    %v2261 = vsel %vm1739, %v2260, %v2259
    %v2262 = vrot.slane %v2242, 4
    %v2263 = vsel %vm1742, %v2262, %v2261
    %v2264 = vrot.slane %v2243, 3
    %v2265 = vsel %vm1745, %v2264, %v2263
    %v2266 = vrot.slane %v2244, 2
    %v2267 = vrot.slane %v2245, 1
    %v2268 = vsel %vm1727, %v2267, %v2266
    %v2269 = vsel %vm1730, %v2246, %v2268
    %v2270 = vrot.slane %v2247, 7
    %v2271 = vsel %vm1733, %v2270, %v2269
    %v2272 = vrot.slane %v2248, 6
    %v2273 = vsel %vm1736, %v2272, %v2271
    %v2274 = vrot.slane %v2249, 5
    %v2275 = vsel %vm1739, %v2274, %v2273
    %v2276 = vrot.slane %v2250, 4
    %v2277 = vsel %vm1742, %v2276, %v2275
    %v2278 = vrot.slane %v2251, 3
    %v2279 = vsel %vm1745, %v2278, %v2277
    %v2280 = vpack.c.b16 %v2279, %v2265
    %v2282 = vsel %vm1762, %v2280, 0
    %2284 = vmatpush.bf16.msra.mxu0 0
    %2285 = vmatpush.bf16.msra.mxu0 0
    %2286 = vmatpush.bf16.msra.mxu0 0
    %2287 = vmatpush.bf16.msra.mxu0 0
    %2288 = vmatpush.bf16.msra.mxu0 0
    %2289 = vmatpush.bf16.msra.mxu0 0
    %2290 = vmatpush.bf16.msra.mxu0 0
    %2291 = vmatpush.bf16.msra.mxu0 %v1768
    %2292 = vmatmul.bf16.gmra.mxu0 %v2282
    %v2293 = vpop.f32.mrf.mxu0
    %v2294 = vadd.f32 %v1692, %v2293
    %v2295 = vpop.f32.mrf.mxu0
    %v2296 = vadd.f32 %v1692, %v2295
    %2297 = vdwg.mxu0
    %v2298 = vmax.f32 %v2294, 0.0
    %v2299 = vmax.f32 %v2296, 0.0
    %v2300 = vpack.c.bf16 %v2298, %v2298
    %v2301 = vpack.c.bf16 %v2299, %v2299
    %v2302 = vadd.f32 %v761, %v809
    %v2303 = vadd.f32 %v762, %v810
    %v2304 = vadd.f32 %v763, %v811
    %v2305 = vadd.f32 %v764, %v812
    %v2306 = vadd.f32 %v765, %v813
    %v2307 = vadd.f32 %v766, %v814
    %v2308 = vadd.f32 %v767, %v815
    %v2309 = vadd.f32 %v768, %v816
    %v2310 = vadd.f32 %v769, %v817
    %v2311 = vadd.f32 %v770, %v818
    %v2312 = vadd.f32 %v771, %v819
    %v2313 = vadd.f32 %v772, %v820
    %v2314 = vadd.f32 %v773, %v821
    %v2315 = vadd.f32 %v774, %v822
    %v2316 = vadd.f32 %v775, %v823
    %v2317 = vadd.f32 %v776, %v824
    %v2318 = vadd.f32 %v2302, %v1145
    %v2319 = vadd.f32 %v2303, %v1146
    %v2320 = vadd.f32 %v2304, %v1147
    %v2321 = vadd.f32 %v2305, %v1148
    %v2322 = vadd.f32 %v2306, %v1149
    %v2323 = vadd.f32 %v2307, %v1150
    %v2324 = vadd.f32 %v2308, %v1151
    %v2325 = vadd.f32 %v2309, %v1152
    %v2326 = vadd.f32 %v2310, %v1153
    %v2327 = vadd.f32 %v2311, %v1154
    %v2328 = vadd.f32 %v2312, %v1155
    %v2329 = vadd.f32 %v2313, %v1156
    %v2330 = vadd.f32 %v2314, %v1157
    %v2331 = vadd.f32 %v2315, %v1158
    %v2332 = vadd.f32 %v2316, %v1159
    %v2333 = vadd.f32 %v2317, %v1160
    %v2334 = vrot.slane %v1049, 3
    %v2335 = vrot.slane %v1050, 3
    %v2336 = vrot.slane %v1051, 3
    %v2337 = vrot.slane %v1052, 3
    %v2338 = vrot.slane %v1053, 3
    %v2339 = vrot.slane %v1054, 3
    %v2340 = vrot.slane %v1055, 3
    %v2341 = vrot.slane %v1056, 3
    %v2342 = vrot.slane %v1057, 3
    %v2343 = vrot.slane %v1058, 3
    %v2344 = vrot.slane %v1059, 3
    %v2345 = vrot.slane %v1060, 3
    %v2346 = vrot.slane %v1061, 3
    %v2347 = vrot.slane %v1062, 3
    %v2348 = vrot.slane %v1063, 3
    %v2349 = vrot.slane %v1064, 3
    %v2366 = vadd.f32 %v2318, %v2334
    %v2367 = vadd.f32 %v2319, %v2335
    %v2368 = vadd.f32 %v2320, %v2336
    %v2369 = vadd.f32 %v2321, %v2337
    %v2370 = vadd.f32 %v2322, %v2338
    %v2371 = vadd.f32 %v2323, %v2339
    %v2372 = vadd.f32 %v2324, %v2340
    %v2373 = vadd.f32 %v2325, %v2341
    %v2374 = vadd.f32 %v2326, %v2342
    %v2375 = vadd.f32 %v2327, %v2343
    %v2376 = vadd.f32 %v2328, %v2344
    %v2377 = vadd.f32 %v2329, %v2345
    %v2378 = vadd.f32 %v2330, %v2346
    %v2379 = vadd.f32 %v2331, %v2347
    %v2380 = vadd.f32 %v2332, %v2348
    %v2381 = vadd.f32 %v2333, %v2349
    %v2382 = vrot.slane %v1049, 4
    %v2383 = vrot.slane %v1050, 4
    %v2384 = vrot.slane %v1051, 4
    %v2385 = vrot.slane %v1052, 4
    %v2386 = vrot.slane %v1053, 4
    %v2387 = vrot.slane %v1054, 4
    %v2388 = vrot.slane %v1055, 4
    %v2389 = vrot.slane %v1056, 4
    %v2390 = vrot.slane %v1057, 4
    %v2391 = vrot.slane %v1058, 4
    %v2392 = vrot.slane %v1059, 4
    %v2393 = vrot.slane %v1060, 4
    %v2394 = vrot.slane %v1061, 4
    %v2395 = vrot.slane %v1062, 4
    %v2396 = vrot.slane %v1063, 4
    %v2397 = vrot.slane %v1064, 4
    %v2414 = vadd.f32 %v2366, %v2382
    %v2415 = vadd.f32 %v2367, %v2383
    %v2416 = vadd.f32 %v2368, %v2384
    %v2417 = vadd.f32 %v2369, %v2385
    %v2418 = vadd.f32 %v2370, %v2386
    %v2419 = vadd.f32 %v2371, %v2387
    %v2420 = vadd.f32 %v2372, %v2388
    %v2421 = vadd.f32 %v2373, %v2389
    %v2422 = vadd.f32 %v2374, %v2390
    %v2423 = vadd.f32 %v2375, %v2391
    %v2424 = vadd.f32 %v2376, %v2392
    %v2425 = vadd.f32 %v2377, %v2393
    %v2426 = vadd.f32 %v2378, %v2394
    %v2427 = vadd.f32 %v2379, %v2395
    %v2428 = vadd.f32 %v2380, %v2396
    %v2429 = vadd.f32 %v2381, %v2397
    %v2430 = vadd.f32 %v2414, %v1289
    %v2431 = vadd.f32 %v2415, %v1290
    %v2432 = vadd.f32 %v2416, %v1291
    %v2433 = vadd.f32 %v2417, %v1292
    %v2434 = vadd.f32 %v2418, %v1293
    %v2435 = vadd.f32 %v2419, %v1294
    %v2436 = vadd.f32 %v2420, %v1295
    %v2437 = vadd.f32 %v2421, %v1296
    %v2438 = vadd.f32 %v2422, %v1297
    %v2439 = vadd.f32 %v2423, %v1298
    %v2440 = vadd.f32 %v2424, %v1299
    %v2441 = vadd.f32 %v2425, %v1300
    %v2442 = vadd.f32 %v2426, %v1301
    %v2443 = vadd.f32 %v2427, %v1302
    %v2444 = vadd.f32 %v2428, %v1303
    %v2445 = vadd.f32 %v2429, %v1304
    %v2446 = vadd.f32 %v2430, %v1049
    %v2447 = vadd.f32 %v2431, %v1050
    %v2448 = vadd.f32 %v2432, %v1051
    %v2449 = vadd.f32 %v2433, %v1052
    %v2450 = vadd.f32 %v2434, %v1053
    %v2451 = vadd.f32 %v2435, %v1054
    %v2452 = vadd.f32 %v2436, %v1055
    %v2453 = vadd.f32 %v2437, %v1056
    %v2454 = vadd.f32 %v2438, %v1057
    %v2455 = vadd.f32 %v2439, %v1058
    %v2456 = vadd.f32 %v2440, %v1059
    %v2457 = vadd.f32 %v2441, %v1060
    %v2458 = vadd.f32 %v2442, %v1061
    %v2459 = vadd.f32 %v2443, %v1062
    %v2460 = vadd.f32 %v2444, %v1063
    %v2461 = vadd.f32 %v2445, %v1064
    %v2462 = vadd.f32 %v2446, %v1097
    %v2463 = vadd.f32 %v2447, %v1098
    %v2464 = vadd.f32 %v2448, %v1099
    %v2465 = vadd.f32 %v2449, %v1100
    %v2466 = vadd.f32 %v2450, %v1101
    %v2467 = vadd.f32 %v2451, %v1102
    %v2468 = vadd.f32 %v2452, %v1103
    %v2469 = vadd.f32 %v2453, %v1104
    %v2470 = vadd.f32 %v2454, %v1105
    %v2471 = vadd.f32 %v2455, %v1106
    %v2472 = vadd.f32 %v2456, %v1107
    %v2473 = vadd.f32 %v2457, %v1108
    %v2474 = vadd.f32 %v2458, %v1109
    %v2475 = vadd.f32 %v2459, %v1110
    %v2476 = vadd.f32 %v2460, %v1111
    %v2477 = vadd.f32 %v2461, %v1112
    %v2478 = vrot.slane %v1337, 2
    %v2479 = vrot.slane %v1338, 2
    %v2480 = vrot.slane %v1339, 2
    %v2481 = vrot.slane %v1340, 2
    %v2482 = vrot.slane %v1341, 2
    %v2483 = vrot.slane %v1342, 2
    %v2484 = vrot.slane %v1343, 2
    %v2485 = vrot.slane %v1344, 2
    %v2486 = vrot.slane %v1345, 2
    %v2487 = vrot.slane %v1346, 2
    %v2488 = vrot.slane %v1347, 2
    %v2489 = vrot.slane %v1348, 2
    %v2490 = vrot.slane %v1349, 2
    %v2491 = vrot.slane %v1350, 2
    %v2492 = vrot.slane %v1351, 2
    %v2493 = vrot.slane %v1352, 2
    %v2510 = vadd.f32 %v2462, %v2478
    %v2511 = vadd.f32 %v2463, %v2479
    %v2512 = vadd.f32 %v2464, %v2480
    %v2513 = vadd.f32 %v2465, %v2481
    %v2514 = vadd.f32 %v2466, %v2482
    %v2515 = vadd.f32 %v2467, %v2483
    %v2516 = vadd.f32 %v2468, %v2484
    %v2517 = vadd.f32 %v2469, %v2485
    %v2518 = vadd.f32 %v2470, %v2486
    %v2519 = vadd.f32 %v2471, %v2487
    %v2520 = vadd.f32 %v2472, %v2488
    %v2521 = vadd.f32 %v2473, %v2489
    %v2522 = vadd.f32 %v2474, %v2490
    %v2523 = vadd.f32 %v2475, %v2491
    %v2524 = vadd.f32 %v2476, %v2492
    %v2525 = vadd.f32 %v2477, %v2493
    %v2526 = vrot.slane %v1337, 3
    %v2527 = vrot.slane %v1338, 3
    %v2528 = vrot.slane %v1339, 3
    %v2529 = vrot.slane %v1340, 3
    %v2530 = vrot.slane %v1341, 3
    %v2531 = vrot.slane %v1342, 3
    %v2532 = vrot.slane %v1343, 3
    %v2533 = vrot.slane %v1344, 3
    %v2534 = vrot.slane %v1345, 3
    %v2535 = vrot.slane %v1346, 3
    %v2536 = vrot.slane %v1347, 3
    %v2537 = vrot.slane %v1348, 3
    %v2538 = vrot.slane %v1349, 3
    %v2539 = vrot.slane %v1350, 3
    %v2540 = vrot.slane %v1351, 3
    %v2541 = vrot.slane %v1352, 3
    %v2558 = vadd.f32 %v2510, %v2526
    %v2559 = vadd.f32 %v2511, %v2527
    %v2560 = vadd.f32 %v2512, %v2528
    %v2561 = vadd.f32 %v2513, %v2529
    %v2562 = vadd.f32 %v2514, %v2530
    %v2563 = vadd.f32 %v2515, %v2531
    %v2564 = vadd.f32 %v2516, %v2532
    %v2565 = vadd.f32 %v2517, %v2533
    %v2566 = vadd.f32 %v2518, %v2534
    %v2567 = vadd.f32 %v2519, %v2535
    %v2568 = vadd.f32 %v2520, %v2536
    %v2569 = vadd.f32 %v2521, %v2537
    %v2570 = vadd.f32 %v2522, %v2538
    %v2571 = vadd.f32 %v2523, %v2539
    %v2572 = vadd.f32 %v2524, %v2540
    %v2573 = vadd.f32 %v2525, %v2541
    %v2574 = vadd.f32 %v2558, %v1529
    %v2575 = vadd.f32 %v2559, %v1530
    %v2576 = vadd.f32 %v2560, %v1531
    %v2577 = vadd.f32 %v2561, %v1532
    %v2578 = vadd.f32 %v2562, %v1533
    %v2579 = vadd.f32 %v2563, %v1534
    %v2580 = vadd.f32 %v2564, %v1535
    %v2581 = vadd.f32 %v2565, %v1536
    %v2582 = vadd.f32 %v2566, %v1537
    %v2583 = vadd.f32 %v2567, %v1538
    %v2584 = vadd.f32 %v2568, %v1539
    %v2585 = vadd.f32 %v2569, %v1540
    %v2586 = vadd.f32 %v2570, %v1541
    %v2587 = vadd.f32 %v2571, %v1542
    %v2588 = vadd.f32 %v2572, %v1543
    %v2589 = vadd.f32 %v2573, %v1544
    %v2590 = vadd.f32 %v2574, %v1577
    %v2591 = vadd.f32 %v2575, %v1578
    %v2592 = vadd.f32 %v2576, %v1579
    %v2593 = vadd.f32 %v2577, %v1580
    %v2594 = vadd.f32 %v2578, %v1581
    %v2595 = vadd.f32 %v2579, %v1582
    %v2596 = vadd.f32 %v2580, %v1583
    %v2597 = vadd.f32 %v2581, %v1584
    %v2598 = vadd.f32 %v2582, %v1585
    %v2599 = vadd.f32 %v2583, %v1586
    %v2600 = vadd.f32 %v2584, %v1587
    %v2601 = vadd.f32 %v2585, %v1588
    %v2602 = vadd.f32 %v2586, %v1589
    %v2603 = vadd.f32 %v2587, %v1590
    %v2604 = vadd.f32 %v2588, %v1591
    %v2605 = vadd.f32 %v2589, %v1592
    %v2606 = vadd.f32 %v2590, %v1337
    %v2607 = vadd.f32 %v2591, %v1338
    %v2608 = vadd.f32 %v2592, %v1339
    %v2609 = vadd.f32 %v2593, %v1340
    %v2610 = vadd.f32 %v2594, %v1341
    %v2611 = vadd.f32 %v2595, %v1342
    %v2612 = vadd.f32 %v2596, %v1343
    %v2613 = vadd.f32 %v2597, %v1344
    %v2614 = vadd.f32 %v2598, %v1345
    %v2615 = vadd.f32 %v2599, %v1346
    %v2616 = vadd.f32 %v2600, %v1347
    %v2617 = vadd.f32 %v2601, %v1348
    %v2618 = vadd.f32 %v2602, %v1349
    %v2619 = vadd.f32 %v2603, %v1350
    %v2620 = vadd.f32 %v2604, %v1351
    %v2621 = vadd.f32 %v2605, %v1352
    %v2622 = vadd.f32 %v2606, %v1385
    %v2623 = vadd.f32 %v2607, %v1386
    %v2624 = vadd.f32 %v2608, %v1387
    %v2625 = vadd.f32 %v2609, %v1388
    %v2626 = vadd.f32 %v2610, %v1389
    %v2627 = vadd.f32 %v2611, %v1390
    %v2628 = vadd.f32 %v2612, %v1391
    %v2629 = vadd.f32 %v2613, %v1392
    %v2630 = vadd.f32 %v2614, %v1393
    %v2631 = vadd.f32 %v2615, %v1394
    %v2632 = vadd.f32 %v2616, %v1395
    %v2633 = vadd.f32 %v2617, %v1396
    %v2634 = vadd.f32 %v2618, %v1397
    %v2635 = vadd.f32 %v2619, %v1398
    %v2636 = vadd.f32 %v2620, %v1399
    %v2637 = vadd.f32 %v2621, %v1400
    %v2638 = vrot.slane %v1625, 2
    %v2639 = vrot.slane %v1626, 2
    %v2640 = vrot.slane %v1627, 2
    %v2641 = vrot.slane %v1628, 2
    %v2642 = vrot.slane %v1629, 2
    %v2643 = vrot.slane %v1630, 2
    %v2644 = vrot.slane %v1631, 2
    %v2645 = vrot.slane %v1632, 2
    %v2646 = vrot.slane %v1633, 2
    %v2647 = vrot.slane %v1634, 2
    %v2648 = vrot.slane %v1635, 2
    %v2649 = vrot.slane %v1636, 2
    %v2650 = vrot.slane %v1637, 2
    %v2651 = vrot.slane %v1638, 2
    %v2652 = vrot.slane %v1639, 2
    %v2653 = vrot.slane %v1640, 2
    %v2670 = vadd.f32 %v2622, %v2638
    %v2671 = vadd.f32 %v2623, %v2639
    %v2672 = vadd.f32 %v2624, %v2640
    %v2673 = vadd.f32 %v2625, %v2641
    %v2674 = vadd.f32 %v2626, %v2642
    %v2675 = vadd.f32 %v2627, %v2643
    %v2676 = vadd.f32 %v2628, %v2644
    %v2677 = vadd.f32 %v2629, %v2645
    %v2678 = vadd.f32 %v2630, %v2646
    %v2679 = vadd.f32 %v2631, %v2647
    %v2680 = vadd.f32 %v2632, %v2648
    %v2681 = vadd.f32 %v2633, %v2649
    %v2682 = vadd.f32 %v2634, %v2650
    %v2683 = vadd.f32 %v2635, %v2651
    %v2684 = vadd.f32 %v2636, %v2652
    %v2685 = vadd.f32 %v2637, %v2653
    %v2686 = vrot.slane %v1625, 5
    %v2687 = vrot.slane %v1626, 5
    %v2688 = vrot.slane %v1627, 5
    %v2689 = vrot.slane %v1628, 5
    %v2690 = vrot.slane %v1629, 5
    %v2691 = vrot.slane %v1630, 5
    %v2692 = vrot.slane %v1631, 5
    %v2693 = vrot.slane %v1632, 5
    %v2694 = vrot.slane %v1633, 5
    %v2695 = vrot.slane %v1634, 5
    %v2696 = vrot.slane %v1635, 5
    %v2697 = vrot.slane %v1636, 5
    %v2698 = vrot.slane %v1637, 5
    %v2699 = vrot.slane %v1638, 5
    %v2700 = vrot.slane %v1639, 5
    %v2701 = vrot.slane %v1640, 5
    %v2718 = vadd.f32 %v2670, %v2686
    %v2719 = vadd.f32 %v2671, %v2687
    %v2720 = vadd.f32 %v2672, %v2688
    %v2721 = vadd.f32 %v2673, %v2689
    %v2722 = vadd.f32 %v2674, %v2690
    %v2723 = vadd.f32 %v2675, %v2691
    %v2724 = vadd.f32 %v2676, %v2692
    %v2725 = vadd.f32 %v2677, %v2693
    %v2726 = vadd.f32 %v2678, %v2694
    %v2727 = vadd.f32 %v2679, %v2695
    %v2728 = vadd.f32 %v2680, %v2696
    %v2729 = vadd.f32 %v2681, %v2697
    %v2730 = vadd.f32 %v2682, %v2698
    %v2731 = vadd.f32 %v2683, %v2699
    %v2732 = vadd.f32 %v2684, %v2700
    %v2733 = vadd.f32 %v2685, %v2701
    %v2734 = vadd.f32 %v2718, %v2076
    %v2735 = vadd.f32 %v2719, %v2077
    %v2736 = vadd.f32 %v2720, %v2078
    %v2737 = vadd.f32 %v2721, %v2079
    %v2738 = vadd.f32 %v2722, %v2080
    %v2739 = vadd.f32 %v2723, %v2081
    %v2740 = vadd.f32 %v2724, %v2082
    %v2741 = vadd.f32 %v2725, %v2083
    %v2742 = vadd.f32 %v2726, %v2084
    %v2743 = vadd.f32 %v2727, %v2085
    %v2744 = vadd.f32 %v2728, %v2086
    %v2745 = vadd.f32 %v2729, %v2087
    %v2746 = vadd.f32 %v2730, %v2088
    %v2747 = vadd.f32 %v2731, %v2089
    %v2748 = vadd.f32 %v2732, %v2090
    %v2749 = vadd.f32 %v2733, %v2091
    %v2750 = vadd.f32 %v2734, %v2124
    %v2751 = vadd.f32 %v2735, %v2125
    %v2752 = vadd.f32 %v2736, %v2126
    %v2753 = vadd.f32 %v2737, %v2127
    %v2754 = vadd.f32 %v2738, %v2128
    %v2755 = vadd.f32 %v2739, %v2129
    %v2756 = vadd.f32 %v2740, %v2130
    %v2757 = vadd.f32 %v2741, %v2131
    %v2758 = vadd.f32 %v2742, %v2132
    %v2759 = vadd.f32 %v2743, %v2133
    %v2760 = vadd.f32 %v2744, %v2134
    %v2761 = vadd.f32 %v2745, %v2135
    %v2762 = vadd.f32 %v2746, %v2136
    %v2763 = vadd.f32 %v2747, %v2137
    %v2764 = vadd.f32 %v2748, %v2138
    %v2765 = vadd.f32 %v2749, %v2139
    %v2766 = vadd.f32 %v2750, %v1625
    %v2767 = vadd.f32 %v2751, %v1626
    %v2768 = vadd.f32 %v2752, %v1627
    %v2769 = vadd.f32 %v2753, %v1628
    %v2770 = vadd.f32 %v2754, %v1629
    %v2771 = vadd.f32 %v2755, %v1630
    %v2772 = vadd.f32 %v2756, %v1631
    %v2773 = vadd.f32 %v2757, %v1632
    %v2774 = vadd.f32 %v2758, %v1633
    %v2775 = vadd.f32 %v2759, %v1634
    %v2776 = vadd.f32 %v2760, %v1635
    %v2777 = vadd.f32 %v2761, %v1636
    %v2778 = vadd.f32 %v2762, %v1637
    %v2779 = vadd.f32 %v2763, %v1638
    %v2780 = vadd.f32 %v2764, %v1639
    %v2781 = vadd.f32 %v2765, %v1640
    %v2782 = vrot.slane %v1625, 1
    %v2783 = vrot.slane %v1626, 1
    %v2784 = vrot.slane %v1627, 1
    %v2785 = vrot.slane %v1628, 1
    %v2786 = vrot.slane %v1629, 1
    %v2787 = vrot.slane %v1630, 1
    %v2788 = vrot.slane %v1631, 1
    %v2789 = vrot.slane %v1632, 1
    %v2790 = vrot.slane %v1633, 1
    %v2791 = vrot.slane %v1634, 1
    %v2792 = vrot.slane %v1635, 1
    %v2793 = vrot.slane %v1636, 1
    %v2794 = vrot.slane %v1637, 1
    %v2795 = vrot.slane %v1638, 1
    %v2796 = vrot.slane %v1639, 1
    %v2797 = vrot.slane %v1640, 1
    %v2814 = vadd.f32 %v2766, %v2782
    %v2815 = vadd.f32 %v2767, %v2783
    %v2816 = vadd.f32 %v2768, %v2784
    %v2817 = vadd.f32 %v2769, %v2785
    %v2818 = vadd.f32 %v2770, %v2786
    %v2819 = vadd.f32 %v2771, %v2787
    %v2820 = vadd.f32 %v2772, %v2788
    %v2821 = vadd.f32 %v2773, %v2789
    %v2822 = vadd.f32 %v2774, %v2790
    %v2823 = vadd.f32 %v2775, %v2791
    %v2824 = vadd.f32 %v2776, %v2792
    %v2825 = vadd.f32 %v2777, %v2793
    %v2826 = vadd.f32 %v2778, %v2794
    %v2827 = vadd.f32 %v2779, %v2795
    %v2828 = vadd.f32 %v2780, %v2796
    %v2829 = vadd.f32 %v2781, %v2797
    %v2830 = vunpack.c.l.bf16 %v382
    %v2831 = vunpack.c.l.bf16 %v389
    %v2832 = vunpack.c.l.bf16 %v396
    %v2833 = vunpack.c.l.bf16 %v403
    %v2834 = vunpack.c.l.bf16 %v410
    %v2835 = vunpack.c.l.bf16 %v417
    %v2836 = vunpack.c.l.bf16 %v424
    %v2837 = vunpack.c.l.bf16 %v431
    %v2838 = vunpack.c.l.bf16 %v438
    %v2839 = vunpack.c.l.bf16 %v445
    %v2840 = vunpack.c.l.bf16 %v452
    %v2841 = vunpack.c.l.bf16 %v459
    %v2842 = vunpack.c.l.bf16 %v466
    %v2843 = vunpack.c.l.bf16 %v473
    %v2844 = vunpack.c.l.bf16 %v480
    %v2845 = vunpack.c.l.bf16 %v487
    %v2862 = vrot.slane %v2830, 4
    %v2863 = vrot.slane %v2831, 4
    %v2864 = vrot.slane %v2832, 4
    %v2865 = vrot.slane %v2833, 4
    %v2866 = vrot.slane %v2834, 4
    %v2867 = vrot.slane %v2835, 4
    %v2868 = vrot.slane %v2836, 4
    %v2869 = vrot.slane %v2837, 4
    %v2870 = vrot.slane %v2838, 4
    %v2871 = vrot.slane %v2839, 4
    %v2872 = vrot.slane %v2840, 4
    %v2873 = vrot.slane %v2841, 4
    %v2874 = vrot.slane %v2842, 4
    %v2875 = vrot.slane %v2843, 4
    %v2876 = vrot.slane %v2844, 4
    %v2877 = vrot.slane %v2845, 4
    %v2894 = vadd.f32 %v2814, %v2862
    %v2895 = vadd.f32 %v2815, %v2863
    %v2896 = vadd.f32 %v2816, %v2864
    %v2897 = vadd.f32 %v2817, %v2865
    %v2898 = vadd.f32 %v2818, %v2866
    %v2899 = vadd.f32 %v2819, %v2867
    %v2900 = vadd.f32 %v2820, %v2868
    %v2901 = vadd.f32 %v2821, %v2869
    %v2902 = vadd.f32 %v2822, %v2870
    %v2903 = vadd.f32 %v2823, %v2871
    %v2904 = vadd.f32 %v2824, %v2872
    %v2905 = vadd.f32 %v2825, %v2873
    %v2906 = vadd.f32 %v2826, %v2874
    %v2907 = vadd.f32 %v2827, %v2875
    %v2908 = vadd.f32 %v2828, %v2876
    %v2909 = vadd.f32 %v2829, %v2877
    %v2910 = vrot.slane %v2830, 5
    %v2911 = vrot.slane %v2831, 5
    %v2912 = vrot.slane %v2832, 5
    %v2913 = vrot.slane %v2833, 5
    %v2914 = vrot.slane %v2834, 5
    %v2915 = vrot.slane %v2835, 5
    %v2916 = vrot.slane %v2836, 5
    %v2917 = vrot.slane %v2837, 5
    %v2918 = vrot.slane %v2838, 5
    %v2919 = vrot.slane %v2839, 5
    %v2920 = vrot.slane %v2840, 5
    %v2921 = vrot.slane %v2841, 5
    %v2922 = vrot.slane %v2842, 5
    %v2923 = vrot.slane %v2843, 5
    %v2924 = vrot.slane %v2844, 5
    %v2925 = vrot.slane %v2845, 5
    %v2942 = vadd.f32 %v2894, %v2910
    %v2943 = vadd.f32 %v2895, %v2911
    %v2944 = vadd.f32 %v2896, %v2912
    %v2945 = vadd.f32 %v2897, %v2913
    %v2946 = vadd.f32 %v2898, %v2914
    %v2947 = vadd.f32 %v2899, %v2915
    %v2948 = vadd.f32 %v2900, %v2916
    %v2949 = vadd.f32 %v2901, %v2917
    %v2950 = vadd.f32 %v2902, %v2918
    %v2951 = vadd.f32 %v2903, %v2919
    %v2952 = vadd.f32 %v2904, %v2920
    %v2953 = vadd.f32 %v2905, %v2921
    %v2954 = vadd.f32 %v2906, %v2922
    %v2955 = vadd.f32 %v2907, %v2923
    %v2956 = vadd.f32 %v2908, %v2924
    %v2957 = vadd.f32 %v2909, %v2925
    %v2958 = vrot.slane %v2830, 6
    %v2959 = vrot.slane %v2831, 6
    %v2960 = vrot.slane %v2832, 6
    %v2961 = vrot.slane %v2833, 6
    %v2962 = vrot.slane %v2834, 6
    %v2963 = vrot.slane %v2835, 6
    %v2964 = vrot.slane %v2836, 6
    %v2965 = vrot.slane %v2837, 6
    %v2966 = vrot.slane %v2838, 6
    %v2967 = vrot.slane %v2839, 6
    %v2968 = vrot.slane %v2840, 6
    %v2969 = vrot.slane %v2841, 6
    %v2970 = vrot.slane %v2842, 6
    %v2971 = vrot.slane %v2843, 6
    %v2972 = vrot.slane %v2844, 6
    %v2973 = vrot.slane %v2845, 6
    %v2990 = vadd.f32 %v2942, %v2958
    %v2991 = vadd.f32 %v2943, %v2959
    %v2992 = vadd.f32 %v2944, %v2960
    %v2993 = vadd.f32 %v2945, %v2961
    %v2994 = vadd.f32 %v2946, %v2962
    %v2995 = vadd.f32 %v2947, %v2963
    %v2996 = vadd.f32 %v2948, %v2964
    %v2997 = vadd.f32 %v2949, %v2965
    %v2998 = vadd.f32 %v2950, %v2966
    %v2999 = vadd.f32 %v2951, %v2967
    %v3000 = vadd.f32 %v2952, %v2968
    %v3001 = vadd.f32 %v2953, %v2969
    %v3002 = vadd.f32 %v2954, %v2970
    %v3003 = vadd.f32 %v2955, %v2971
    %v3004 = vadd.f32 %v2956, %v2972
    %v3005 = vadd.f32 %v2957, %v2973
    %v3006 = vrot.slane %v2830, 7
    %v3007 = vrot.slane %v2831, 7
    %v3008 = vrot.slane %v2832, 7
    %v3009 = vrot.slane %v2833, 7
    %v3010 = vrot.slane %v2834, 7
    %v3011 = vrot.slane %v2835, 7
    %v3012 = vrot.slane %v2836, 7
    %v3013 = vrot.slane %v2837, 7
    %v3014 = vrot.slane %v2838, 7
    %v3015 = vrot.slane %v2839, 7
    %v3016 = vrot.slane %v2840, 7
    %v3017 = vrot.slane %v2841, 7
    %v3018 = vrot.slane %v2842, 7
    %v3019 = vrot.slane %v2843, 7
    %v3020 = vrot.slane %v2844, 7
    %v3021 = vrot.slane %v2845, 7
    %v3038 = vadd.f32 %v2990, %v3006
    %v3039 = vadd.f32 %v2991, %v3007
    %v3040 = vadd.f32 %v2992, %v3008
    %v3041 = vadd.f32 %v2993, %v3009
    %v3042 = vadd.f32 %v2994, %v3010
    %v3043 = vadd.f32 %v2995, %v3011
    %v3044 = vadd.f32 %v2996, %v3012
    %v3045 = vadd.f32 %v2997, %v3013
    %v3046 = vadd.f32 %v2998, %v3014
    %v3047 = vadd.f32 %v2999, %v3015
    %v3048 = vadd.f32 %v3000, %v3016
    %v3049 = vadd.f32 %v3001, %v3017
    %v3050 = vadd.f32 %v3002, %v3018
    %v3051 = vadd.f32 %v3003, %v3019
    %v3052 = vadd.f32 %v3004, %v3020
    %v3053 = vadd.f32 %v3005, %v3021
    %v3054 = vadd.f32 %v3038, %v2830
    %v3055 = vadd.f32 %v3039, %v2831
    %v3056 = vadd.f32 %v3040, %v2832
    %v3057 = vadd.f32 %v3041, %v2833
    %v3058 = vadd.f32 %v3042, %v2834
    %v3059 = vadd.f32 %v3043, %v2835
    %v3060 = vadd.f32 %v3044, %v2836
    %v3061 = vadd.f32 %v3045, %v2837
    %v3062 = vadd.f32 %v3046, %v2838
    %v3063 = vadd.f32 %v3047, %v2839
    %v3064 = vadd.f32 %v3048, %v2840
    %v3065 = vadd.f32 %v3049, %v2841
    %v3066 = vadd.f32 %v3050, %v2842
    %v3067 = vadd.f32 %v3051, %v2843
    %v3068 = vadd.f32 %v3052, %v2844
    %v3069 = vadd.f32 %v3053, %v2845
    %v3070 = vmul.f32 %v3054, 0.04
    %v3071 = vmul.f32 %v3055, 0.04
    %v3072 = vmul.f32 %v3056, 0.04
    %v3073 = vmul.f32 %v3057, 0.04
    %v3074 = vmul.f32 %v3058, 0.04
    %v3075 = vmul.f32 %v3059, 0.04
    %v3076 = vmul.f32 %v3060, 0.04
    %v3077 = vmul.f32 %v3061, 0.04
    %v3078 = vmul.f32 %v3062, 0.04
    %v3079 = vmul.f32 %v3063, 0.04
    %v3080 = vmul.f32 %v3064, 0.04
    %v3081 = vmul.f32 %v3065, 0.04
    %v3082 = vmul.f32 %v3066, 0.04
    %v3083 = vmul.f32 %v3067, 0.04
    %v3084 = vmul.f32 %v3068, 0.04
    %v3085 = vmul.f32 %v3069, 0.04
    %v3086 = vpack.c.bf16 %v3070, %v3070
    %v3087 = vpack.c.bf16 %v3071, %v3071
    %v3088 = vpack.c.bf16 %v3072, %v3072
    %v3089 = vpack.c.bf16 %v3073, %v3073
    %v3090 = vpack.c.bf16 %v3074, %v3074
    %v3091 = vpack.c.bf16 %v3075, %v3075
    %v3092 = vpack.c.bf16 %v3076, %v3076
    %v3093 = vpack.c.bf16 %v3077, %v3077
    %v3094 = vpack.c.bf16 %v3078, %v3078
    %v3095 = vpack.c.bf16 %v3079, %v3079
    %v3096 = vpack.c.bf16 %v3080, %v3080
    %v3097 = vpack.c.bf16 %v3081, %v3081
    %v3098 = vpack.c.bf16 %v3082, %v3082
    %v3099 = vpack.c.bf16 %v3083, %v3083
    %v3100 = vpack.c.bf16 %v3084, %v3084
    %v3101 = vpack.c.bf16 %v3085, %v3085
    %v3118 = vunpack.c.l.b16 %v3086
    %v3119 = vunpack.c.l.b16 %v3087
    %v3120 = vunpack.c.l.b16 %v3088
    %v3121 = vunpack.c.l.b16 %v3089
    %v3122 = vunpack.c.l.b16 %v3090
    %v3123 = vunpack.c.l.b16 %v3091
    %v3124 = vunpack.c.l.b16 %v3092
    %v3125 = vunpack.c.l.b16 %v3093
    %v3126 = vunpack.c.l.b16 %v3094
    %v3127 = vunpack.c.l.b16 %v3095
    %v3128 = vunpack.c.l.b16 %v3096
    %v3129 = vunpack.c.l.b16 %v3097
    %v3130 = vunpack.c.l.b16 %v3098
    %v3131 = vunpack.c.l.b16 %v3099
    %v3132 = vunpack.c.l.b16 %v3100
    %v3133 = vunpack.c.l.b16 %v3101
    %v3134 = vrot.slane %v3118, 6
    %v3135 = vrot.slane %v3119, 5
    %v3136 = vsel %vm1727, %v3135, %v3134
    %v3137 = vrot.slane %v3120, 4
    %v3138 = vsel %vm1730, %v3137, %v3136
    %v3139 = vrot.slane %v3121, 3
    %v3140 = vsel %vm1733, %v3139, %v3138
    %v3141 = vrot.slane %v3122, 2
    %v3142 = vsel %vm1736, %v3141, %v3140
    %v3143 = vrot.slane %v3123, 1
    %v3144 = vsel %vm1739, %v3143, %v3142
    %v3145 = vsel %vm1742, %v3124, %v3144
    %v3146 = vrot.slane %v3125, 7
    %v3147 = vsel %vm1745, %v3146, %v3145
    %v3148 = vrot.slane %v3126, 6
    %v3149 = vrot.slane %v3127, 5
    %v3150 = vsel %vm1727, %v3149, %v3148
    %v3151 = vrot.slane %v3128, 4
    %v3152 = vsel %vm1730, %v3151, %v3150
    %v3153 = vrot.slane %v3129, 3
    %v3154 = vsel %vm1733, %v3153, %v3152
    %v3155 = vrot.slane %v3130, 2
    %v3156 = vsel %vm1736, %v3155, %v3154
    %v3157 = vrot.slane %v3131, 1
    %v3158 = vsel %vm1739, %v3157, %v3156
    %v3159 = vsel %vm1742, %v3132, %v3158
    %v3160 = vrot.slane %v3133, 7
    %v3161 = vsel %vm1745, %v3160, %v3159
    %v3162 = vpack.c.b16 %v3161, %v3147
    %v3164 = vsel %vm1762, %v3162, 0
    %3166 = vmatpush.bf16.msra.mxu0 0
    %3167 = vmatpush.bf16.msra.mxu0 0
    %3168 = vmatpush.bf16.msra.mxu0 0
    %3169 = vmatpush.bf16.msra.mxu0 0
    %3170 = vmatpush.bf16.msra.mxu0 0
    %3171 = vmatpush.bf16.msra.mxu0 0
    %3172 = vmatpush.bf16.msra.mxu0 0
    %3173 = vmatpush.bf16.msra.mxu0 %v1768
    %3174 = vmatmul.bf16.gmra.mxu0 %v3164
    %v3175 = vpop.f32.mrf.mxu0
    %v3176 = vadd.f32 %v1692, %v3175
    %v3177 = vpop.f32.mrf.mxu0
    %v3178 = vadd.f32 %v1692, %v3177
    %3179 = vdwg.mxu0
    %v3180 = vmax.f32 %v3176, 0.0
    %v3181 = vmax.f32 %v3178, 0.0
    %v3182 = vpack.c.bf16 %v3180, %v3180
    %v3183 = vpack.c.bf16 %v3181, %v3181
    %v3184 = vadd.f32 %v1049, %v1097
    %v3185 = vadd.f32 %v1050, %v1098
    %v3186 = vadd.f32 %v1051, %v1099
    %v3187 = vadd.f32 %v1052, %v1100
    %v3188 = vadd.f32 %v1053, %v1101
    %v3189 = vadd.f32 %v1054, %v1102
    %v3190 = vadd.f32 %v1055, %v1103
    %v3191 = vadd.f32 %v1056, %v1104
    %v3192 = vadd.f32 %v1057, %v1105
    %v3193 = vadd.f32 %v1058, %v1106
    %v3194 = vadd.f32 %v1059, %v1107
    %v3195 = vadd.f32 %v1060, %v1108
    %v3196 = vadd.f32 %v1061, %v1109
    %v3197 = vadd.f32 %v1062, %v1110
    %v3198 = vadd.f32 %v1063, %v1111
    %v3199 = vadd.f32 %v1064, %v1112
    %v3200 = vadd.f32 %v3184, %v1145
    %v3201 = vadd.f32 %v3185, %v1146
    %v3202 = vadd.f32 %v3186, %v1147
    %v3203 = vadd.f32 %v3187, %v1148
    %v3204 = vadd.f32 %v3188, %v1149
    %v3205 = vadd.f32 %v3189, %v1150
    %v3206 = vadd.f32 %v3190, %v1151
    %v3207 = vadd.f32 %v3191, %v1152
    %v3208 = vadd.f32 %v3192, %v1153
    %v3209 = vadd.f32 %v3193, %v1154
    %v3210 = vadd.f32 %v3194, %v1155
    %v3211 = vadd.f32 %v3195, %v1156
    %v3212 = vadd.f32 %v3196, %v1157
    %v3213 = vadd.f32 %v3197, %v1158
    %v3214 = vadd.f32 %v3198, %v1159
    %v3215 = vadd.f32 %v3199, %v1160
    %v3216 = vadd.f32 %v3200, %v2334
    %v3217 = vadd.f32 %v3201, %v2335
    %v3218 = vadd.f32 %v3202, %v2336
    %v3219 = vadd.f32 %v3203, %v2337
    %v3220 = vadd.f32 %v3204, %v2338
    %v3221 = vadd.f32 %v3205, %v2339
    %v3222 = vadd.f32 %v3206, %v2340
    %v3223 = vadd.f32 %v3207, %v2341
    %v3224 = vadd.f32 %v3208, %v2342
    %v3225 = vadd.f32 %v3209, %v2343
    %v3226 = vadd.f32 %v3210, %v2344
    %v3227 = vadd.f32 %v3211, %v2345
    %v3228 = vadd.f32 %v3212, %v2346
    %v3229 = vadd.f32 %v3213, %v2347
    %v3230 = vadd.f32 %v3214, %v2348
    %v3231 = vadd.f32 %v3215, %v2349
    %v3232 = vadd.f32 %v3216, %v2382
    %v3233 = vadd.f32 %v3217, %v2383
    %v3234 = vadd.f32 %v3218, %v2384
    %v3235 = vadd.f32 %v3219, %v2385
    %v3236 = vadd.f32 %v3220, %v2386
    %v3237 = vadd.f32 %v3221, %v2387
    %v3238 = vadd.f32 %v3222, %v2388
    %v3239 = vadd.f32 %v3223, %v2389
    %v3240 = vadd.f32 %v3224, %v2390
    %v3241 = vadd.f32 %v3225, %v2391
    %v3242 = vadd.f32 %v3226, %v2392
    %v3243 = vadd.f32 %v3227, %v2393
    %v3244 = vadd.f32 %v3228, %v2394
    %v3245 = vadd.f32 %v3229, %v2395
    %v3246 = vadd.f32 %v3230, %v2396
    %v3247 = vadd.f32 %v3231, %v2397
    %v3248 = vadd.f32 %v3232, %v1289
    %v3249 = vadd.f32 %v3233, %v1290
    %v3250 = vadd.f32 %v3234, %v1291
    %v3251 = vadd.f32 %v3235, %v1292
    %v3252 = vadd.f32 %v3236, %v1293
    %v3253 = vadd.f32 %v3237, %v1294
    %v3254 = vadd.f32 %v3238, %v1295
    %v3255 = vadd.f32 %v3239, %v1296
    %v3256 = vadd.f32 %v3240, %v1297
    %v3257 = vadd.f32 %v3241, %v1298
    %v3258 = vadd.f32 %v3242, %v1299
    %v3259 = vadd.f32 %v3243, %v1300
    %v3260 = vadd.f32 %v3244, %v1301
    %v3261 = vadd.f32 %v3245, %v1302
    %v3262 = vadd.f32 %v3246, %v1303
    %v3263 = vadd.f32 %v3247, %v1304
    %v3264 = vadd.f32 %v3248, %v1337
    %v3265 = vadd.f32 %v3249, %v1338
    %v3266 = vadd.f32 %v3250, %v1339
    %v3267 = vadd.f32 %v3251, %v1340
    %v3268 = vadd.f32 %v3252, %v1341
    %v3269 = vadd.f32 %v3253, %v1342
    %v3270 = vadd.f32 %v3254, %v1343
    %v3271 = vadd.f32 %v3255, %v1344
    %v3272 = vadd.f32 %v3256, %v1345
    %v3273 = vadd.f32 %v3257, %v1346
    %v3274 = vadd.f32 %v3258, %v1347
    %v3275 = vadd.f32 %v3259, %v1348
    %v3276 = vadd.f32 %v3260, %v1349
    %v3277 = vadd.f32 %v3261, %v1350
    %v3278 = vadd.f32 %v3262, %v1351
    %v3279 = vadd.f32 %v3263, %v1352
    %v3280 = vadd.f32 %v3264, %v1385
    %v3281 = vadd.f32 %v3265, %v1386
    %v3282 = vadd.f32 %v3266, %v1387
    %v3283 = vadd.f32 %v3267, %v1388
    %v3284 = vadd.f32 %v3268, %v1389
    %v3285 = vadd.f32 %v3269, %v1390
    %v3286 = vadd.f32 %v3270, %v1391
    %v3287 = vadd.f32 %v3271, %v1392
    %v3288 = vadd.f32 %v3272, %v1393
    %v3289 = vadd.f32 %v3273, %v1394
    %v3290 = vadd.f32 %v3274, %v1395
    %v3291 = vadd.f32 %v3275, %v1396
    %v3292 = vadd.f32 %v3276, %v1397
    %v3293 = vadd.f32 %v3277, %v1398
    %v3294 = vadd.f32 %v3278, %v1399
    %v3295 = vadd.f32 %v3279, %v1400
    %v3296 = vadd.f32 %v3280, %v2478
    %v3297 = vadd.f32 %v3281, %v2479
    %v3298 = vadd.f32 %v3282, %v2480
    %v3299 = vadd.f32 %v3283, %v2481
    %v3300 = vadd.f32 %v3284, %v2482
    %v3301 = vadd.f32 %v3285, %v2483
    %v3302 = vadd.f32 %v3286, %v2484
    %v3303 = vadd.f32 %v3287, %v2485
    %v3304 = vadd.f32 %v3288, %v2486
    %v3305 = vadd.f32 %v3289, %v2487
    %v3306 = vadd.f32 %v3290, %v2488
    %v3307 = vadd.f32 %v3291, %v2489
    %v3308 = vadd.f32 %v3292, %v2490
    %v3309 = vadd.f32 %v3293, %v2491
    %v3310 = vadd.f32 %v3294, %v2492
    %v3311 = vadd.f32 %v3295, %v2493
    %v3312 = vadd.f32 %v3296, %v2526
    %v3313 = vadd.f32 %v3297, %v2527
    %v3314 = vadd.f32 %v3298, %v2528
    %v3315 = vadd.f32 %v3299, %v2529
    %v3316 = vadd.f32 %v3300, %v2530
    %v3317 = vadd.f32 %v3301, %v2531
    %v3318 = vadd.f32 %v3302, %v2532
    %v3319 = vadd.f32 %v3303, %v2533
    %v3320 = vadd.f32 %v3304, %v2534
    %v3321 = vadd.f32 %v3305, %v2535
    %v3322 = vadd.f32 %v3306, %v2536
    %v3323 = vadd.f32 %v3307, %v2537
    %v3324 = vadd.f32 %v3308, %v2538
    %v3325 = vadd.f32 %v3309, %v2539
    %v3326 = vadd.f32 %v3310, %v2540
    %v3327 = vadd.f32 %v3311, %v2541
    %v3328 = vadd.f32 %v3312, %v1529
    %v3329 = vadd.f32 %v3313, %v1530
    %v3330 = vadd.f32 %v3314, %v1531
    %v3331 = vadd.f32 %v3315, %v1532
    %v3332 = vadd.f32 %v3316, %v1533
    %v3333 = vadd.f32 %v3317, %v1534
    %v3334 = vadd.f32 %v3318, %v1535
    %v3335 = vadd.f32 %v3319, %v1536
    %v3336 = vadd.f32 %v3320, %v1537
    %v3337 = vadd.f32 %v3321, %v1538
    %v3338 = vadd.f32 %v3322, %v1539
    %v3339 = vadd.f32 %v3323, %v1540
    %v3340 = vadd.f32 %v3324, %v1541
    %v3341 = vadd.f32 %v3325, %v1542
    %v3342 = vadd.f32 %v3326, %v1543
    %v3343 = vadd.f32 %v3327, %v1544
    %v3344 = vadd.f32 %v3328, %v1577
    %v3345 = vadd.f32 %v3329, %v1578
    %v3346 = vadd.f32 %v3330, %v1579
    %v3347 = vadd.f32 %v3331, %v1580
    %v3348 = vadd.f32 %v3332, %v1581
    %v3349 = vadd.f32 %v3333, %v1582
    %v3350 = vadd.f32 %v3334, %v1583
    %v3351 = vadd.f32 %v3335, %v1584
    %v3352 = vadd.f32 %v3336, %v1585
    %v3353 = vadd.f32 %v3337, %v1586
    %v3354 = vadd.f32 %v3338, %v1587
    %v3355 = vadd.f32 %v3339, %v1588
    %v3356 = vadd.f32 %v3340, %v1589
    %v3357 = vadd.f32 %v3341, %v1590
    %v3358 = vadd.f32 %v3342, %v1591
    %v3359 = vadd.f32 %v3343, %v1592
    %v3360 = vadd.f32 %v3344, %v1625
    %v3361 = vadd.f32 %v3345, %v1626
    %v3362 = vadd.f32 %v3346, %v1627
    %v3363 = vadd.f32 %v3347, %v1628
    %v3364 = vadd.f32 %v3348, %v1629
    %v3365 = vadd.f32 %v3349, %v1630
    %v3366 = vadd.f32 %v3350, %v1631
    %v3367 = vadd.f32 %v3351, %v1632
    %v3368 = vadd.f32 %v3352, %v1633
    %v3369 = vadd.f32 %v3353, %v1634
    %v3370 = vadd.f32 %v3354, %v1635
    %v3371 = vadd.f32 %v3355, %v1636
    %v3372 = vadd.f32 %v3356, %v1637
    %v3373 = vadd.f32 %v3357, %v1638
    %v3374 = vadd.f32 %v3358, %v1639
    %v3375 = vadd.f32 %v3359, %v1640
    %v3376 = vadd.f32 %v3360, %v2782
    %v3377 = vadd.f32 %v3361, %v2783
    %v3378 = vadd.f32 %v3362, %v2784
    %v3379 = vadd.f32 %v3363, %v2785
    %v3380 = vadd.f32 %v3364, %v2786
    %v3381 = vadd.f32 %v3365, %v2787
    %v3382 = vadd.f32 %v3366, %v2788
    %v3383 = vadd.f32 %v3367, %v2789
    %v3384 = vadd.f32 %v3368, %v2790
    %v3385 = vadd.f32 %v3369, %v2791
    %v3386 = vadd.f32 %v3370, %v2792
    %v3387 = vadd.f32 %v3371, %v2793
    %v3388 = vadd.f32 %v3372, %v2794
    %v3389 = vadd.f32 %v3373, %v2795
    %v3390 = vadd.f32 %v3374, %v2796
    %v3391 = vadd.f32 %v3375, %v2797
    %v3392 = vadd.f32 %v3376, %v2638
    %v3393 = vadd.f32 %v3377, %v2639
    %v3394 = vadd.f32 %v3378, %v2640
    %v3395 = vadd.f32 %v3379, %v2641
    %v3396 = vadd.f32 %v3380, %v2642
    %v3397 = vadd.f32 %v3381, %v2643
    %v3398 = vadd.f32 %v3382, %v2644
    %v3399 = vadd.f32 %v3383, %v2645
    %v3400 = vadd.f32 %v3384, %v2646
    %v3401 = vadd.f32 %v3385, %v2647
    %v3402 = vadd.f32 %v3386, %v2648
    %v3403 = vadd.f32 %v3387, %v2649
    %v3404 = vadd.f32 %v3388, %v2650
    %v3405 = vadd.f32 %v3389, %v2651
    %v3406 = vadd.f32 %v3390, %v2652
    %v3407 = vadd.f32 %v3391, %v2653
    %v3408 = vadd.f32 %v3392, %v2686
    %v3409 = vadd.f32 %v3393, %v2687
    %v3410 = vadd.f32 %v3394, %v2688
    %v3411 = vadd.f32 %v3395, %v2689
    %v3412 = vadd.f32 %v3396, %v2690
    %v3413 = vadd.f32 %v3397, %v2691
    %v3414 = vadd.f32 %v3398, %v2692
    %v3415 = vadd.f32 %v3399, %v2693
    %v3416 = vadd.f32 %v3400, %v2694
    %v3417 = vadd.f32 %v3401, %v2695
    %v3418 = vadd.f32 %v3402, %v2696
    %v3419 = vadd.f32 %v3403, %v2697
    %v3420 = vadd.f32 %v3404, %v2698
    %v3421 = vadd.f32 %v3405, %v2699
    %v3422 = vadd.f32 %v3406, %v2700
    %v3423 = vadd.f32 %v3407, %v2701
    %v3424 = vadd.f32 %v3408, %v2076
    %v3425 = vadd.f32 %v3409, %v2077
    %v3426 = vadd.f32 %v3410, %v2078
    %v3427 = vadd.f32 %v3411, %v2079
    %v3428 = vadd.f32 %v3412, %v2080
    %v3429 = vadd.f32 %v3413, %v2081
    %v3430 = vadd.f32 %v3414, %v2082
    %v3431 = vadd.f32 %v3415, %v2083
    %v3432 = vadd.f32 %v3416, %v2084
    %v3433 = vadd.f32 %v3417, %v2085
    %v3434 = vadd.f32 %v3418, %v2086
    %v3435 = vadd.f32 %v3419, %v2087
    %v3436 = vadd.f32 %v3420, %v2088
    %v3437 = vadd.f32 %v3421, %v2089
    %v3438 = vadd.f32 %v3422, %v2090
    %v3439 = vadd.f32 %v3423, %v2091
    %v3440 = vadd.f32 %v3424, %v2124
    %v3441 = vadd.f32 %v3425, %v2125
    %v3442 = vadd.f32 %v3426, %v2126
    %v3443 = vadd.f32 %v3427, %v2127
    %v3444 = vadd.f32 %v3428, %v2128
    %v3445 = vadd.f32 %v3429, %v2129
    %v3446 = vadd.f32 %v3430, %v2130
    %v3447 = vadd.f32 %v3431, %v2131
    %v3448 = vadd.f32 %v3432, %v2132
    %v3449 = vadd.f32 %v3433, %v2133
    %v3450 = vadd.f32 %v3434, %v2134
    %v3451 = vadd.f32 %v3435, %v2135
    %v3452 = vadd.f32 %v3436, %v2136
    %v3453 = vadd.f32 %v3437, %v2137
    %v3454 = vadd.f32 %v3438, %v2138
    %v3455 = vadd.f32 %v3439, %v2139
    %v3456 = vadd.f32 %v3440, %v2830
    %v3457 = vadd.f32 %v3441, %v2831
    %v3458 = vadd.f32 %v3442, %v2832
    %v3459 = vadd.f32 %v3443, %v2833
    %v3460 = vadd.f32 %v3444, %v2834
    %v3461 = vadd.f32 %v3445, %v2835
    %v3462 = vadd.f32 %v3446, %v2836
    %v3463 = vadd.f32 %v3447, %v2837
    %v3464 = vadd.f32 %v3448, %v2838
    %v3465 = vadd.f32 %v3449, %v2839
    %v3466 = vadd.f32 %v3450, %v2840
    %v3467 = vadd.f32 %v3451, %v2841
    %v3468 = vadd.f32 %v3452, %v2842
    %v3469 = vadd.f32 %v3453, %v2843
    %v3470 = vadd.f32 %v3454, %v2844
    %v3471 = vadd.f32 %v3455, %v2845
    %v3472 = vrot.slane %v2830, 1
    %v3473 = vrot.slane %v2831, 1
    %v3474 = vrot.slane %v2832, 1
    %v3475 = vrot.slane %v2833, 1
    %v3476 = vrot.slane %v2834, 1
    %v3477 = vrot.slane %v2835, 1
    %v3478 = vrot.slane %v2836, 1
    %v3479 = vrot.slane %v2837, 1
    %v3480 = vrot.slane %v2838, 1
    %v3481 = vrot.slane %v2839, 1
    %v3482 = vrot.slane %v2840, 1
    %v3483 = vrot.slane %v2841, 1
    %v3484 = vrot.slane %v2842, 1
    %v3485 = vrot.slane %v2843, 1
    %v3486 = vrot.slane %v2844, 1
    %v3487 = vrot.slane %v2845, 1
    %v3504 = vadd.f32 %v3456, %v3472
    %v3505 = vadd.f32 %v3457, %v3473
    %v3506 = vadd.f32 %v3458, %v3474
    %v3507 = vadd.f32 %v3459, %v3475
    %v3508 = vadd.f32 %v3460, %v3476
    %v3509 = vadd.f32 %v3461, %v3477
    %v3510 = vadd.f32 %v3462, %v3478
    %v3511 = vadd.f32 %v3463, %v3479
    %v3512 = vadd.f32 %v3464, %v3480
    %v3513 = vadd.f32 %v3465, %v3481
    %v3514 = vadd.f32 %v3466, %v3482
    %v3515 = vadd.f32 %v3467, %v3483
    %v3516 = vadd.f32 %v3468, %v3484
    %v3517 = vadd.f32 %v3469, %v3485
    %v3518 = vadd.f32 %v3470, %v3486
    %v3519 = vadd.f32 %v3471, %v3487
    %v3520 = vadd.f32 %v3504, %v2862
    %v3521 = vadd.f32 %v3505, %v2863
    %v3522 = vadd.f32 %v3506, %v2864
    %v3523 = vadd.f32 %v3507, %v2865
    %v3524 = vadd.f32 %v3508, %v2866
    %v3525 = vadd.f32 %v3509, %v2867
    %v3526 = vadd.f32 %v3510, %v2868
    %v3527 = vadd.f32 %v3511, %v2869
    %v3528 = vadd.f32 %v3512, %v2870
    %v3529 = vadd.f32 %v3513, %v2871
    %v3530 = vadd.f32 %v3514, %v2872
    %v3531 = vadd.f32 %v3515, %v2873
    %v3532 = vadd.f32 %v3516, %v2874
    %v3533 = vadd.f32 %v3517, %v2875
    %v3534 = vadd.f32 %v3518, %v2876
    %v3535 = vadd.f32 %v3519, %v2877
    %v3536 = vadd.f32 %v3520, %v2910
    %v3537 = vadd.f32 %v3521, %v2911
    %v3538 = vadd.f32 %v3522, %v2912
    %v3539 = vadd.f32 %v3523, %v2913
    %v3540 = vadd.f32 %v3524, %v2914
    %v3541 = vadd.f32 %v3525, %v2915
    %v3542 = vadd.f32 %v3526, %v2916
    %v3543 = vadd.f32 %v3527, %v2917
    %v3544 = vadd.f32 %v3528, %v2918
    %v3545 = vadd.f32 %v3529, %v2919
    %v3546 = vadd.f32 %v3530, %v2920
    %v3547 = vadd.f32 %v3531, %v2921
    %v3548 = vadd.f32 %v3532, %v2922
    %v3549 = vadd.f32 %v3533, %v2923
    %v3550 = vadd.f32 %v3534, %v2924
    %v3551 = vadd.f32 %v3535, %v2925
    %v3552 = vadd.f32 %v3536, %v2958
    %v3553 = vadd.f32 %v3537, %v2959
    %v3554 = vadd.f32 %v3538, %v2960
    %v3555 = vadd.f32 %v3539, %v2961
    %v3556 = vadd.f32 %v3540, %v2962
    %v3557 = vadd.f32 %v3541, %v2963
    %v3558 = vadd.f32 %v3542, %v2964
    %v3559 = vadd.f32 %v3543, %v2965
    %v3560 = vadd.f32 %v3544, %v2966
    %v3561 = vadd.f32 %v3545, %v2967
    %v3562 = vadd.f32 %v3546, %v2968
    %v3563 = vadd.f32 %v3547, %v2969
    %v3564 = vadd.f32 %v3548, %v2970
    %v3565 = vadd.f32 %v3549, %v2971
    %v3566 = vadd.f32 %v3550, %v2972
    %v3567 = vadd.f32 %v3551, %v2973
    %v3568 = vadd.f32 %v3552, %v3006
    %v3569 = vadd.f32 %v3553, %v3007
    %v3570 = vadd.f32 %v3554, %v3008
    %v3571 = vadd.f32 %v3555, %v3009
    %v3572 = vadd.f32 %v3556, %v3010
    %v3573 = vadd.f32 %v3557, %v3011
    %v3574 = vadd.f32 %v3558, %v3012
    %v3575 = vadd.f32 %v3559, %v3013
    %v3576 = vadd.f32 %v3560, %v3014
    %v3577 = vadd.f32 %v3561, %v3015
    %v3578 = vadd.f32 %v3562, %v3016
    %v3579 = vadd.f32 %v3563, %v3017
    %v3580 = vadd.f32 %v3564, %v3018
    %v3581 = vadd.f32 %v3565, %v3019
    %v3582 = vadd.f32 %v3566, %v3020
    %v3583 = vadd.f32 %v3567, %v3021
    %v3584 = vunpack.c.l.bf16 %v383
    %v3585 = vunpack.c.l.bf16 %v390
    %v3586 = vunpack.c.l.bf16 %v397
    %v3587 = vunpack.c.l.bf16 %v404
    %v3588 = vunpack.c.l.bf16 %v411
    %v3589 = vunpack.c.l.bf16 %v418
    %v3590 = vunpack.c.l.bf16 %v425
    %v3591 = vunpack.c.l.bf16 %v432
    %v3592 = vunpack.c.l.bf16 %v439
    %v3593 = vunpack.c.l.bf16 %v446
    %v3594 = vunpack.c.l.bf16 %v453
    %v3595 = vunpack.c.l.bf16 %v460
    %v3596 = vunpack.c.l.bf16 %v467
    %v3597 = vunpack.c.l.bf16 %v474
    %v3598 = vunpack.c.l.bf16 %v481
    %v3599 = vunpack.c.l.bf16 %v488
    %v3600 = vadd.f32 %v3568, %v3584
    %v3601 = vadd.f32 %v3569, %v3585
    %v3602 = vadd.f32 %v3570, %v3586
    %v3603 = vadd.f32 %v3571, %v3587
    %v3604 = vadd.f32 %v3572, %v3588
    %v3605 = vadd.f32 %v3573, %v3589
    %v3606 = vadd.f32 %v3574, %v3590
    %v3607 = vadd.f32 %v3575, %v3591
    %v3608 = vadd.f32 %v3576, %v3592
    %v3609 = vadd.f32 %v3577, %v3593
    %v3610 = vadd.f32 %v3578, %v3594
    %v3611 = vadd.f32 %v3579, %v3595
    %v3612 = vadd.f32 %v3580, %v3596
    %v3613 = vadd.f32 %v3581, %v3597
    %v3614 = vadd.f32 %v3582, %v3598
    %v3615 = vadd.f32 %v3583, %v3599
    %v3616 = vmul.f32 %v3600, 0.04
    %v3617 = vmul.f32 %v3601, 0.04
    %v3618 = vmul.f32 %v3602, 0.04
    %v3619 = vmul.f32 %v3603, 0.04
    %v3620 = vmul.f32 %v3604, 0.04
    %v3621 = vmul.f32 %v3605, 0.04
    %v3622 = vmul.f32 %v3606, 0.04
    %v3623 = vmul.f32 %v3607, 0.04
    %v3624 = vmul.f32 %v3608, 0.04
    %v3625 = vmul.f32 %v3609, 0.04
    %v3626 = vmul.f32 %v3610, 0.04
    %v3627 = vmul.f32 %v3611, 0.04
    %v3628 = vmul.f32 %v3612, 0.04
    %v3629 = vmul.f32 %v3613, 0.04
    %v3630 = vmul.f32 %v3614, 0.04
    %v3631 = vmul.f32 %v3615, 0.04
    %v3632 = vpack.c.bf16 %v3616, %v3616
    %v3633 = vpack.c.bf16 %v3617, %v3617
    %v3634 = vpack.c.bf16 %v3618, %v3618
    %v3635 = vpack.c.bf16 %v3619, %v3619
    %v3636 = vpack.c.bf16 %v3620, %v3620
    %v3637 = vpack.c.bf16 %v3621, %v3621
    %v3638 = vpack.c.bf16 %v3622, %v3622
    %v3639 = vpack.c.bf16 %v3623, %v3623
    %v3640 = vpack.c.bf16 %v3624, %v3624
    %v3641 = vpack.c.bf16 %v3625, %v3625
    %v3642 = vpack.c.bf16 %v3626, %v3626
    %v3643 = vpack.c.bf16 %v3627, %v3627
    %v3644 = vpack.c.bf16 %v3628, %v3628
    %v3645 = vpack.c.bf16 %v3629, %v3629
    %v3646 = vpack.c.bf16 %v3630, %v3630
    %v3647 = vpack.c.bf16 %v3631, %v3631
    %v3664 = vunpack.c.l.b16 %v3632
    %v3665 = vunpack.c.l.b16 %v3633
    %v3666 = vunpack.c.l.b16 %v3634
    %v3667 = vunpack.c.l.b16 %v3635
    %v3668 = vunpack.c.l.b16 %v3636
    %v3669 = vunpack.c.l.b16 %v3637
    %v3670 = vunpack.c.l.b16 %v3638
    %v3671 = vunpack.c.l.b16 %v3639
    %v3672 = vunpack.c.l.b16 %v3640
    %v3673 = vunpack.c.l.b16 %v3641
    %v3674 = vunpack.c.l.b16 %v3642
    %v3675 = vunpack.c.l.b16 %v3643
    %v3676 = vunpack.c.l.b16 %v3644
    %v3677 = vunpack.c.l.b16 %v3645
    %v3678 = vunpack.c.l.b16 %v3646
    %v3679 = vunpack.c.l.b16 %v3647
    %v3680 = vrot.slane %v3665, 7
    %v3681 = vsel %vm1727, %v3680, %v3664
    %v3682 = vrot.slane %v3666, 6
    %v3683 = vsel %vm1730, %v3682, %v3681
    %v3684 = vrot.slane %v3667, 5
    %v3685 = vsel %vm1733, %v3684, %v3683
    %v3686 = vrot.slane %v3668, 4
    %v3687 = vsel %vm1736, %v3686, %v3685
    %v3688 = vrot.slane %v3669, 3
    %v3689 = vsel %vm1739, %v3688, %v3687
    %v3690 = vrot.slane %v3670, 2
    %v3691 = vsel %vm1742, %v3690, %v3689
    %v3692 = vrot.slane %v3671, 1
    %v3693 = vsel %vm1745, %v3692, %v3691
    %v3694 = vrot.slane %v3673, 7
    %v3695 = vsel %vm1727, %v3694, %v3672
    %v3696 = vrot.slane %v3674, 6
    %v3697 = vsel %vm1730, %v3696, %v3695
    %v3698 = vrot.slane %v3675, 5
    %v3699 = vsel %vm1733, %v3698, %v3697
    %v3700 = vrot.slane %v3676, 4
    %v3701 = vsel %vm1736, %v3700, %v3699
    %v3702 = vrot.slane %v3677, 3
    %v3703 = vsel %vm1739, %v3702, %v3701
    %v3704 = vrot.slane %v3678, 2
    %v3705 = vsel %vm1742, %v3704, %v3703
    %v3706 = vrot.slane %v3679, 1
    %v3707 = vsel %vm1745, %v3706, %v3705
    %v3708 = vpack.c.b16 %v3707, %v3693
    %v3710 = vsel %vm1762, %v3708, 0
    %3712 = vmatpush.bf16.msra.mxu0 0
    %3713 = vmatpush.bf16.msra.mxu0 0
    %3714 = vmatpush.bf16.msra.mxu0 0
    %3715 = vmatpush.bf16.msra.mxu0 0
    %3716 = vmatpush.bf16.msra.mxu0 0
    %3717 = vmatpush.bf16.msra.mxu0 0
    %3718 = vmatpush.bf16.msra.mxu0 0
    %3719 = vmatpush.bf16.msra.mxu0 %v1768
    %3720 = vmatmul.bf16.gmra.mxu0 %v3710
    %v3721 = vpop.f32.mrf.mxu0
    %v3722 = vadd.f32 %v1692, %v3721
    %v3723 = vpop.f32.mrf.mxu0
    %v3724 = vadd.f32 %v1692, %v3723
    %3725 = vdwg.mxu0
    %v3726 = vmax.f32 %v3722, 0.0
    %v3727 = vmax.f32 %v3724, 0.0
    %v3728 = vpack.c.bf16 %v3726, %v3726
    %v3729 = vpack.c.bf16 %v3727, %v3727
    %v3732 = vunpack.c.l.b16 %v1786
    %v3733 = vunpack.c.l.b16 %v1787
    %v3734 = vpack.c.b16 %v3733, %v3732
    %v3738 = vunpack.c.l.b16 %v2300
    %v3739 = vunpack.c.l.b16 %v2301
    %v3740 = vpack.c.b16 %v3739, %v3738
    %v3744 = vunpack.c.l.b16 %v3182
    %v3745 = vunpack.c.l.b16 %v3183
    %v3746 = vpack.c.b16 %v3745, %v3744
    %v3750 = vunpack.c.l.b16 %v3728
    %v3751 = vunpack.c.l.b16 %v3729
    %v3752 = vpack.c.b16 %v3751, %v3750
    %v3754 = vld [vmem:[#allocation2] sm:$0xff]
    %v3755 = vld [vmem:[#allocation2 + $0x8] sm:$0xff]
    %v3756 = vld [vmem:[#allocation2 + $0x10] sm:$0xff]
    %v3757 = vld [vmem:[#allocation2 + $0x18] sm:$0xff]
    %v3758 = vld [vmem:[#allocation2 + $0x20] sm:$0xff]
    %v3759 = vld [vmem:[#allocation2 + $0x28] sm:$0xff]
    %v3760 = vld [vmem:[#allocation2 + $0x30] sm:$0xff]
    %v3761 = vld [vmem:[#allocation2 + $0x38] sm:$0xff]
    %v3762 = vld [vmem:[#allocation2 + $0x40] sm:$0xff]
    %v3763 = vld [vmem:[#allocation2 + $0x48] sm:$0xff]
    %v3764 = vld [vmem:[#allocation2 + $0x50] sm:$0xff]
    %v3765 = vld [vmem:[#allocation2 + $0x58] sm:$0xff]
    %v3766 = vld [vmem:[#allocation2 + $0x60] sm:$0xff]
    %v3767 = vld [vmem:[#allocation2 + $0x68] sm:$0xff]
    %v3768 = vld [vmem:[#allocation2 + $0x70] sm:$0xff]
    %v3769 = vld [vmem:[#allocation2 + $0x78] sm:$0xff]
    %v3770 = vld [vmem:[#allocation2 + $0x80] sm:$0xff]
    %v3771 = vld [vmem:[#allocation2 + $0x88] sm:$0xff]
    %v3772 = vld [vmem:[#allocation2 + $0x90] sm:$0xff]
    %v3773 = vld [vmem:[#allocation2 + $0x98] sm:$0xff]
    %v3774 = vld [vmem:[#allocation2 + $0xa0] sm:$0xff]
    %v3775 = vld [vmem:[#allocation2 + $0xa8] sm:$0xff]
    %v3776 = vld [vmem:[#allocation2 + $0xb0] sm:$0xff]
    %v3777 = vld [vmem:[#allocation2 + $0xb8] sm:$0xff]
    %v3778 = vld [vmem:[#allocation2 + $0xc0] sm:$0xff]
    %v3779 = vld [vmem:[#allocation2 + $0xc8] sm:$0xff]
    %v3780 = vld [vmem:[#allocation2 + $0xd0] sm:$0xff]
    %v3781 = vld [vmem:[#allocation2 + $0xd8] sm:$0xff]
    %v3782 = vld [vmem:[#allocation2 + $0xe0] sm:$0xff]
    %v3783 = vld [vmem:[#allocation2 + $0xe8] sm:$0xff]
    %v3784 = vld [vmem:[#allocation2 + $0xf0] sm:$0xff]
    %v3785 = vld [vmem:[#allocation2 + $0xf8] sm:$0xff]
    %v3786 = vld [vmem:[#allocation2 + $0x100] sm:$0xff]
    %v3787 = vld [vmem:[#allocation2 + $0x108] sm:$0xff]
    %v3788 = vld [vmem:[#allocation2 + $0x110] sm:$0xff]
    %v3789 = vld [vmem:[#allocation2 + $0x118] sm:$0xff]
    %v3790 = vld [vmem:[#allocation2 + $0x120] sm:$0xff]
    %v3791 = vld [vmem:[#allocation2 + $0x128] sm:$0xff]
    %v3792 = vld [vmem:[#allocation2 + $0x130] sm:$0xff]
    %v3793 = vld [vmem:[#allocation2 + $0x138] sm:$0xff]
    %v3794 = vld [vmem:[#allocation2 + $0x140] sm:$0xff]
    %v3795 = vld [vmem:[#allocation2 + $0x148] sm:$0xff]
    %v3796 = vld [vmem:[#allocation2 + $0x150] sm:$0xff]
    %v3797 = vld [vmem:[#allocation2 + $0x158] sm:$0xff]
    %v3798 = vld [vmem:[#allocation2 + $0x160] sm:$0xff]
    %v3799 = vld [vmem:[#allocation2 + $0x168] sm:$0xff]
    %v3800 = vld [vmem:[#allocation2 + $0x170] sm:$0xff]
    %v3801 = vld [vmem:[#allocation2 + $0x178] sm:$0xff]
    %v3802 = vld [vmem:[#allocation2 + $0x180] sm:$0xff]
    %v3803 = vld [vmem:[#allocation2 + $0x188] sm:$0xff]
    %v3804 = vld [vmem:[#allocation2 + $0x190] sm:$0xff]
    %v3805 = vld [vmem:[#allocation2 + $0x198] sm:$0xff]
    %v3806 = vld [vmem:[#allocation2 + $0x1a0] sm:$0xff]
    %v3807 = vld [vmem:[#allocation2 + $0x1a8] sm:$0xff]
    %v3808 = vld [vmem:[#allocation2 + $0x1b0] sm:$0xff]
    %v3809 = vld [vmem:[#allocation2 + $0x1b8] sm:$0xff]
    %v3810 = vld [vmem:[#allocation2 + $0x1c0] sm:$0xff]
    %v3811 = vld [vmem:[#allocation2 + $0x1c8] sm:$0xff]
    %v3812 = vld [vmem:[#allocation2 + $0x1d0] sm:$0xff]
    %v3813 = vld [vmem:[#allocation2 + $0x1d8] sm:$0xff]
    %v3814 = vld [vmem:[#allocation2 + $0x1e0] sm:$0xff]
    %v3815 = vld [vmem:[#allocation2 + $0x1e8] sm:$0xff]
    %v3816 = vld [vmem:[#allocation2 + $0x1f0] sm:$0xff]
    %v3817 = vld [vmem:[#allocation2 + $0x1f8] sm:$0xff]
    %v3818 = vld [vmem:[#allocation2 + $0x200] sm:$0xff]
    %v3819 = vld [vmem:[#allocation2 + $0x208] sm:$0xff]
    %v3820 = vld [vmem:[#allocation2 + $0x210] sm:$0xff]
    %v3821 = vld [vmem:[#allocation2 + $0x218] sm:$0xff]
    %v3822 = vld [vmem:[#allocation2 + $0x220] sm:$0xff]
    %v3823 = vld [vmem:[#allocation2 + $0x228] sm:$0xff]
    %v3824 = vld [vmem:[#allocation2 + $0x230] sm:$0xff]
    %v3825 = vld [vmem:[#allocation2 + $0x238] sm:$0xff]
    %v3826 = vld [vmem:[#allocation2 + $0x240] sm:$0xff]
    %v3827 = vld [vmem:[#allocation2 + $0x248] sm:$0xff]
    %v3828 = vld [vmem:[#allocation2 + $0x250] sm:$0xff]
    %v3829 = vld [vmem:[#allocation2 + $0x258] sm:$0xff]
    %v3830 = vld [vmem:[#allocation2 + $0x260] sm:$0xff]
    %v3831 = vld [vmem:[#allocation2 + $0x268] sm:$0xff]
    %v3832 = vld [vmem:[#allocation2 + $0x270] sm:$0xff]
    %v3833 = vld [vmem:[#allocation2 + $0x278] sm:$0xff]
    %v3834 = vld [vmem:[#allocation2 + $0x280] sm:$0xff]
    %v3835 = vld [vmem:[#allocation2 + $0x288] sm:$0xff]
    %v3836 = vld [vmem:[#allocation2 + $0x290] sm:$0xff]
    %v3837 = vld [vmem:[#allocation2 + $0x298] sm:$0xff]
    %v3838 = vld [vmem:[#allocation2 + $0x2a0] sm:$0xff]
    %v3839 = vld [vmem:[#allocation2 + $0x2a8] sm:$0xff]
    %v3840 = vld [vmem:[#allocation2 + $0x2b0] sm:$0xff]
    %v3841 = vld [vmem:[#allocation2 + $0x2b8] sm:$0xff]
    %v3842 = vld [vmem:[#allocation2 + $0x2c0] sm:$0xff]
    %v3843 = vld [vmem:[#allocation2 + $0x2c8] sm:$0xff]
    %v3844 = vld [vmem:[#allocation2 + $0x2d0] sm:$0xff]
    %v3845 = vld [vmem:[#allocation2 + $0x2d8] sm:$0xff]
    %v3846 = vld [vmem:[#allocation2 + $0x2e0] sm:$0xff]
    %v3847 = vld [vmem:[#allocation2 + $0x2e8] sm:$0xff]
    %v3848 = vld [vmem:[#allocation2 + $0x2f0] sm:$0xff]
    %v3849 = vld [vmem:[#allocation2 + $0x2f8] sm:$0xff]
    %v3850 = vld [vmem:[#allocation2 + $0x300] sm:$0xff]
    %v3851 = vld [vmem:[#allocation2 + $0x308] sm:$0xff]
    %v3852 = vld [vmem:[#allocation2 + $0x310] sm:$0xff]
    %v3853 = vld [vmem:[#allocation2 + $0x318] sm:$0xff]
    %v3854 = vld [vmem:[#allocation2 + $0x320] sm:$0xff]
    %v3855 = vld [vmem:[#allocation2 + $0x328] sm:$0xff]
    %v3856 = vld [vmem:[#allocation2 + $0x330] sm:$0xff]
    %v3857 = vld [vmem:[#allocation2 + $0x338] sm:$0xff]
    %v3858 = vld [vmem:[#allocation2 + $0x340] sm:$0xff]
    %v3859 = vld [vmem:[#allocation2 + $0x348] sm:$0xff]
    %v3860 = vld [vmem:[#allocation2 + $0x350] sm:$0xff]
    %v3861 = vld [vmem:[#allocation2 + $0x358] sm:$0xff]
    %v3862 = vld [vmem:[#allocation2 + $0x360] sm:$0xff]
    %v3863 = vld [vmem:[#allocation2 + $0x368] sm:$0xff]
    %v3864 = vld [vmem:[#allocation2 + $0x370] sm:$0xff]
    %v3865 = vld [vmem:[#allocation2 + $0x378] sm:$0xff]
    %v3866 = vld [vmem:[#allocation2 + $0x380] sm:$0xff]
    %v3867 = vld [vmem:[#allocation2 + $0x388] sm:$0xff]
    %v3868 = vld [vmem:[#allocation2 + $0x390] sm:$0xff]
    %v3869 = vld [vmem:[#allocation2 + $0x398] sm:$0xff]
    %v3870 = vld [vmem:[#allocation2 + $0x3a0] sm:$0xff]
    %v3871 = vld [vmem:[#allocation2 + $0x3a8] sm:$0xff]
    %v3872 = vld [vmem:[#allocation2 + $0x3b0] sm:$0xff]
    %v3873 = vld [vmem:[#allocation2 + $0x3b8] sm:$0xff]
    %v3874 = vld [vmem:[#allocation2 + $0x3c0] sm:$0xff]
    %v3875 = vld [vmem:[#allocation2 + $0x3c8] sm:$0xff]
    %v3876 = vld [vmem:[#allocation2 + $0x3d0] sm:$0xff]
    %v3877 = vld [vmem:[#allocation2 + $0x3d8] sm:$0xff]
    %v3878 = vld [vmem:[#allocation2 + $0x3e0] sm:$0xff]
    %v3879 = vld [vmem:[#allocation2 + $0x3e8] sm:$0xff]
    %v3880 = vld [vmem:[#allocation2 + $0x3f0] sm:$0xff]
    %v3881 = vld [vmem:[#allocation2 + $0x3f8] sm:$0xff]
    %v3882 = vld [vmem:[#allocation2 + $0x400] sm:$0xff]
    %v3883 = vld [vmem:[#allocation2 + $0x408] sm:$0xff]
    %v3884 = vld [vmem:[#allocation2 + $0x410] sm:$0xff]
    %v3885 = vld [vmem:[#allocation2 + $0x418] sm:$0xff]
    %v3886 = vld [vmem:[#allocation2 + $0x420] sm:$0xff]
    %v3887 = vld [vmem:[#allocation2 + $0x428] sm:$0xff]
    %v3888 = vld [vmem:[#allocation2 + $0x430] sm:$0xff]
    %v3889 = vld [vmem:[#allocation2 + $0x438] sm:$0xff]
    %v3890 = vld [vmem:[#allocation2 + $0x440] sm:$0xff]
    %v3891 = vld [vmem:[#allocation2 + $0x448] sm:$0xff]
    %v3892 = vld [vmem:[#allocation2 + $0x450] sm:$0xff]
    %v3893 = vld [vmem:[#allocation2 + $0x458] sm:$0xff]
    %v3894 = vld [vmem:[#allocation2 + $0x460] sm:$0xff]
    %v3895 = vld [vmem:[#allocation2 + $0x468] sm:$0xff]
    %v3896 = vld [vmem:[#allocation2 + $0x470] sm:$0xff]
    %v3897 = vld [vmem:[#allocation2 + $0x478] sm:$0xff]
    %v3898 = vld [vmem:[#allocation2 + $0x480] sm:$0xff]
    %v3899 = vld [vmem:[#allocation2 + $0x488] sm:$0xff]
    %v3900 = vld [vmem:[#allocation2 + $0x490] sm:$0xff]
    %v3901 = vld [vmem:[#allocation2 + $0x498] sm:$0xff]
    %v3902 = vld [vmem:[#allocation2 + $0x4a0] sm:$0xff]
    %v3903 = vld [vmem:[#allocation2 + $0x4a8] sm:$0xff]
    %v3904 = vld [vmem:[#allocation2 + $0x4b0] sm:$0xff]
    %v3905 = vld [vmem:[#allocation2 + $0x4b8] sm:$0xff]
    %v3906 = vld [vmem:[#allocation2 + $0x4c0] sm:$0xff]
    %v3907 = vld [vmem:[#allocation2 + $0x4c8] sm:$0xff]
    %v3908 = vld [vmem:[#allocation2 + $0x4d0] sm:$0xff]
    %v3909 = vld [vmem:[#allocation2 + $0x4d8] sm:$0xff]
    %v3910 = vld [vmem:[#allocation2 + $0x4e0] sm:$0xff]
    %v3911 = vld [vmem:[#allocation2 + $0x4e8] sm:$0xff]
    %v3912 = vld [vmem:[#allocation2 + $0x4f0] sm:$0xff]
    %v3913 = vld [vmem:[#allocation2 + $0x4f8] sm:$0xff]
    %v3914 = vld [vmem:[#allocation2 + $0x500] sm:$0xff]
    %v3915 = vld [vmem:[#allocation2 + $0x508] sm:$0xff]
    %v3916 = vld [vmem:[#allocation2 + $0x510] sm:$0xff]
    %v3917 = vld [vmem:[#allocation2 + $0x518] sm:$0xff]
    %v3918 = vld [vmem:[#allocation2 + $0x520] sm:$0xff]
    %v3919 = vld [vmem:[#allocation2 + $0x528] sm:$0xff]
    %v3920 = vld [vmem:[#allocation2 + $0x530] sm:$0xff]
    %v3921 = vld [vmem:[#allocation2 + $0x538] sm:$0xff]
    %v3922 = vld [vmem:[#allocation2 + $0x540] sm:$0xff]
    %v3923 = vld [vmem:[#allocation2 + $0x548] sm:$0xff]
    %v3924 = vld [vmem:[#allocation2 + $0x550] sm:$0xff]
    %v3925 = vld [vmem:[#allocation2 + $0x558] sm:$0xff]
    %v3926 = vld [vmem:[#allocation2 + $0x560] sm:$0xff]
    %v3927 = vld [vmem:[#allocation2 + $0x568] sm:$0xff]
    %v3928 = vld [vmem:[#allocation2 + $0x570] sm:$0xff]
    %v3929 = vld [vmem:[#allocation2 + $0x578] sm:$0xff]
    %v3930 = vld [vmem:[#allocation2 + $0x580] sm:$0xff]
    %v3931 = vld [vmem:[#allocation2 + $0x588] sm:$0xff]
    %v3932 = vld [vmem:[#allocation2 + $0x590] sm:$0xff]
    %v3933 = vld [vmem:[#allocation2 + $0x598] sm:$0xff]
    %v3934 = vld [vmem:[#allocation2 + $0x5a0] sm:$0xff]
    %v3935 = vld [vmem:[#allocation2 + $0x5a8] sm:$0xff]
    %v3936 = vld [vmem:[#allocation2 + $0x5b0] sm:$0xff]
    %v3937 = vld [vmem:[#allocation2 + $0x5b8] sm:$0xff]
    %v3938 = vld [vmem:[#allocation2 + $0x5c0] sm:$0xff]
    %v3939 = vld [vmem:[#allocation2 + $0x5c8] sm:$0xff]
    %v3940 = vld [vmem:[#allocation2 + $0x5d0] sm:$0xff]
    %v3941 = vld [vmem:[#allocation2 + $0x5d8] sm:$0xff]
    %v3942 = vld [vmem:[#allocation2 + $0x5e0] sm:$0xff]
    %v3943 = vld [vmem:[#allocation2 + $0x5e8] sm:$0xff]
    %v3944 = vld [vmem:[#allocation2 + $0x5f0] sm:$0xff]
    %v3945 = vld [vmem:[#allocation2 + $0x5f8] sm:$0xff]
    %v4138 = vunpack.c.l.b16 %v3754
    %v4139 = vunpack.c.h.b16 %v3754
    %v4140 = vunpack.c.l.b16 %v3755
    %v4141 = vunpack.c.h.b16 %v3755
    %v4142 = vunpack.c.l.b16 %v3756
    %v4143 = vunpack.c.h.b16 %v3756
    %v4144 = vunpack.c.l.b16 %v3757
    %v4145 = vunpack.c.h.b16 %v3757
    %v4146 = vunpack.c.l.b16 %v3758
    %v4147 = vunpack.c.h.b16 %v3758
    %v4148 = vunpack.c.l.b16 %v3759
    %v4149 = vunpack.c.h.b16 %v3759
    %v4150 = vunpack.c.l.b16 %v3760
    %v4151 = vunpack.c.h.b16 %v3760
    %v4152 = vunpack.c.l.b16 %v3761
    %v4153 = vunpack.c.h.b16 %v3761
    %v4154 = vunpack.c.l.b16 %v3762
    %v4155 = vunpack.c.h.b16 %v3762
    %v4156 = vunpack.c.l.b16 %v3763
    %v4157 = vunpack.c.h.b16 %v3763
    %v4158 = vunpack.c.l.b16 %v3764
    %v4159 = vunpack.c.h.b16 %v3764
    %v4160 = vunpack.c.l.b16 %v3765
    %v4161 = vunpack.c.h.b16 %v3765
    %v4162 = vunpack.c.l.b16 %v3766
    %v4163 = vunpack.c.h.b16 %v3766
    %v4164 = vunpack.c.l.b16 %v3767
    %v4165 = vunpack.c.h.b16 %v3767
    %v4166 = vunpack.c.l.b16 %v3768
    %v4167 = vunpack.c.h.b16 %v3768
    %v4168 = vunpack.c.l.b16 %v3769
    %v4169 = vunpack.c.h.b16 %v3769
    %v4170 = vunpack.c.l.b16 %v3770
    %v4171 = vunpack.c.h.b16 %v3770
    %v4172 = vunpack.c.l.b16 %v3771
    %v4173 = vunpack.c.h.b16 %v3771
    %v4174 = vunpack.c.l.b16 %v3772
    %v4175 = vunpack.c.h.b16 %v3772
    %v4176 = vunpack.c.l.b16 %v3773
    %v4177 = vunpack.c.h.b16 %v3773
    %v4178 = vunpack.c.l.b16 %v3774
    %v4179 = vunpack.c.h.b16 %v3774
    %v4180 = vunpack.c.l.b16 %v3775
    %v4181 = vunpack.c.h.b16 %v3775
    %v4182 = vunpack.c.l.b16 %v3776
    %v4183 = vunpack.c.h.b16 %v3776
    %v4184 = vunpack.c.l.b16 %v3777
    %v4185 = vunpack.c.h.b16 %v3777
    %v4186 = vunpack.c.l.b16 %v3778
    %v4187 = vunpack.c.h.b16 %v3778
    %v4188 = vunpack.c.l.b16 %v3779
    %v4189 = vunpack.c.h.b16 %v3779
    %v4190 = vunpack.c.l.b16 %v3780
    %v4191 = vunpack.c.h.b16 %v3780
    %v4192 = vunpack.c.l.b16 %v3781
    %v4193 = vunpack.c.h.b16 %v3781
    %v4194 = vunpack.c.l.b16 %v3782
    %v4195 = vunpack.c.h.b16 %v3782
    %v4196 = vunpack.c.l.b16 %v3783
    %v4197 = vunpack.c.h.b16 %v3783
    %v4198 = vunpack.c.l.b16 %v3784
    %v4199 = vunpack.c.h.b16 %v3784
    %v4200 = vunpack.c.l.b16 %v3785
    %v4201 = vunpack.c.h.b16 %v3785
    %v4202 = vunpack.c.l.b16 %v3786
    %v4203 = vunpack.c.h.b16 %v3786
    %v4204 = vunpack.c.l.b16 %v3787
    %v4205 = vunpack.c.h.b16 %v3787
    %v4206 = vunpack.c.l.b16 %v3788
    %v4207 = vunpack.c.h.b16 %v3788
    %v4208 = vunpack.c.l.b16 %v3789
    %v4209 = vunpack.c.h.b16 %v3789
    %v4210 = vunpack.c.l.b16 %v3790
    %v4211 = vunpack.c.h.b16 %v3790
    %v4212 = vunpack.c.l.b16 %v3791
    %v4213 = vunpack.c.h.b16 %v3791
    %v4214 = vunpack.c.l.b16 %v3792
    %v4215 = vunpack.c.h.b16 %v3792
    %v4216 = vunpack.c.l.b16 %v3793
    %v4217 = vunpack.c.h.b16 %v3793
    %v4218 = vunpack.c.l.b16 %v3794
    %v4219 = vunpack.c.h.b16 %v3794
    %v4220 = vunpack.c.l.b16 %v3795
    %v4221 = vunpack.c.h.b16 %v3795
    %v4222 = vunpack.c.l.b16 %v3796
    %v4223 = vunpack.c.h.b16 %v3796
    %v4224 = vunpack.c.l.b16 %v3797
    %v4225 = vunpack.c.h.b16 %v3797
    %v4226 = vunpack.c.l.b16 %v3798
    %v4227 = vunpack.c.h.b16 %v3798
    %v4228 = vunpack.c.l.b16 %v3799
    %v4229 = vunpack.c.h.b16 %v3799
    %v4230 = vunpack.c.l.b16 %v3800
    %v4231 = vunpack.c.h.b16 %v3800
    %v4232 = vunpack.c.l.b16 %v3801
    %v4233 = vunpack.c.h.b16 %v3801
    %v4234 = vunpack.c.l.b16 %v3802
    %v4235 = vunpack.c.h.b16 %v3802
    %v4236 = vunpack.c.l.b16 %v3803
    %v4237 = vunpack.c.h.b16 %v3803
    %v4238 = vunpack.c.l.b16 %v3804
    %v4239 = vunpack.c.h.b16 %v3804
    %v4240 = vunpack.c.l.b16 %v3805
    %v4241 = vunpack.c.h.b16 %v3805
    %v4242 = vunpack.c.l.b16 %v3806
    %v4243 = vunpack.c.h.b16 %v3806
    %v4244 = vunpack.c.l.b16 %v3807
    %v4245 = vunpack.c.h.b16 %v3807
    %v4246 = vunpack.c.l.b16 %v3808
    %v4247 = vunpack.c.h.b16 %v3808
    %v4248 = vunpack.c.l.b16 %v3809
    %v4249 = vunpack.c.h.b16 %v3809
    %v4250 = vunpack.c.l.b16 %v3810
    %v4251 = vunpack.c.h.b16 %v3810
    %v4252 = vunpack.c.l.b16 %v3811
    %v4253 = vunpack.c.h.b16 %v3811
    %v4254 = vunpack.c.l.b16 %v3812
    %v4255 = vunpack.c.h.b16 %v3812
    %v4256 = vunpack.c.l.b16 %v3813
    %v4257 = vunpack.c.h.b16 %v3813
    %v4258 = vunpack.c.l.b16 %v3814
    %v4259 = vunpack.c.h.b16 %v3814
    %v4260 = vunpack.c.l.b16 %v3815
    %v4261 = vunpack.c.h.b16 %v3815
    %v4262 = vunpack.c.l.b16 %v3816
    %v4263 = vunpack.c.h.b16 %v3816
    %v4264 = vunpack.c.l.b16 %v3817
    %v4265 = vunpack.c.h.b16 %v3817
    %v4266 = vunpack.c.l.b16 %v3818
    %v4267 = vunpack.c.h.b16 %v3818
    %v4268 = vunpack.c.l.b16 %v3819
    %v4269 = vunpack.c.h.b16 %v3819
    %v4270 = vunpack.c.l.b16 %v3820
    %v4271 = vunpack.c.h.b16 %v3820
    %v4272 = vunpack.c.l.b16 %v3821
    %v4273 = vunpack.c.h.b16 %v3821
    %v4274 = vunpack.c.l.b16 %v3822
    %v4275 = vunpack.c.h.b16 %v3822
    %v4276 = vunpack.c.l.b16 %v3823
    %v4277 = vunpack.c.h.b16 %v3823
    %v4278 = vunpack.c.l.b16 %v3824
    %v4279 = vunpack.c.h.b16 %v3824
    %v4280 = vunpack.c.l.b16 %v3825
    %v4281 = vunpack.c.h.b16 %v3825
    %v4282 = vunpack.c.l.b16 %v3826
    %v4283 = vunpack.c.h.b16 %v3826
    %v4284 = vunpack.c.l.b16 %v3827
    %v4285 = vunpack.c.h.b16 %v3827
    %v4286 = vunpack.c.l.b16 %v3828
    %v4287 = vunpack.c.h.b16 %v3828
    %v4288 = vunpack.c.l.b16 %v3829
    %v4289 = vunpack.c.h.b16 %v3829
    %v4290 = vunpack.c.l.b16 %v3830
    %v4291 = vunpack.c.h.b16 %v3830
    %v4292 = vunpack.c.l.b16 %v3831
    %v4293 = vunpack.c.h.b16 %v3831
    %v4294 = vunpack.c.l.b16 %v3832
    %v4295 = vunpack.c.h.b16 %v3832
    %v4296 = vunpack.c.l.b16 %v3833
    %v4297 = vunpack.c.h.b16 %v3833
    %v4298 = vunpack.c.l.b16 %v3834
    %v4299 = vunpack.c.h.b16 %v3834
    %v4300 = vunpack.c.l.b16 %v3835
    %v4301 = vunpack.c.h.b16 %v3835
    %v4302 = vunpack.c.l.b16 %v3836
    %v4303 = vunpack.c.h.b16 %v3836
    %v4304 = vunpack.c.l.b16 %v3837
    %v4305 = vunpack.c.h.b16 %v3837
    %v4306 = vunpack.c.l.b16 %v3838
    %v4307 = vunpack.c.h.b16 %v3838
    %v4308 = vunpack.c.l.b16 %v3839
    %v4309 = vunpack.c.h.b16 %v3839
    %v4310 = vunpack.c.l.b16 %v3840
    %v4311 = vunpack.c.h.b16 %v3840
    %v4312 = vunpack.c.l.b16 %v3841
    %v4313 = vunpack.c.h.b16 %v3841
    %v4314 = vunpack.c.l.b16 %v3842
    %v4315 = vunpack.c.h.b16 %v3842
    %v4316 = vunpack.c.l.b16 %v3843
    %v4317 = vunpack.c.h.b16 %v3843
    %v4318 = vunpack.c.l.b16 %v3844
    %v4319 = vunpack.c.h.b16 %v3844
    %v4320 = vunpack.c.l.b16 %v3845
    %v4321 = vunpack.c.h.b16 %v3845
    %v4322 = vunpack.c.l.b16 %v3846
    %v4323 = vunpack.c.h.b16 %v3846
    %v4324 = vunpack.c.l.b16 %v3847
    %v4325 = vunpack.c.h.b16 %v3847
    %v4326 = vunpack.c.l.b16 %v3848
    %v4327 = vunpack.c.h.b16 %v3848
    %v4328 = vunpack.c.l.b16 %v3849
    %v4329 = vunpack.c.h.b16 %v3849
    %v4330 = vunpack.c.l.b16 %v3850
    %v4331 = vunpack.c.h.b16 %v3850
    %v4332 = vunpack.c.l.b16 %v3851
    %v4333 = vunpack.c.h.b16 %v3851
    %v4334 = vunpack.c.l.b16 %v3852
    %v4335 = vunpack.c.h.b16 %v3852
    %v4336 = vunpack.c.l.b16 %v3853
    %v4337 = vunpack.c.h.b16 %v3853
    %v4338 = vunpack.c.l.b16 %v3854
    %v4339 = vunpack.c.h.b16 %v3854
    %v4340 = vunpack.c.l.b16 %v3855
    %v4341 = vunpack.c.h.b16 %v3855
    %v4342 = vunpack.c.l.b16 %v3856
    %v4343 = vunpack.c.h.b16 %v3856
    %v4344 = vunpack.c.l.b16 %v3857
    %v4345 = vunpack.c.h.b16 %v3857
    %v4346 = vunpack.c.l.b16 %v3858
    %v4347 = vunpack.c.h.b16 %v3858
    %v4348 = vunpack.c.l.b16 %v3859
    %v4349 = vunpack.c.h.b16 %v3859
    %v4350 = vunpack.c.l.b16 %v3860
    %v4351 = vunpack.c.h.b16 %v3860
    %v4352 = vunpack.c.l.b16 %v3861
    %v4353 = vunpack.c.h.b16 %v3861
    %v4354 = vunpack.c.l.b16 %v3862
    %v4355 = vunpack.c.h.b16 %v3862
    %v4356 = vunpack.c.l.b16 %v3863
    %v4357 = vunpack.c.h.b16 %v3863
    %v4358 = vunpack.c.l.b16 %v3864
    %v4359 = vunpack.c.h.b16 %v3864
    %v4360 = vunpack.c.l.b16 %v3865
    %v4361 = vunpack.c.h.b16 %v3865
    %v4362 = vunpack.c.l.b16 %v3866
    %v4363 = vunpack.c.h.b16 %v3866
    %v4364 = vunpack.c.l.b16 %v3867
    %v4365 = vunpack.c.h.b16 %v3867
    %v4366 = vunpack.c.l.b16 %v3868
    %v4367 = vunpack.c.h.b16 %v3868
    %v4368 = vunpack.c.l.b16 %v3869
    %v4369 = vunpack.c.h.b16 %v3869
    %v4370 = vunpack.c.l.b16 %v3870
    %v4371 = vunpack.c.h.b16 %v3870
    %v4372 = vunpack.c.l.b16 %v3871
    %v4373 = vunpack.c.h.b16 %v3871
    %v4374 = vunpack.c.l.b16 %v3872
    %v4375 = vunpack.c.h.b16 %v3872
    %v4376 = vunpack.c.l.b16 %v3873
    %v4377 = vunpack.c.h.b16 %v3873
    %v4378 = vunpack.c.l.b16 %v3874
    %v4379 = vunpack.c.h.b16 %v3874
    %v4380 = vunpack.c.l.b16 %v3875
    %v4381 = vunpack.c.h.b16 %v3875
    %v4382 = vunpack.c.l.b16 %v3876
    %v4383 = vunpack.c.h.b16 %v3876
    %v4384 = vunpack.c.l.b16 %v3877
    %v4385 = vunpack.c.h.b16 %v3877
    %v4386 = vunpack.c.l.b16 %v3878
    %v4387 = vunpack.c.h.b16 %v3878
    %v4388 = vunpack.c.l.b16 %v3879
    %v4389 = vunpack.c.h.b16 %v3879
    %v4390 = vunpack.c.l.b16 %v3880
    %v4391 = vunpack.c.h.b16 %v3880
    %v4392 = vunpack.c.l.b16 %v3881
    %v4393 = vunpack.c.h.b16 %v3881
    %v4394 = vunpack.c.l.b16 %v3882
    %v4395 = vunpack.c.h.b16 %v3882
    %v4396 = vunpack.c.l.b16 %v3883
    %v4397 = vunpack.c.h.b16 %v3883
    %v4398 = vunpack.c.l.b16 %v3884
    %v4399 = vunpack.c.h.b16 %v3884
    %v4400 = vunpack.c.l.b16 %v3885
    %v4401 = vunpack.c.h.b16 %v3885
    %v4402 = vunpack.c.l.b16 %v3886
    %v4403 = vunpack.c.h.b16 %v3886
    %v4404 = vunpack.c.l.b16 %v3887
    %v4405 = vunpack.c.h.b16 %v3887
    %v4406 = vunpack.c.l.b16 %v3888
    %v4407 = vunpack.c.h.b16 %v3888
    %v4408 = vunpack.c.l.b16 %v3889
    %v4409 = vunpack.c.h.b16 %v3889
    %v4410 = vunpack.c.l.b16 %v3890
    %v4411 = vunpack.c.h.b16 %v3890
    %v4412 = vunpack.c.l.b16 %v3891
    %v4413 = vunpack.c.h.b16 %v3891
    %v4414 = vunpack.c.l.b16 %v3892
    %v4415 = vunpack.c.h.b16 %v3892
    %v4416 = vunpack.c.l.b16 %v3893
    %v4417 = vunpack.c.h.b16 %v3893
    %v4418 = vunpack.c.l.b16 %v3894
    %v4419 = vunpack.c.h.b16 %v3894
    %v4420 = vunpack.c.l.b16 %v3895
    %v4421 = vunpack.c.h.b16 %v3895
    %v4422 = vunpack.c.l.b16 %v3896
    %v4423 = vunpack.c.h.b16 %v3896
    %v4424 = vunpack.c.l.b16 %v3897
    %v4425 = vunpack.c.h.b16 %v3897
    %v4426 = vunpack.c.l.b16 %v3898
    %v4427 = vunpack.c.h.b16 %v3898
    %v4428 = vunpack.c.l.b16 %v3899
    %v4429 = vunpack.c.h.b16 %v3899
    %v4430 = vunpack.c.l.b16 %v3900
    %v4431 = vunpack.c.h.b16 %v3900
    %v4432 = vunpack.c.l.b16 %v3901
    %v4433 = vunpack.c.h.b16 %v3901
    %v4434 = vunpack.c.l.b16 %v3902
    %v4435 = vunpack.c.h.b16 %v3902
    %v4436 = vunpack.c.l.b16 %v3903
    %v4437 = vunpack.c.h.b16 %v3903
    %v4438 = vunpack.c.l.b16 %v3904
    %v4439 = vunpack.c.h.b16 %v3904
    %v4440 = vunpack.c.l.b16 %v3905
    %v4441 = vunpack.c.h.b16 %v3905
    %v4442 = vunpack.c.l.b16 %v3906
    %v4443 = vunpack.c.h.b16 %v3906
    %v4444 = vunpack.c.l.b16 %v3907
    %v4445 = vunpack.c.h.b16 %v3907
    %v4446 = vunpack.c.l.b16 %v3908
    %v4447 = vunpack.c.h.b16 %v3908
    %v4448 = vunpack.c.l.b16 %v3909
    %v4449 = vunpack.c.h.b16 %v3909
    %v4450 = vunpack.c.l.b16 %v3910
    %v4451 = vunpack.c.h.b16 %v3910
    %v4452 = vunpack.c.l.b16 %v3911
    %v4453 = vunpack.c.h.b16 %v3911
    %v4454 = vunpack.c.l.b16 %v3912
    %v4455 = vunpack.c.h.b16 %v3912
    %v4456 = vunpack.c.l.b16 %v3913
    %v4457 = vunpack.c.h.b16 %v3913
    %v4458 = vunpack.c.l.b16 %v3914
    %v4459 = vunpack.c.h.b16 %v3914
    %v4460 = vunpack.c.l.b16 %v3915
    %v4461 = vunpack.c.h.b16 %v3915
    %v4462 = vunpack.c.l.b16 %v3916
    %v4463 = vunpack.c.h.b16 %v3916
    %v4464 = vunpack.c.l.b16 %v3917
    %v4465 = vunpack.c.h.b16 %v3917
    %v4466 = vunpack.c.l.b16 %v3918
    %v4467 = vunpack.c.h.b16 %v3918
    %v4468 = vunpack.c.l.b16 %v3919
    %v4469 = vunpack.c.h.b16 %v3919
    %v4470 = vunpack.c.l.b16 %v3920
    %v4471 = vunpack.c.h.b16 %v3920
    %v4472 = vunpack.c.l.b16 %v3921
    %v4473 = vunpack.c.h.b16 %v3921
    %v4474 = vunpack.c.l.b16 %v3922
    %v4475 = vunpack.c.h.b16 %v3922
    %v4476 = vunpack.c.l.b16 %v3923
    %v4477 = vunpack.c.h.b16 %v3923
    %v4478 = vunpack.c.l.b16 %v3924
    %v4479 = vunpack.c.h.b16 %v3924
    %v4480 = vunpack.c.l.b16 %v3925
    %v4481 = vunpack.c.h.b16 %v3925
    %v4482 = vunpack.c.l.b16 %v3926
    %v4483 = vunpack.c.h.b16 %v3926
    %v4484 = vunpack.c.l.b16 %v3927
    %v4485 = vunpack.c.h.b16 %v3927
    %v4486 = vunpack.c.l.b16 %v3928
    %v4487 = vunpack.c.h.b16 %v3928
    %v4488 = vunpack.c.l.b16 %v3929
    %v4489 = vunpack.c.h.b16 %v3929
    %v4490 = vunpack.c.l.b16 %v3930
    %v4491 = vunpack.c.h.b16 %v3930
    %v4492 = vunpack.c.l.b16 %v3931
    %v4493 = vunpack.c.h.b16 %v3931
    %v4494 = vunpack.c.l.b16 %v3932
    %v4495 = vunpack.c.h.b16 %v3932
    %v4496 = vunpack.c.l.b16 %v3933
    %v4497 = vunpack.c.h.b16 %v3933
    %v4498 = vunpack.c.l.b16 %v3934
    %v4499 = vunpack.c.h.b16 %v3934
    %v4500 = vunpack.c.l.b16 %v3935
    %v4501 = vunpack.c.h.b16 %v3935
    %v4502 = vunpack.c.l.b16 %v3936
    %v4503 = vunpack.c.h.b16 %v3936
    %v4504 = vunpack.c.l.b16 %v3937
    %v4505 = vunpack.c.h.b16 %v3937
    %v4506 = vunpack.c.l.b16 %v3938
    %v4507 = vunpack.c.h.b16 %v3938
    %v4508 = vunpack.c.l.b16 %v3939
    %v4509 = vunpack.c.h.b16 %v3939
    %v4510 = vunpack.c.l.b16 %v3940
    %v4511 = vunpack.c.h.b16 %v3940
    %v4512 = vunpack.c.l.b16 %v3941
    %v4513 = vunpack.c.h.b16 %v3941
    %v4514 = vunpack.c.l.b16 %v3942
    %v4515 = vunpack.c.h.b16 %v3942
    %v4516 = vunpack.c.l.b16 %v3943
    %v4517 = vunpack.c.h.b16 %v3943
    %v4518 = vunpack.c.l.b16 %v3944
    %v4519 = vunpack.c.h.b16 %v3944
    %v4520 = vunpack.c.l.b16 %v3945
    %v4521 = vunpack.c.h.b16 %v3945
    %v4522 = vpack.c.b16 %v4144, %v4138
    %v4523 = vpack.c.b16 %v4145, %v4139
    %v4524 = vpack.c.b16 %v4146, %v4140
    %v4525 = vpack.c.b16 %v4147, %v4141
    %v4526 = vpack.c.b16 %v4148, %v4142
    %v4527 = vpack.c.b16 %v4149, %v4143
    %v4528 = vpack.c.b16 %v4156, %v4150
    %v4529 = vpack.c.b16 %v4157, %v4151
    %v4530 = vpack.c.b16 %v4158, %v4152
    %v4531 = vpack.c.b16 %v4159, %v4153
    %v4532 = vpack.c.b16 %v4160, %v4154
    %v4533 = vpack.c.b16 %v4161, %v4155
    %v4534 = vpack.c.b16 %v4168, %v4162
    %v4535 = vpack.c.b16 %v4169, %v4163
    %v4536 = vpack.c.b16 %v4170, %v4164
    %v4537 = vpack.c.b16 %v4171, %v4165
    %v4538 = vpack.c.b16 %v4172, %v4166
    %v4539 = vpack.c.b16 %v4173, %v4167
    %v4540 = vpack.c.b16 %v4180, %v4174
    %v4541 = vpack.c.b16 %v4181, %v4175
    %v4542 = vpack.c.b16 %v4182, %v4176
    %v4543 = vpack.c.b16 %v4183, %v4177
    %v4544 = vpack.c.b16 %v4184, %v4178
    %v4545 = vpack.c.b16 %v4185, %v4179
    %v4546 = vpack.c.b16 %v4192, %v4186
    %v4547 = vpack.c.b16 %v4193, %v4187
    %v4548 = vpack.c.b16 %v4194, %v4188
    %v4549 = vpack.c.b16 %v4195, %v4189
    %v4550 = vpack.c.b16 %v4196, %v4190
    %v4551 = vpack.c.b16 %v4197, %v4191
    %v4552 = vpack.c.b16 %v4204, %v4198
    %v4553 = vpack.c.b16 %v4205, %v4199
    %v4554 = vpack.c.b16 %v4206, %v4200
    %v4555 = vpack.c.b16 %v4207, %v4201
    %v4556 = vpack.c.b16 %v4208, %v4202
    %v4557 = vpack.c.b16 %v4209, %v4203
    %v4558 = vpack.c.b16 %v4216, %v4210
    %v4559 = vpack.c.b16 %v4217, %v4211
    %v4560 = vpack.c.b16 %v4218, %v4212
    %v4561 = vpack.c.b16 %v4219, %v4213
    %v4562 = vpack.c.b16 %v4220, %v4214
    %v4563 = vpack.c.b16 %v4221, %v4215
    %v4564 = vpack.c.b16 %v4228, %v4222
    %v4565 = vpack.c.b16 %v4229, %v4223
    %v4566 = vpack.c.b16 %v4230, %v4224
    %v4567 = vpack.c.b16 %v4231, %v4225
    %v4568 = vpack.c.b16 %v4232, %v4226
    %v4569 = vpack.c.b16 %v4233, %v4227
    %v4570 = vpack.c.b16 %v4240, %v4234
    %v4571 = vpack.c.b16 %v4241, %v4235
    %v4572 = vpack.c.b16 %v4242, %v4236
    %v4573 = vpack.c.b16 %v4243, %v4237
    %v4574 = vpack.c.b16 %v4244, %v4238
    %v4575 = vpack.c.b16 %v4245, %v4239
    %v4576 = vpack.c.b16 %v4252, %v4246
    %v4577 = vpack.c.b16 %v4253, %v4247
    %v4578 = vpack.c.b16 %v4254, %v4248
    %v4579 = vpack.c.b16 %v4255, %v4249
    %v4580 = vpack.c.b16 %v4256, %v4250
    %v4581 = vpack.c.b16 %v4257, %v4251
    %v4582 = vpack.c.b16 %v4264, %v4258
    %v4583 = vpack.c.b16 %v4265, %v4259
    %v4584 = vpack.c.b16 %v4266, %v4260
    %v4585 = vpack.c.b16 %v4267, %v4261
    %v4586 = vpack.c.b16 %v4268, %v4262
    %v4587 = vpack.c.b16 %v4269, %v4263
    %v4588 = vpack.c.b16 %v4276, %v4270
    %v4589 = vpack.c.b16 %v4277, %v4271
    %v4590 = vpack.c.b16 %v4278, %v4272
    %v4591 = vpack.c.b16 %v4279, %v4273
    %v4592 = vpack.c.b16 %v4280, %v4274
    %v4593 = vpack.c.b16 %v4281, %v4275
    %v4594 = vpack.c.b16 %v4288, %v4282
    %v4595 = vpack.c.b16 %v4289, %v4283
    %v4596 = vpack.c.b16 %v4290, %v4284
    %v4597 = vpack.c.b16 %v4291, %v4285
    %v4598 = vpack.c.b16 %v4292, %v4286
    %v4599 = vpack.c.b16 %v4293, %v4287
    %v4600 = vpack.c.b16 %v4300, %v4294
    %v4601 = vpack.c.b16 %v4301, %v4295
    %v4602 = vpack.c.b16 %v4302, %v4296
    %v4603 = vpack.c.b16 %v4303, %v4297
    %v4604 = vpack.c.b16 %v4304, %v4298
    %v4605 = vpack.c.b16 %v4305, %v4299
    %v4606 = vpack.c.b16 %v4312, %v4306
    %v4607 = vpack.c.b16 %v4313, %v4307
    %v4608 = vpack.c.b16 %v4314, %v4308
    %v4609 = vpack.c.b16 %v4315, %v4309
    %v4610 = vpack.c.b16 %v4316, %v4310
    %v4611 = vpack.c.b16 %v4317, %v4311
    %v4612 = vpack.c.b16 %v4324, %v4318
    %v4613 = vpack.c.b16 %v4325, %v4319
    %v4614 = vpack.c.b16 %v4326, %v4320
    %v4615 = vpack.c.b16 %v4327, %v4321
    %v4616 = vpack.c.b16 %v4328, %v4322
    %v4617 = vpack.c.b16 %v4329, %v4323
    %v4618 = vpack.c.b16 %v4336, %v4330
    %v4619 = vpack.c.b16 %v4337, %v4331
    %v4620 = vpack.c.b16 %v4338, %v4332
    %v4621 = vpack.c.b16 %v4339, %v4333
    %v4622 = vpack.c.b16 %v4340, %v4334
    %v4623 = vpack.c.b16 %v4341, %v4335
    %v4624 = vpack.c.b16 %v4348, %v4342
    %v4625 = vpack.c.b16 %v4349, %v4343
    %v4626 = vpack.c.b16 %v4350, %v4344
    %v4627 = vpack.c.b16 %v4351, %v4345
    %v4628 = vpack.c.b16 %v4352, %v4346
    %v4629 = vpack.c.b16 %v4353, %v4347
    %v4630 = vpack.c.b16 %v4360, %v4354
    %v4631 = vpack.c.b16 %v4361, %v4355
    %v4632 = vpack.c.b16 %v4362, %v4356
    %v4633 = vpack.c.b16 %v4363, %v4357
    %v4634 = vpack.c.b16 %v4364, %v4358
    %v4635 = vpack.c.b16 %v4365, %v4359
    %v4636 = vpack.c.b16 %v4372, %v4366
    %v4637 = vpack.c.b16 %v4373, %v4367
    %v4638 = vpack.c.b16 %v4374, %v4368
    %v4639 = vpack.c.b16 %v4375, %v4369
    %v4640 = vpack.c.b16 %v4376, %v4370
    %v4641 = vpack.c.b16 %v4377, %v4371
    %v4642 = vpack.c.b16 %v4384, %v4378
    %v4643 = vpack.c.b16 %v4385, %v4379
    %v4644 = vpack.c.b16 %v4386, %v4380
    %v4645 = vpack.c.b16 %v4387, %v4381
    %v4646 = vpack.c.b16 %v4388, %v4382
    %v4647 = vpack.c.b16 %v4389, %v4383
    %v4648 = vpack.c.b16 %v4396, %v4390
    %v4649 = vpack.c.b16 %v4397, %v4391
    %v4650 = vpack.c.b16 %v4398, %v4392
    %v4651 = vpack.c.b16 %v4399, %v4393
    %v4652 = vpack.c.b16 %v4400, %v4394
    %v4653 = vpack.c.b16 %v4401, %v4395
    %v4654 = vpack.c.b16 %v4408, %v4402
    %v4655 = vpack.c.b16 %v4409, %v4403
    %v4656 = vpack.c.b16 %v4410, %v4404
    %v4657 = vpack.c.b16 %v4411, %v4405
    %v4658 = vpack.c.b16 %v4412, %v4406
    %v4659 = vpack.c.b16 %v4413, %v4407
    %v4660 = vpack.c.b16 %v4420, %v4414
    %v4661 = vpack.c.b16 %v4421, %v4415
    %v4662 = vpack.c.b16 %v4422, %v4416
    %v4663 = vpack.c.b16 %v4423, %v4417
    %v4664 = vpack.c.b16 %v4424, %v4418
    %v4665 = vpack.c.b16 %v4425, %v4419
    %v4666 = vpack.c.b16 %v4432, %v4426
    %v4667 = vpack.c.b16 %v4433, %v4427
    %v4668 = vpack.c.b16 %v4434, %v4428
    %v4669 = vpack.c.b16 %v4435, %v4429
    %v4670 = vpack.c.b16 %v4436, %v4430
    %v4671 = vpack.c.b16 %v4437, %v4431
    %v4672 = vpack.c.b16 %v4444, %v4438
    %v4673 = vpack.c.b16 %v4445, %v4439
    %v4674 = vpack.c.b16 %v4446, %v4440
    %v4675 = vpack.c.b16 %v4447, %v4441
    %v4676 = vpack.c.b16 %v4448, %v4442
    %v4677 = vpack.c.b16 %v4449, %v4443
    %v4678 = vpack.c.b16 %v4456, %v4450
    %v4679 = vpack.c.b16 %v4457, %v4451
    %v4680 = vpack.c.b16 %v4458, %v4452
    %v4681 = vpack.c.b16 %v4459, %v4453
    %v4682 = vpack.c.b16 %v4460, %v4454
    %v4683 = vpack.c.b16 %v4461, %v4455
    %v4684 = vpack.c.b16 %v4468, %v4462
    %v4685 = vpack.c.b16 %v4469, %v4463
    %v4686 = vpack.c.b16 %v4470, %v4464
    %v4687 = vpack.c.b16 %v4471, %v4465
    %v4688 = vpack.c.b16 %v4472, %v4466
    %v4689 = vpack.c.b16 %v4473, %v4467
    %v4690 = vpack.c.b16 %v4480, %v4474
    %v4691 = vpack.c.b16 %v4481, %v4475
    %v4692 = vpack.c.b16 %v4482, %v4476
    %v4693 = vpack.c.b16 %v4483, %v4477
    %v4694 = vpack.c.b16 %v4484, %v4478
    %v4695 = vpack.c.b16 %v4485, %v4479
    %v4696 = vpack.c.b16 %v4492, %v4486
    %v4697 = vpack.c.b16 %v4493, %v4487
    %v4698 = vpack.c.b16 %v4494, %v4488
    %v4699 = vpack.c.b16 %v4495, %v4489
    %v4700 = vpack.c.b16 %v4496, %v4490
    %v4701 = vpack.c.b16 %v4497, %v4491
    %v4702 = vpack.c.b16 %v4504, %v4498
    %v4703 = vpack.c.b16 %v4505, %v4499
    %v4704 = vpack.c.b16 %v4506, %v4500
    %v4705 = vpack.c.b16 %v4507, %v4501
    %v4706 = vpack.c.b16 %v4508, %v4502
    %v4707 = vpack.c.b16 %v4509, %v4503
    %v4708 = vpack.c.b16 %v4516, %v4510
    %v4709 = vpack.c.b16 %v4517, %v4511
    %v4710 = vpack.c.b16 %v4518, %v4512
    %v4711 = vpack.c.b16 %v4519, %v4513
    %v4712 = vpack.c.b16 %v4520, %v4514
    %v4713 = vpack.c.b16 %v4521, %v4515
    %4906 = vmatpush.bf16.msra.mxu0 %v4564
    %4907 = vmatpush.bf16.msra.mxu0 %v4558
    %4908 = vmatpush.bf16.msra.mxu0 %v4552
    %4909 = vmatpush.bf16.msra.mxu0 %v4546
    %4910 = vmatpush.bf16.msra.mxu0 %v4540
    %4911 = vmatpush.bf16.msra.mxu0 %v4534
    %4912 = vmatpush.bf16.msra.mxu0 %v4528
    %4913 = vmatpush.bf16.msra.mxu0 %v4522
    %4914 = vmatmul.bf16.gmra.mxu0 %v3734
    %v4915 = vpop.f32.mrf.mxu0
    %v4916 = vadd.f32 0.0, %v4915
    %v4917 = vpop.f32.mrf.mxu0
    %v4918 = vadd.f32 0.0, %v4917
    %4919 = vdwg.mxu0
    %4920 = vmatpush.bf16.msra.mxu0 %v4612
    %4921 = vmatpush.bf16.msra.mxu0 %v4606
    %4922 = vmatpush.bf16.msra.mxu0 %v4600
    %4923 = vmatpush.bf16.msra.mxu0 %v4594
    %4924 = vmatpush.bf16.msra.mxu0 %v4588
    %4925 = vmatpush.bf16.msra.mxu0 %v4582
    %4926 = vmatpush.bf16.msra.mxu0 %v4576
    %4927 = vmatpush.bf16.msra.mxu0 %v4570
    %4928 = vmatmul.bf16.gmra.mxu0 %v3740
    %v4929 = vpop.f32.mrf.mxu0
    %v4930 = vadd.f32 %v4916, %v4929
    %v4931 = vpop.f32.mrf.mxu0
    %v4932 = vadd.f32 %v4918, %v4931
    %4933 = vdwg.mxu0
    %4934 = vmatpush.bf16.msra.mxu0 %v4660
    %4935 = vmatpush.bf16.msra.mxu0 %v4654
    %4936 = vmatpush.bf16.msra.mxu0 %v4648
    %4937 = vmatpush.bf16.msra.mxu0 %v4642
    %4938 = vmatpush.bf16.msra.mxu0 %v4636
    %4939 = vmatpush.bf16.msra.mxu0 %v4630
    %4940 = vmatpush.bf16.msra.mxu0 %v4624
    %4941 = vmatpush.bf16.msra.mxu0 %v4618
    %4942 = vmatmul.bf16.gmra.mxu0 %v3746
    %v4943 = vpop.f32.mrf.mxu0
    %v4944 = vadd.f32 %v4930, %v4943
    %v4945 = vpop.f32.mrf.mxu0
    %v4946 = vadd.f32 %v4932, %v4945
    %4947 = vdwg.mxu0
    %4948 = vmatpush.bf16.msra.mxu0 %v4708
    %4949 = vmatpush.bf16.msra.mxu0 %v4702
    %4950 = vmatpush.bf16.msra.mxu0 %v4696
    %4951 = vmatpush.bf16.msra.mxu0 %v4690
    %4952 = vmatpush.bf16.msra.mxu0 %v4684
    %4953 = vmatpush.bf16.msra.mxu0 %v4678
    %4954 = vmatpush.bf16.msra.mxu0 %v4672
    %4955 = vmatpush.bf16.msra.mxu0 %v4666
    %4956 = vmatmul.bf16.gmra.mxu0 %v3752
    %v4957 = vpop.f32.mrf.mxu0
    %v4958 = vadd.f32 %v4944, %v4957
    %v4959 = vpop.f32.mrf.mxu0
    %v4960 = vadd.f32 %v4946, %v4959
    %4961 = vdwg.mxu0
    %4962 = vmatpush.bf16.msra.mxu0 %v4565
    %4963 = vmatpush.bf16.msra.mxu0 %v4559
    %4964 = vmatpush.bf16.msra.mxu0 %v4553
    %4965 = vmatpush.bf16.msra.mxu0 %v4547
    %4966 = vmatpush.bf16.msra.mxu0 %v4541
    %4967 = vmatpush.bf16.msra.mxu0 %v4535
    %4968 = vmatpush.bf16.msra.mxu0 %v4529
    %4969 = vmatpush.bf16.msra.mxu0 %v4523
    %4970 = vmatmul.bf16.gmra.mxu0 %v3734
    %v4971 = vpop.f32.mrf.mxu0
    %v4972 = vadd.f32 0.0, %v4971
    %v4973 = vpop.f32.mrf.mxu0
    %v4974 = vadd.f32 0.0, %v4973
    %4975 = vdwg.mxu0
    %4976 = vmatpush.bf16.msra.mxu0 %v4613
    %4977 = vmatpush.bf16.msra.mxu0 %v4607
    %4978 = vmatpush.bf16.msra.mxu0 %v4601
    %4979 = vmatpush.bf16.msra.mxu0 %v4595
    %4980 = vmatpush.bf16.msra.mxu0 %v4589
    %4981 = vmatpush.bf16.msra.mxu0 %v4583
    %4982 = vmatpush.bf16.msra.mxu0 %v4577
    %4983 = vmatpush.bf16.msra.mxu0 %v4571
    %4984 = vmatmul.bf16.gmra.mxu0 %v3740
    %v4985 = vpop.f32.mrf.mxu0
    %v4986 = vadd.f32 %v4972, %v4985
    %v4987 = vpop.f32.mrf.mxu0
    %v4988 = vadd.f32 %v4974, %v4987
    %4989 = vdwg.mxu0
    %4990 = vmatpush.bf16.msra.mxu0 %v4661
    %4991 = vmatpush.bf16.msra.mxu0 %v4655
    %4992 = vmatpush.bf16.msra.mxu0 %v4649
    %4993 = vmatpush.bf16.msra.mxu0 %v4643
    %4994 = vmatpush.bf16.msra.mxu0 %v4637
    %4995 = vmatpush.bf16.msra.mxu0 %v4631
    %4996 = vmatpush.bf16.msra.mxu0 %v4625
    %4997 = vmatpush.bf16.msra.mxu0 %v4619
    %4998 = vmatmul.bf16.gmra.mxu0 %v3746
    %v4999 = vpop.f32.mrf.mxu0
    %v5000 = vadd.f32 %v4986, %v4999
    %v5001 = vpop.f32.mrf.mxu0
    %v5002 = vadd.f32 %v4988, %v5001
    %5003 = vdwg.mxu0
    %5004 = vmatpush.bf16.msra.mxu0 %v4709
    %5005 = vmatpush.bf16.msra.mxu0 %v4703
    %5006 = vmatpush.bf16.msra.mxu0 %v4697
    %5007 = vmatpush.bf16.msra.mxu0 %v4691
    %5008 = vmatpush.bf16.msra.mxu0 %v4685
    %5009 = vmatpush.bf16.msra.mxu0 %v4679
    %5010 = vmatpush.bf16.msra.mxu0 %v4673
    %5011 = vmatpush.bf16.msra.mxu0 %v4667
    %5012 = vmatmul.bf16.gmra.mxu0 %v3752
    %v5013 = vpop.f32.mrf.mxu0
    %v5014 = vadd.f32 %v5000, %v5013
    %v5015 = vpop.f32.mrf.mxu0
    %v5016 = vadd.f32 %v5002, %v5015
    %5017 = vdwg.mxu0
    %5018 = vmatpush.bf16.msra.mxu0 %v4566
    %5019 = vmatpush.bf16.msra.mxu0 %v4560
    %5020 = vmatpush.bf16.msra.mxu0 %v4554
    %5021 = vmatpush.bf16.msra.mxu0 %v4548
    %5022 = vmatpush.bf16.msra.mxu0 %v4542
    %5023 = vmatpush.bf16.msra.mxu0 %v4536
    %5024 = vmatpush.bf16.msra.mxu0 %v4530
    %5025 = vmatpush.bf16.msra.mxu0 %v4524
    %5026 = vmatmul.bf16.gmra.mxu0 %v3734
    %v5027 = vpop.f32.mrf.mxu0
    %v5028 = vadd.f32 0.0, %v5027
    %v5029 = vpop.f32.mrf.mxu0
    %v5030 = vadd.f32 0.0, %v5029
    %5031 = vdwg.mxu0
    %5032 = vmatpush.bf16.msra.mxu0 %v4614
    %5033 = vmatpush.bf16.msra.mxu0 %v4608
    %5034 = vmatpush.bf16.msra.mxu0 %v4602
    %5035 = vmatpush.bf16.msra.mxu0 %v4596
    %5036 = vmatpush.bf16.msra.mxu0 %v4590
    %5037 = vmatpush.bf16.msra.mxu0 %v4584
    %5038 = vmatpush.bf16.msra.mxu0 %v4578
    %5039 = vmatpush.bf16.msra.mxu0 %v4572
    %5040 = vmatmul.bf16.gmra.mxu0 %v3740
    %v5041 = vpop.f32.mrf.mxu0
    %v5042 = vadd.f32 %v5028, %v5041
    %v5043 = vpop.f32.mrf.mxu0
    %v5044 = vadd.f32 %v5030, %v5043
    %5045 = vdwg.mxu0
    %5046 = vmatpush.bf16.msra.mxu0 %v4662
    %5047 = vmatpush.bf16.msra.mxu0 %v4656
    %5048 = vmatpush.bf16.msra.mxu0 %v4650
    %5049 = vmatpush.bf16.msra.mxu0 %v4644
    %5050 = vmatpush.bf16.msra.mxu0 %v4638
    %5051 = vmatpush.bf16.msra.mxu0 %v4632
    %5052 = vmatpush.bf16.msra.mxu0 %v4626
    %5053 = vmatpush.bf16.msra.mxu0 %v4620
    %5054 = vmatmul.bf16.gmra.mxu0 %v3746
    %v5055 = vpop.f32.mrf.mxu0
    %v5056 = vadd.f32 %v5042, %v5055
    %v5057 = vpop.f32.mrf.mxu0
    %v5058 = vadd.f32 %v5044, %v5057
    %5059 = vdwg.mxu0
    %5060 = vmatpush.bf16.msra.mxu0 %v4710
    %5061 = vmatpush.bf16.msra.mxu0 %v4704
    %5062 = vmatpush.bf16.msra.mxu0 %v4698
    %5063 = vmatpush.bf16.msra.mxu0 %v4692
    %5064 = vmatpush.bf16.msra.mxu0 %v4686
    %5065 = vmatpush.bf16.msra.mxu0 %v4680
    %5066 = vmatpush.bf16.msra.mxu0 %v4674
    %5067 = vmatpush.bf16.msra.mxu0 %v4668
    %5068 = vmatmul.bf16.gmra.mxu0 %v3752
    %v5069 = vpop.f32.mrf.mxu0
    %v5070 = vadd.f32 %v5056, %v5069
    %v5071 = vpop.f32.mrf.mxu0
    %v5072 = vadd.f32 %v5058, %v5071
    %5073 = vdwg.mxu0
    %5074 = vmatpush.bf16.msra.mxu0 %v4567
    %5075 = vmatpush.bf16.msra.mxu0 %v4561
    %5076 = vmatpush.bf16.msra.mxu0 %v4555
    %5077 = vmatpush.bf16.msra.mxu0 %v4549
    %5078 = vmatpush.bf16.msra.mxu0 %v4543
    %5079 = vmatpush.bf16.msra.mxu0 %v4537
    %5080 = vmatpush.bf16.msra.mxu0 %v4531
    %5081 = vmatpush.bf16.msra.mxu0 %v4525
    %5082 = vmatmul.bf16.gmra.mxu0 %v3734
    %v5083 = vpop.f32.mrf.mxu0
    %v5084 = vadd.f32 0.0, %v5083
    %v5085 = vpop.f32.mrf.mxu0
    %v5086 = vadd.f32 0.0, %v5085
    %5087 = vdwg.mxu0
    %5088 = vmatpush.bf16.msra.mxu0 %v4615
    %5089 = vmatpush.bf16.msra.mxu0 %v4609
    %5090 = vmatpush.bf16.msra.mxu0 %v4603
    %5091 = vmatpush.bf16.msra.mxu0 %v4597
    %5092 = vmatpush.bf16.msra.mxu0 %v4591
    %5093 = vmatpush.bf16.msra.mxu0 %v4585
    %5094 = vmatpush.bf16.msra.mxu0 %v4579
    %5095 = vmatpush.bf16.msra.mxu0 %v4573
    %5096 = vmatmul.bf16.gmra.mxu0 %v3740
    %v5097 = vpop.f32.mrf.mxu0
    %v5098 = vadd.f32 %v5084, %v5097
    %v5099 = vpop.f32.mrf.mxu0
    %v5100 = vadd.f32 %v5086, %v5099
    %5101 = vdwg.mxu0
    %5102 = vmatpush.bf16.msra.mxu0 %v4663
    %5103 = vmatpush.bf16.msra.mxu0 %v4657
    %5104 = vmatpush.bf16.msra.mxu0 %v4651
    %5105 = vmatpush.bf16.msra.mxu0 %v4645
    %5106 = vmatpush.bf16.msra.mxu0 %v4639
    %5107 = vmatpush.bf16.msra.mxu0 %v4633
    %5108 = vmatpush.bf16.msra.mxu0 %v4627
    %5109 = vmatpush.bf16.msra.mxu0 %v4621
    %5110 = vmatmul.bf16.gmra.mxu0 %v3746
    %v5111 = vpop.f32.mrf.mxu0
    %v5112 = vadd.f32 %v5098, %v5111
    %v5113 = vpop.f32.mrf.mxu0
    %v5114 = vadd.f32 %v5100, %v5113
    %5115 = vdwg.mxu0
    %5116 = vmatpush.bf16.msra.mxu0 %v4711
    %5117 = vmatpush.bf16.msra.mxu0 %v4705
    %5118 = vmatpush.bf16.msra.mxu0 %v4699
    %5119 = vmatpush.bf16.msra.mxu0 %v4693
    %5120 = vmatpush.bf16.msra.mxu0 %v4687
    %5121 = vmatpush.bf16.msra.mxu0 %v4681
    %5122 = vmatpush.bf16.msra.mxu0 %v4675
    %5123 = vmatpush.bf16.msra.mxu0 %v4669
    %5124 = vmatmul.bf16.gmra.mxu0 %v3752
    %v5125 = vpop.f32.mrf.mxu0
    %v5126 = vadd.f32 %v5112, %v5125
    %v5127 = vpop.f32.mrf.mxu0
    %v5128 = vadd.f32 %v5114, %v5127
    %5129 = vdwg.mxu0
    %5130 = vmatpush.bf16.msra.mxu0 %v4568
    %5131 = vmatpush.bf16.msra.mxu0 %v4562
    %5132 = vmatpush.bf16.msra.mxu0 %v4556
    %5133 = vmatpush.bf16.msra.mxu0 %v4550
    %5134 = vmatpush.bf16.msra.mxu0 %v4544
    %5135 = vmatpush.bf16.msra.mxu0 %v4538
    %5136 = vmatpush.bf16.msra.mxu0 %v4532
    %5137 = vmatpush.bf16.msra.mxu0 %v4526
    %5138 = vmatmul.bf16.gmra.mxu0 %v3734
    %v5139 = vpop.f32.mrf.mxu0
    %v5140 = vadd.f32 0.0, %v5139
    %v5141 = vpop.f32.mrf.mxu0
    %v5142 = vadd.f32 0.0, %v5141
    %5143 = vdwg.mxu0
    %5144 = vmatpush.bf16.msra.mxu0 %v4616
    %5145 = vmatpush.bf16.msra.mxu0 %v4610
    %5146 = vmatpush.bf16.msra.mxu0 %v4604
    %5147 = vmatpush.bf16.msra.mxu0 %v4598
    %5148 = vmatpush.bf16.msra.mxu0 %v4592
    %5149 = vmatpush.bf16.msra.mxu0 %v4586
    %5150 = vmatpush.bf16.msra.mxu0 %v4580
    %5151 = vmatpush.bf16.msra.mxu0 %v4574
    %5152 = vmatmul.bf16.gmra.mxu0 %v3740
    %v5153 = vpop.f32.mrf.mxu0
    %v5154 = vadd.f32 %v5140, %v5153
    %v5155 = vpop.f32.mrf.mxu0
    %v5156 = vadd.f32 %v5142, %v5155
    %5157 = vdwg.mxu0
    %5158 = vmatpush.bf16.msra.mxu0 %v4664
    %5159 = vmatpush.bf16.msra.mxu0 %v4658
    %5160 = vmatpush.bf16.msra.mxu0 %v4652
    %5161 = vmatpush.bf16.msra.mxu0 %v4646
    %5162 = vmatpush.bf16.msra.mxu0 %v4640
    %5163 = vmatpush.bf16.msra.mxu0 %v4634
    %5164 = vmatpush.bf16.msra.mxu0 %v4628
    %5165 = vmatpush.bf16.msra.mxu0 %v4622
    %5166 = vmatmul.bf16.gmra.mxu0 %v3746
    %v5167 = vpop.f32.mrf.mxu0
    %v5168 = vadd.f32 %v5154, %v5167
    %v5169 = vpop.f32.mrf.mxu0
    %v5170 = vadd.f32 %v5156, %v5169
    %5171 = vdwg.mxu0
    %5172 = vmatpush.bf16.msra.mxu0 %v4712
    %5173 = vmatpush.bf16.msra.mxu0 %v4706
    %5174 = vmatpush.bf16.msra.mxu0 %v4700
    %5175 = vmatpush.bf16.msra.mxu0 %v4694
    %5176 = vmatpush.bf16.msra.mxu0 %v4688
    %5177 = vmatpush.bf16.msra.mxu0 %v4682
    %5178 = vmatpush.bf16.msra.mxu0 %v4676
    %5179 = vmatpush.bf16.msra.mxu0 %v4670
    %5180 = vmatmul.bf16.gmra.mxu0 %v3752
    %v5181 = vpop.f32.mrf.mxu0
    %v5182 = vadd.f32 %v5168, %v5181
    %v5183 = vpop.f32.mrf.mxu0
    %v5184 = vadd.f32 %v5170, %v5183
    %5185 = vdwg.mxu0
    %5186 = vmatpush.bf16.msra.mxu0 %v4569
    %5187 = vmatpush.bf16.msra.mxu0 %v4563
    %5188 = vmatpush.bf16.msra.mxu0 %v4557
    %5189 = vmatpush.bf16.msra.mxu0 %v4551
    %5190 = vmatpush.bf16.msra.mxu0 %v4545
    %5191 = vmatpush.bf16.msra.mxu0 %v4539
    %5192 = vmatpush.bf16.msra.mxu0 %v4533
    %5193 = vmatpush.bf16.msra.mxu0 %v4527
    %5194 = vmatmul.bf16.gmra.mxu0 %v3734
    %v5195 = vpop.f32.mrf.mxu0
    %v5196 = vadd.f32 0.0, %v5195
    %v5197 = vpop.f32.mrf.mxu0
    %v5198 = vadd.f32 0.0, %v5197
    %5199 = vdwg.mxu0
    %5200 = vmatpush.bf16.msra.mxu0 %v4617
    %5201 = vmatpush.bf16.msra.mxu0 %v4611
    %5202 = vmatpush.bf16.msra.mxu0 %v4605
    %5203 = vmatpush.bf16.msra.mxu0 %v4599
    %5204 = vmatpush.bf16.msra.mxu0 %v4593
    %5205 = vmatpush.bf16.msra.mxu0 %v4587
    %5206 = vmatpush.bf16.msra.mxu0 %v4581
    %5207 = vmatpush.bf16.msra.mxu0 %v4575
    %5208 = vmatmul.bf16.gmra.mxu0 %v3740
    %v5209 = vpop.f32.mrf.mxu0
    %v5210 = vadd.f32 %v5196, %v5209
    %v5211 = vpop.f32.mrf.mxu0
    %v5212 = vadd.f32 %v5198, %v5211
    %5213 = vdwg.mxu0
    %5214 = vmatpush.bf16.msra.mxu0 %v4665
    %5215 = vmatpush.bf16.msra.mxu0 %v4659
    %5216 = vmatpush.bf16.msra.mxu0 %v4653
    %5217 = vmatpush.bf16.msra.mxu0 %v4647
    %5218 = vmatpush.bf16.msra.mxu0 %v4641
    %5219 = vmatpush.bf16.msra.mxu0 %v4635
    %5220 = vmatpush.bf16.msra.mxu0 %v4629
    %5221 = vmatpush.bf16.msra.mxu0 %v4623
    %5222 = vmatmul.bf16.gmra.mxu0 %v3746
    %v5223 = vpop.f32.mrf.mxu0
    %v5224 = vadd.f32 %v5210, %v5223
    %v5225 = vpop.f32.mrf.mxu0
    %v5226 = vadd.f32 %v5212, %v5225
    %5227 = vdwg.mxu0
    %5228 = vmatpush.bf16.msra.mxu0 %v4713
    %5229 = vmatpush.bf16.msra.mxu0 %v4707
    %5230 = vmatpush.bf16.msra.mxu0 %v4701
    %5231 = vmatpush.bf16.msra.mxu0 %v4695
    %5232 = vmatpush.bf16.msra.mxu0 %v4689
    %5233 = vmatpush.bf16.msra.mxu0 %v4683
    %5234 = vmatpush.bf16.msra.mxu0 %v4677
    %5235 = vmatpush.bf16.msra.mxu0 %v4671
    %5236 = vmatmul.bf16.gmra.mxu0 %v3752
    %v5237 = vpop.f32.mrf.mxu0
    %v5238 = vadd.f32 %v5224, %v5237
    %v5239 = vpop.f32.mrf.mxu0
    %v5240 = vadd.f32 %v5226, %v5239
    %5241 = vdwg.mxu0
    %v5242 = vmax.f32 %v4958, 0.0
    %v5243 = vmax.f32 %v5014, 0.0
    %v5244 = vmax.f32 %v5070, 0.0
    %v5245 = vmax.f32 %v5126, 0.0
    %v5246 = vmax.f32 %v5182, 0.0
    %v5247 = vmax.f32 %v5238, 0.0
    %v5248 = vmax.f32 %v4960, 0.0
    %v5249 = vmax.f32 %v5016, 0.0
    %v5250 = vmax.f32 %v5072, 0.0
    %v5251 = vmax.f32 %v5128, 0.0
    %v5252 = vmax.f32 %v5184, 0.0
    %v5253 = vmax.f32 %v5240, 0.0
    %v5254 = vpack.c.bf16 %v5248, %v5242
    %v5255 = vpack.c.bf16 %v5249, %v5243
    %v5256 = vpack.c.bf16 %v5250, %v5244
    %v5257 = vpack.c.bf16 %v5251, %v5245
    %v5258 = vpack.c.bf16 %v5252, %v5246
    %v5259 = vpack.c.bf16 %v5253, %v5247
    %v5260 = vld [vmem:[%s4] sm:$0xf]
    %v5261 = vld [vmem:[%s4 + $0x4] sm:$0xf]
    %v5262 = vld [vmem:[%s4 + $0x8] sm:$0xf]
    %v5263 = vld [vmem:[%s4 + $0xc] sm:$0xf]
    %v5264 = vld [vmem:[%s4 + $0x10] sm:$0xf]
    %v5265 = vld [vmem:[%s4 + $0x14] sm:$0xf]
    %v5266 = vld [vmem:[%s4 + $0x18] sm:$0xf]
    %v5267 = vld [vmem:[%s4 + $0x1c] sm:$0xf]
    %v5268 = vld [vmem:[%s4 + $0x20] sm:$0xf]
    %v5269 = vld [vmem:[%s4 + $0x24] sm:$0xf]
    %v5270 = vld [vmem:[%s4 + $0x28] sm:$0xf]
    %v5271 = vld [vmem:[%s4 + $0x2c] sm:$0xf]
    %v5272 = vld [vmem:[%s4 + $0x30] sm:$0xf]
    %v5273 = vld [vmem:[%s4 + $0x34] sm:$0xf]
    %v5274 = vld [vmem:[%s4 + $0x38] sm:$0xf]
    %v5275 = vld [vmem:[%s4 + $0x3c] sm:$0xf]
    %v5276 = vld [vmem:[%s4 + $0x40] sm:$0xf]
    %v5277 = vld [vmem:[%s4 + $0x44] sm:$0xf]
    %v5278 = vld [vmem:[%s4 + $0x48] sm:$0xf]
    %v5279 = vld [vmem:[%s4 + $0x4c] sm:$0xf]
    %v5280 = vld [vmem:[%s4 + $0x50] sm:$0xf]
    %v5281 = vld [vmem:[%s4 + $0x54] sm:$0xf]
    %v5282 = vld [vmem:[%s4 + $0x58] sm:$0xf]
    %v5283 = vld [vmem:[%s4 + $0x5c] sm:$0xf]
    %v5284 = vld [vmem:[%s4 + $0x60] sm:$0xf]
    %v5285 = vld [vmem:[%s4 + $0x64] sm:$0xf]
    %v5286 = vld [vmem:[%s4 + $0x68] sm:$0xf]
    %v5287 = vld [vmem:[%s4 + $0x6c] sm:$0xf]
    %v5288 = vld [vmem:[%s4 + $0x70] sm:$0xf]
    %v5289 = vld [vmem:[%s4 + $0x74] sm:$0xf]
    %v5290 = vld [vmem:[%s4 + $0x78] sm:$0xf]
    %v5291 = vld [vmem:[%s4 + $0x7c] sm:$0xf]
    %v5292 = vld [vmem:[%s4 + $0x80] sm:$0xf]
    %v5293 = vld [vmem:[%s4 + $0x84] sm:$0xf]
    %v5294 = vld [vmem:[%s4 + $0x88] sm:$0xf]
    %v5295 = vld [vmem:[%s4 + $0x8c] sm:$0xf]
    %v5296 = vld [vmem:[%s4 + $0x90] sm:$0xf]
    %v5297 = vld [vmem:[%s4 + $0x94] sm:$0xf]
    %v5298 = vld [vmem:[%s4 + $0x98] sm:$0xf]
    %v5299 = vld [vmem:[%s4 + $0x9c] sm:$0xf]
    %v5300 = vld [vmem:[%s4 + $0xa0] sm:$0xf]
    %v5301 = vld [vmem:[%s4 + $0xa4] sm:$0xf]
    %v5302 = vld [vmem:[%s4 + $0xa8] sm:$0xf]
    %v5303 = vld [vmem:[%s4 + $0xac] sm:$0xf]
    %v5304 = vld [vmem:[%s4 + $0xb0] sm:$0xf]
    %v5305 = vld [vmem:[%s4 + $0xb4] sm:$0xf]
    %v5306 = vld [vmem:[%s4 + $0xb8] sm:$0xf]
    %v5307 = vld [vmem:[%s4 + $0xbc] sm:$0xf]
    %v5308 = vld [vmem:[%s4 + $0xc0] sm:$0xf]
    %v5309 = vld [vmem:[%s4 + $0xc4] sm:$0xf]
    %v5310 = vld [vmem:[%s4 + $0xc8] sm:$0xf]
    %v5311 = vld [vmem:[%s4 + $0xcc] sm:$0xf]
    %v5312 = vld [vmem:[%s4 + $0xd0] sm:$0xf]
    %v5313 = vld [vmem:[%s4 + $0xd4] sm:$0xf]
    %v5314 = vld [vmem:[%s4 + $0xd8] sm:$0xf]
    %v5315 = vld [vmem:[%s4 + $0xdc] sm:$0xf]
    %v5316 = vld [vmem:[%s4 + $0xe0] sm:$0xf]
    %v5317 = vld [vmem:[%s4 + $0xe4] sm:$0xf]
    %v5318 = vld [vmem:[%s4 + $0xe8] sm:$0xf]
    %v5319 = vld [vmem:[%s4 + $0xec] sm:$0xf]
    %v5320 = vld [vmem:[%s4 + $0xf0] sm:$0xf]
    %v5321 = vld [vmem:[%s4 + $0xf4] sm:$0xf]
    %v5322 = vld [vmem:[%s4 + $0xf8] sm:$0xf]
    %v5323 = vld [vmem:[%s4 + $0xfc] sm:$0xf]
    %v5324 = vld [vmem:[%s4 + $0x100] sm:$0xf]
    %v5325 = vld [vmem:[%s4 + $0x104] sm:$0xf]
    %v5326 = vld [vmem:[%s4 + $0x108] sm:$0xf]
    %v5327 = vld [vmem:[%s4 + $0x10c] sm:$0xf]
    %v5328 = vld [vmem:[%s4 + $0x110] sm:$0xf]
    %v5329 = vld [vmem:[%s4 + $0x114] sm:$0xf]
    %v5330 = vld [vmem:[%s4 + $0x118] sm:$0xf]
    %v5331 = vld [vmem:[%s4 + $0x11c] sm:$0xf]
    %v5332 = vld [vmem:[%s4 + $0x120] sm:$0xf]
    %v5333 = vld [vmem:[%s4 + $0x124] sm:$0xf]
    %v5334 = vld [vmem:[%s4 + $0x128] sm:$0xf]
    %v5335 = vld [vmem:[%s4 + $0x12c] sm:$0xf]
    %v5336 = vld [vmem:[%s4 + $0x130] sm:$0xf]
    %v5337 = vld [vmem:[%s4 + $0x134] sm:$0xf]
    %v5338 = vld [vmem:[%s4 + $0x138] sm:$0xf]
    %v5339 = vld [vmem:[%s4 + $0x13c] sm:$0xf]
    %v5340 = vld [vmem:[%s4 + $0x140] sm:$0xf]
    %v5341 = vld [vmem:[%s4 + $0x144] sm:$0xf]
    %v5342 = vld [vmem:[%s4 + $0x148] sm:$0xf]
    %v5343 = vld [vmem:[%s4 + $0x14c] sm:$0xf]
    %v5344 = vld [vmem:[%s4 + $0x150] sm:$0xf]
    %v5345 = vld [vmem:[%s4 + $0x154] sm:$0xf]
    %v5346 = vld [vmem:[%s4 + $0x158] sm:$0xf]
    %v5347 = vld [vmem:[%s4 + $0x15c] sm:$0xf]
    %v5348 = vld [vmem:[%s4 + $0x160] sm:$0xf]
    %v5349 = vld [vmem:[%s4 + $0x164] sm:$0xf]
    %v5350 = vld [vmem:[%s4 + $0x168] sm:$0xf]
    %v5351 = vld [vmem:[%s4 + $0x16c] sm:$0xf]
    %v5352 = vld [vmem:[%s4 + $0x170] sm:$0xf]
    %v5353 = vld [vmem:[%s4 + $0x174] sm:$0xf]
    %v5354 = vld [vmem:[%s4 + $0x178] sm:$0xf]
    %v5355 = vld [vmem:[%s4 + $0x17c] sm:$0xf]
    %v5356 = vld [vmem:[%s5] sm:$0x1]
    %v5358 = vperm.slane %v5356, 0
    %v5456 = vunpack.c.l.b16 %v5260
    %v5457 = vunpack.c.l.b16 %v5261
    %v5458 = vunpack.c.l.b16 %v5262
    %v5459 = vunpack.c.l.b16 %v5263
    %v5460 = vunpack.c.l.b16 %v5264
    %v5461 = vunpack.c.l.b16 %v5265
    %v5462 = vunpack.c.l.b16 %v5266
    %v5463 = vunpack.c.l.b16 %v5267
    %v5464 = vunpack.c.l.b16 %v5268
    %v5465 = vunpack.c.l.b16 %v5269
    %v5466 = vunpack.c.l.b16 %v5270
    %v5467 = vunpack.c.l.b16 %v5271
    %v5468 = vunpack.c.l.b16 %v5272
    %v5469 = vunpack.c.l.b16 %v5273
    %v5470 = vunpack.c.l.b16 %v5274
    %v5471 = vunpack.c.l.b16 %v5275
    %v5472 = vunpack.c.l.b16 %v5276
    %v5473 = vunpack.c.l.b16 %v5277
    %v5474 = vunpack.c.l.b16 %v5278
    %v5475 = vunpack.c.l.b16 %v5279
    %v5476 = vunpack.c.l.b16 %v5280
    %v5477 = vunpack.c.l.b16 %v5281
    %v5478 = vunpack.c.l.b16 %v5282
    %v5479 = vunpack.c.l.b16 %v5283
    %v5480 = vunpack.c.l.b16 %v5284
    %v5481 = vunpack.c.l.b16 %v5285
    %v5482 = vunpack.c.l.b16 %v5286
    %v5483 = vunpack.c.l.b16 %v5287
    %v5484 = vunpack.c.l.b16 %v5288
    %v5485 = vunpack.c.l.b16 %v5289
    %v5486 = vunpack.c.l.b16 %v5290
    %v5487 = vunpack.c.l.b16 %v5291
    %v5488 = vunpack.c.l.b16 %v5292
    %v5489 = vunpack.c.l.b16 %v5293
    %v5490 = vunpack.c.l.b16 %v5294
    %v5491 = vunpack.c.l.b16 %v5295
    %v5492 = vunpack.c.l.b16 %v5296
    %v5493 = vunpack.c.l.b16 %v5297
    %v5494 = vunpack.c.l.b16 %v5298
    %v5495 = vunpack.c.l.b16 %v5299
    %v5496 = vunpack.c.l.b16 %v5300
    %v5497 = vunpack.c.l.b16 %v5301
    %v5498 = vunpack.c.l.b16 %v5302
    %v5499 = vunpack.c.l.b16 %v5303
    %v5500 = vunpack.c.l.b16 %v5304
    %v5501 = vunpack.c.l.b16 %v5305
    %v5502 = vunpack.c.l.b16 %v5306
    %v5503 = vunpack.c.l.b16 %v5307
    %v5504 = vunpack.c.l.b16 %v5308
    %v5505 = vunpack.c.l.b16 %v5309
    %v5506 = vunpack.c.l.b16 %v5310
    %v5507 = vunpack.c.l.b16 %v5311
    %v5508 = vunpack.c.l.b16 %v5312
    %v5509 = vunpack.c.l.b16 %v5313
    %v5510 = vunpack.c.l.b16 %v5314
    %v5511 = vunpack.c.l.b16 %v5315
    %v5512 = vunpack.c.l.b16 %v5316
    %v5513 = vunpack.c.l.b16 %v5317
    %v5514 = vunpack.c.l.b16 %v5318
    %v5515 = vunpack.c.l.b16 %v5319
    %v5516 = vunpack.c.l.b16 %v5320
    %v5517 = vunpack.c.l.b16 %v5321
    %v5518 = vunpack.c.l.b16 %v5322
    %v5519 = vunpack.c.l.b16 %v5323
    %v5520 = vunpack.c.l.b16 %v5324
    %v5521 = vunpack.c.l.b16 %v5325
    %v5522 = vunpack.c.l.b16 %v5326
    %v5523 = vunpack.c.l.b16 %v5327
    %v5524 = vunpack.c.l.b16 %v5328
    %v5525 = vunpack.c.l.b16 %v5329
    %v5526 = vunpack.c.l.b16 %v5330
    %v5527 = vunpack.c.l.b16 %v5331
    %v5528 = vunpack.c.l.b16 %v5332
    %v5529 = vunpack.c.l.b16 %v5333
    %v5530 = vunpack.c.l.b16 %v5334
    %v5531 = vunpack.c.l.b16 %v5335
    %v5532 = vunpack.c.l.b16 %v5336
    %v5533 = vunpack.c.l.b16 %v5337
    %v5534 = vunpack.c.l.b16 %v5338
    %v5535 = vunpack.c.l.b16 %v5339
    %v5536 = vunpack.c.l.b16 %v5340
    %v5537 = vunpack.c.l.b16 %v5341
    %v5538 = vunpack.c.l.b16 %v5342
    %v5539 = vunpack.c.l.b16 %v5343
    %v5540 = vunpack.c.l.b16 %v5344
    %v5541 = vunpack.c.l.b16 %v5345
    %v5542 = vunpack.c.l.b16 %v5346
    %v5543 = vunpack.c.l.b16 %v5347
    %v5544 = vunpack.c.l.b16 %v5348
    %v5545 = vunpack.c.l.b16 %v5349
    %v5546 = vunpack.c.l.b16 %v5350
    %v5547 = vunpack.c.l.b16 %v5351
    %v5548 = vunpack.c.l.b16 %v5352
    %v5549 = vunpack.c.l.b16 %v5353
    %v5550 = vunpack.c.l.b16 %v5354
    %v5551 = vunpack.c.l.b16 %v5355
    %v5552 = vpack.c.b16 %v5457, %v5456
    %v5553 = vpack.c.b16 %v5459, %v5458
    %v5554 = vpack.c.b16 %v5461, %v5460
    %v5555 = vpack.c.b16 %v5463, %v5462
    %v5556 = vpack.c.b16 %v5465, %v5464
    %v5557 = vpack.c.b16 %v5467, %v5466
    %v5558 = vpack.c.b16 %v5469, %v5468
    %v5559 = vpack.c.b16 %v5471, %v5470
    %v5560 = vpack.c.b16 %v5473, %v5472
    %v5561 = vpack.c.b16 %v5475, %v5474
    %v5562 = vpack.c.b16 %v5477, %v5476
    %v5563 = vpack.c.b16 %v5479, %v5478
    %v5564 = vpack.c.b16 %v5481, %v5480
    %v5565 = vpack.c.b16 %v5483, %v5482
    %v5566 = vpack.c.b16 %v5485, %v5484
    %v5567 = vpack.c.b16 %v5487, %v5486
    %v5568 = vpack.c.b16 %v5489, %v5488
    %v5569 = vpack.c.b16 %v5491, %v5490
    %v5570 = vpack.c.b16 %v5493, %v5492
    %v5571 = vpack.c.b16 %v5495, %v5494
    %v5572 = vpack.c.b16 %v5497, %v5496
    %v5573 = vpack.c.b16 %v5499, %v5498
    %v5574 = vpack.c.b16 %v5501, %v5500
    %v5575 = vpack.c.b16 %v5503, %v5502
    %v5576 = vpack.c.b16 %v5505, %v5504
    %v5577 = vpack.c.b16 %v5507, %v5506
    %v5578 = vpack.c.b16 %v5509, %v5508
    %v5579 = vpack.c.b16 %v5511, %v5510
    %v5580 = vpack.c.b16 %v5513, %v5512
    %v5581 = vpack.c.b16 %v5515, %v5514
    %v5582 = vpack.c.b16 %v5517, %v5516
    %v5583 = vpack.c.b16 %v5519, %v5518
    %v5584 = vpack.c.b16 %v5521, %v5520
    %v5585 = vpack.c.b16 %v5523, %v5522
    %v5586 = vpack.c.b16 %v5525, %v5524
    %v5587 = vpack.c.b16 %v5527, %v5526
    %v5588 = vpack.c.b16 %v5529, %v5528
    %v5589 = vpack.c.b16 %v5531, %v5530
    %v5590 = vpack.c.b16 %v5533, %v5532
    %v5591 = vpack.c.b16 %v5535, %v5534
    %v5592 = vpack.c.b16 %v5537, %v5536
    %v5593 = vpack.c.b16 %v5539, %v5538
    %v5594 = vpack.c.b16 %v5541, %v5540
    %v5595 = vpack.c.b16 %v5543, %v5542
    %v5596 = vpack.c.b16 %v5545, %v5544
    %v5597 = vpack.c.b16 %v5547, %v5546
    %v5598 = vpack.c.b16 %v5549, %v5548
    %v5599 = vpack.c.b16 %v5551, %v5550
    %5648 = vmatpush.bf16.msra.mxu0 %v5559
    %5649 = vmatpush.bf16.msra.mxu0 %v5558
    %5650 = vmatpush.bf16.msra.mxu0 %v5557
    %5651 = vmatpush.bf16.msra.mxu0 %v5556
    %5652 = vmatpush.bf16.msra.mxu0 %v5555
    %5653 = vmatpush.bf16.msra.mxu0 %v5554
    %5654 = vmatpush.bf16.msra.mxu0 %v5553
    %5655 = vmatpush.bf16.msra.mxu0 %v5552
    %5656 = vmatmul.bf16.gmra.mxu0 %v5254
    %v5657 = vpop.f32.mrf.mxu0
    %v5658 = vadd.f32 %v5358, %v5657
    %v5659 = vpop.f32.mrf.mxu0
    %v5660 = vadd.f32 %v5358, %v5659
    %5661 = vdwg.mxu0
    %5662 = vmatpush.bf16.msra.mxu0 %v5567
    %5663 = vmatpush.bf16.msra.mxu0 %v5566
    %5664 = vmatpush.bf16.msra.mxu0 %v5565
    %5665 = vmatpush.bf16.msra.mxu0 %v5564
    %5666 = vmatpush.bf16.msra.mxu0 %v5563
    %5667 = vmatpush.bf16.msra.mxu0 %v5562
    %5668 = vmatpush.bf16.msra.mxu0 %v5561
    %5669 = vmatpush.bf16.msra.mxu0 %v5560
    %5670 = vmatmul.bf16.gmra.mxu0 %v5255
    %v5671 = vpop.f32.mrf.mxu0
    %v5672 = vadd.f32 %v5658, %v5671
    %v5673 = vpop.f32.mrf.mxu0
    %v5674 = vadd.f32 %v5660, %v5673
    %5675 = vdwg.mxu0
    %5676 = vmatpush.bf16.msra.mxu0 %v5575
    %5677 = vmatpush.bf16.msra.mxu0 %v5574
    %5678 = vmatpush.bf16.msra.mxu0 %v5573
    %5679 = vmatpush.bf16.msra.mxu0 %v5572
    %5680 = vmatpush.bf16.msra.mxu0 %v5571
    %5681 = vmatpush.bf16.msra.mxu0 %v5570
    %5682 = vmatpush.bf16.msra.mxu0 %v5569
    %5683 = vmatpush.bf16.msra.mxu0 %v5568
    %5684 = vmatmul.bf16.gmra.mxu0 %v5256
    %v5685 = vpop.f32.mrf.mxu0
    %v5686 = vadd.f32 %v5672, %v5685
    %v5687 = vpop.f32.mrf.mxu0
    %v5688 = vadd.f32 %v5674, %v5687
    %5689 = vdwg.mxu0
    %5690 = vmatpush.bf16.msra.mxu0 %v5583
    %5691 = vmatpush.bf16.msra.mxu0 %v5582
    %5692 = vmatpush.bf16.msra.mxu0 %v5581
    %5693 = vmatpush.bf16.msra.mxu0 %v5580
    %5694 = vmatpush.bf16.msra.mxu0 %v5579
    %5695 = vmatpush.bf16.msra.mxu0 %v5578
    %5696 = vmatpush.bf16.msra.mxu0 %v5577
    %5697 = vmatpush.bf16.msra.mxu0 %v5576
    %5698 = vmatmul.bf16.gmra.mxu0 %v5257
    %v5699 = vpop.f32.mrf.mxu0
    %v5700 = vadd.f32 %v5686, %v5699
    %v5701 = vpop.f32.mrf.mxu0
    %v5702 = vadd.f32 %v5688, %v5701
    %5703 = vdwg.mxu0
    %5704 = vmatpush.bf16.msra.mxu0 %v5591
    %5705 = vmatpush.bf16.msra.mxu0 %v5590
    %5706 = vmatpush.bf16.msra.mxu0 %v5589
    %5707 = vmatpush.bf16.msra.mxu0 %v5588
    %5708 = vmatpush.bf16.msra.mxu0 %v5587
    %5709 = vmatpush.bf16.msra.mxu0 %v5586
    %5710 = vmatpush.bf16.msra.mxu0 %v5585
    %5711 = vmatpush.bf16.msra.mxu0 %v5584
    %5712 = vmatmul.bf16.gmra.mxu0 %v5258
    %v5713 = vpop.f32.mrf.mxu0
    %v5714 = vadd.f32 %v5700, %v5713
    %v5715 = vpop.f32.mrf.mxu0
    %v5716 = vadd.f32 %v5702, %v5715
    %5717 = vdwg.mxu0
    %5718 = vmatpush.bf16.msra.mxu0 %v5599
    %5719 = vmatpush.bf16.msra.mxu0 %v5598
    %5720 = vmatpush.bf16.msra.mxu0 %v5597
    %5721 = vmatpush.bf16.msra.mxu0 %v5596
    %5722 = vmatpush.bf16.msra.mxu0 %v5595
    %5723 = vmatpush.bf16.msra.mxu0 %v5594
    %5724 = vmatpush.bf16.msra.mxu0 %v5593
    %5725 = vmatpush.bf16.msra.mxu0 %v5592
    %5726 = vmatmul.bf16.gmra.mxu0 %v5259
    %v5727 = vpop.f32.mrf.mxu0
    %v5728 = vadd.f32 %v5714, %v5727
    %v5729 = vpop.f32.mrf.mxu0
    %v5730 = vadd.f32 %v5716, %v5729
    %5731 = vdwg.mxu0
    %5732 = vst [vmem:[#allocation5] sm:$0xff] %v5728
    %5733 = vst [vmem:[#allocation5 + $0x8] sm:$0xff] %v5730
    // Predicated region
    $region30: #{tpu_custom_call.1} parent=1 // pred_check
      _
    $region31: #{tpu_custom_call.1} parent=1 // pred_check_branch
      %5735 = sbr.rel (0) target = $region33
    $region32: #{tpu_custom_call.1} parent=1 // pred_region
      %5737 = vsyncadd [#allocation4], 0
      %s5738 = sshll.u32 [#allocation5], 4
      %s5739 = int_to_ptr.vmem [resolvable:$true] %s5738
      %s5740 = sshll.u32 %s6, 4
      %s5741 = int_to_ptr.hbm [resolvable:$true] %s5740
      %5746 = dma.vmem_to_hbm [thread:$0]  %s5739, 256, %s5741, [#allocation4], 128, 128, 8
    $region33: #{tpu_custom_call.1} parent=1 // pred_fallthru
      _
    // Predicated region
    $region34: #{tpu_custom_call.1} parent=1 // pred_check
      _
    $region35: #{tpu_custom_call.1} parent=1 // pred_check_branch
      %5748 = sbr.rel (0) target = $region37
    $region36: #{tpu_custom_call.1} parent=1 // pred_region
      %5750 = dma.done [#allocation4], 256
    $region37: #{tpu_custom_call.1} parent=1 // pred_fallthru
      _
    %5751 = vsyncpa [#allocation3], 1
    %5752 = vsyncpa [#allocation4], 1

</llo_original>
